<compile_context>
chip_gen: v6e
topology: v6e:2x2x1
jax: 0.10.0
libtpu: 0.0.40
codegen_flags: <defaults>
</compile_context>

<pallas_src>
import jax
import jax.numpy as jnp
from jax import lax
from jax.experimental import pallas as pl
from jax.experimental.pallas import tpu as pltpu

E = 50        # embedding dim            nn.Embedding(vocab, 50)
H = 100       # LSTM hidden / direction  nn.LSTM(50, 100, bidirectional=True)
HP = 128      # H padded to one full 128-lane tile (gate slices become aligned)
F1 = 64       # fc1 width
EPS = 1e-5    # BatchNorm eps (PyTorch default)


def sent_model_kernel(x_ref, wih_ref, whh_ref, bf_ref, bb_ref,
                      g1f_ref, bt1f_ref, g1b_ref, bt1b_ref,
                      w1f_ref, w1b_ref, b1_ref,
                      g2_ref, bt2_ref, w2_ref, b2_ref,
                      out_ref,
                      gxf_ref, gxb_ref):
    B = out_ref.shape[0]
    T = x_ref.shape[0] // B
    G = 4 * HP                       # 512 lanes of gates per direction

    # ---- hoisted input projection: one big bf16 matmul for BOTH directions ----
    # (T*B, E) @ (E, 8*HP) -> (T*B, 8*HP); bias added once (not per step).
    gx_all = jnp.dot(x_ref[...], wih_ref[...], preferred_element_type=jnp.float32)
    gxf_ref[...] = gx_all[:, :G] + bf_ref[...]          # forward-dir gate inputs
    gxb_ref[...] = gx_all[:, G:] + bb_ref[...]          # backward-dir gate inputs

    whh = whh_ref[...]                                   # (2*HP, 4*HP) bf16, block-stacked
    two_b = 2 * B
    # rows 0..B-1 -> forward direction, rows B..2B-1 -> backward direction
    row_is_fwd = (lax.broadcasted_iota(jnp.int32, (two_b, 1), 0) < B
                  ).astype(jnp.float32)
    zeros = jnp.zeros((two_b, HP), jnp.float32)

    def step(s, carry):
        h, c, a_sum, a_sq, a_max, a_min = carry
        off_f = pl.multiple_of(s * B, B)                 # fwd rows read time s
        off_b = pl.multiple_of((T - 1 - s) * B, B)       # bwd rows read time T-1-s
        gx_t = jnp.concatenate([gxf_ref[pl.ds(off_f, B), :],
                                gxb_ref[pl.ds(off_b, B), :]], axis=0)   # (2B, 4*HP)

        # Block-stacked hidden -> a single (2B, 2*HP) @ (2*HP, 4*HP) MXU matmul
        # covers both directions (fwd rows hit W_hh_f rows, bwd rows hit W_hh_b).
        h_stack = jnp.concatenate([h * row_is_fwd, h * (1.0 - row_is_fwd)],
                                  axis=1).astype(jnp.bfloat16)
        gates = gx_t + jnp.dot(h_stack, whh, preferred_element_type=jnp.float32)

        # PyTorch gate order i, f, g, o; 128-lane-aligned slices.
        i = jax.nn.sigmoid(gates[:, 0 * HP:1 * HP])
        f = jax.nn.sigmoid(gates[:, 1 * HP:2 * HP])
        g = jnp.tanh(gates[:, 2 * HP:3 * HP])
        o = jax.nn.sigmoid(gates[:, 3 * HP:4 * HP])
        c_new = f * c + i * g
        h_new = o * jnp.tanh(c_new)

        # Streamed BatchNorm stats + time-pool extrema (no hidden stream stored).
        return (h_new, c_new,
                a_sum + h_new,
                a_sq + h_new * h_new,
                jnp.maximum(a_max, h_new),
                jnp.minimum(a_min, h_new))

    init = (zeros, zeros, zeros, zeros,
            jnp.full((two_b, HP), -jnp.inf, jnp.float32),
            jnp.full((two_b, HP), jnp.inf, jnp.float32))
    _, _, a_sum, a_sq, a_max, a_min = lax.fori_loop(0, T, step, init, unroll=True)

    # ---- BatchNorm1d(2H) training-mode stats (per channel over B*T) fused with
    #      the max-over-time pool: BN is affine per channel, so
    #      max_t BN(h) = max(scale*max_t h + shift, scale*min_t h + shift).
    n = jnp.float32(B * T)

    def bn_pool(s_, q_, mx_, mn_, gamma, beta):
        mean = jnp.sum(s_, axis=0, keepdims=True) / n                    # (1, HP)
        var = jnp.maximum(jnp.sum(q_, axis=0, keepdims=True) / n - mean * mean, 0.0)
        scale = gamma * lax.rsqrt(var + EPS)
        shift = beta - mean * scale
        return jnp.maximum(scale * mx_ + shift, scale * mn_ + shift)      # (B, HP)

    pooled_f = bn_pool(a_sum[:B], a_sq[:B], a_max[:B], a_min[:B],
                       g1f_ref[...], bt1f_ref[...])
    pooled_b = bn_pool(a_sum[B:], a_sq[B:], a_max[B:], a_min[B:],
                       g1b_ref[...], bt1b_ref[...])

    # ---- fc1 on concat([pf, pb], -1) == pf @ W1f + pb @ W1b, then ReLU --------
    out1 = (jnp.dot(pooled_f, w1f_ref[...], preferred_element_type=jnp.float32)
            + jnp.dot(pooled_b, w1b_ref[...], preferred_element_type=jnp.float32)
            + b1_ref[...])
    out1 = jnp.maximum(out1, 0.0)

    # ---- BatchNorm1d(64), training-mode: stats over batch dim -----------------
    mean2 = jnp.mean(out1, axis=0, keepdims=True)
    var2 = jnp.mean((out1 - mean2) ** 2, axis=0, keepdims=True)
    out1 = (out1 - mean2) * lax.rsqrt(var2 + EPS) * g2_ref[...] + bt2_ref[...]

    # ---- fc2 -> (B, 1) ---------------------------------------------------------
    out_ref[...] = (jnp.dot(out1, w2_ref[...], preferred_element_type=jnp.float32)
                    + b2_ref[...])


def init_params(key, vocab_size):
    """Deterministic synthetic parameters matching PyTorch layer shapes."""
    ks = jax.random.split(key, 12)
    s_lstm = 1.0 / (H ** 0.5)
    s_fc1 = 1.0 / ((2 * H) ** 0.5)
    s_fc2 = 1.0 / (F1 ** 0.5)
    u = lambda k, shape, s: jax.random.uniform(k, shape, jnp.float32, -s, s)
    return dict(
        embedding=jax.random.normal(ks[0], (vocab_size, E), jnp.float32),
        # LSTM forward direction (PyTorch shapes)
        wih_f=u(ks[1], (4 * H, E), s_lstm), whh_f=u(ks[2], (4 * H, H), s_lstm),
        bih_f=u(ks[3], (4 * H,), s_lstm), bhh_f=u(ks[4], (4 * H,), s_lstm),
        # LSTM backward direction
        wih_b=u(ks[5], (4 * H, E), s_lstm), whh_b=u(ks[6], (4 * H, H), s_lstm),
        bih_b=u(ks[7], (4 * H,), s_lstm), bhh_b=u(ks[8], (4 * H,), s_lstm),
        # bn_lstm / bn_fc1: PyTorch default init (weight=1, bias=0)
        g1=jnp.ones((2 * H,), jnp.float32), bt1=jnp.zeros((2 * H,), jnp.float32),
        g2=jnp.ones((F1,), jnp.float32), bt2=jnp.zeros((F1,), jnp.float32),
        # fc1: (64, 200), fc2: (1, 64)
        w1=u(ks[9], (F1, 2 * H), s_fc1), b1=u(ks[10], (F1,), s_fc1),
        w2=u(ks[11], (1, F1), s_fc2), b2=jnp.zeros((1,), jnp.float32),
    )


def sent_model_forward(params, token_ids):
    """token_ids: (B, T) int32 -> logits (B,) float32."""
    B, T = token_ids.shape

    # Embedding gather straight into time-major (T, B, E) -> flatten to (T*B, E).
    # Only the tiny (B, T) index tensor is transposed; the embedded sequence is
    # never round-tripped through an XLA transpose. bf16 for the MXU.
    x = params["embedding"][token_ids.T].reshape(T * B, E).astype(jnp.bfloat16)

    def pad_lanes(v):                       # (H,) -> (1, HP), zero-padded
        return jnp.pad(v, (0, HP - H))[None, :]

    def pack_ih(w):                         # torch (4H, E) -> (E, 4*HP), per-gate pad
        wt = w.T
        return jnp.concatenate(
            [jnp.pad(wt[:, k * H:(k + 1) * H], ((0, 0), (0, HP - H)))
             for k in range(4)], axis=1)

    def pack_hh(w):                         # torch (4H, H) -> (HP, 4*HP), per-gate pad
        wt = w.T
        return jnp.concatenate(
            [jnp.pad(wt[:, k * H:(k + 1) * H], ((0, HP - H), (0, HP - H)))
             for k in range(4)], axis=1)

    def pack_bias(bi, bh):                  # (4H,)+(4H,) -> (1, 4*HP)
        b = bi + bh
        return jnp.concatenate(
            [jnp.pad(b[k * H:(k + 1) * H], (0, HP - H)) for k in range(4)])[None, :]

    # Fused input-projection weight for both directions: (E, 8*HP) bf16.
    wih = jnp.concatenate([pack_ih(params["wih_f"]), pack_ih(params["wih_b"])],
                          axis=1).astype(jnp.bfloat16)
    # Block-stacked recurrence weight: rows [0:HP)=W_hh_f, [HP:2HP)=W_hh_b.
    whh = jnp.concatenate([pack_hh(params["whh_f"]), pack_hh(params["whh_b"])],
                          axis=0).astype(jnp.bfloat16)
    b_f = pack_bias(params["bih_f"], params["bhh_f"])
    b_b = pack_bias(params["bih_b"], params["bhh_b"])

    g1f, g1b = pad_lanes(params["g1"][:H]), pad_lanes(params["g1"][H:])
    bt1f, bt1b = pad_lanes(params["bt1"][:H]), pad_lanes(params["bt1"][H:])
    w1f = jnp.pad(params["w1"][:, :H].T, ((0, HP - H), (0, 0)))   # (HP, 64)
    w1b = jnp.pad(params["w1"][:, H:].T, ((0, HP - H), (0, 0)))   # (HP, 64)
    b1 = params["b1"][None, :]                                    # (1, 64)
    g2, bt2 = params["g2"][None, :], params["bt2"][None, :]
    w2 = params["w2"].T                                           # (64, 1)
    b2 = params["b2"][None, :]                                    # (1, 1)

    vmem = pl.BlockSpec(memory_space=pltpu.MemorySpace.VMEM)
    out = pl.pallas_call(
        sent_model_kernel,
        out_shape=jax.ShapeDtypeStruct((B, 1), jnp.float32),
        in_specs=[vmem] * 16,
        out_specs=vmem,
        scratch_shapes=[
            pltpu.VMEM((T * B, 4 * HP), jnp.float32),   # fwd gate pre-activations
            pltpu.VMEM((T * B, 4 * HP), jnp.float32),   # bwd gate pre-activations
        ],
    )(x, wih, whh, b_f, b_b,
      g1f, bt1f, g1b, bt1b,
      w1f, w1b, b1, g2, bt2, w2, b2)
    return out[:, 0]                                              # == squeeze(1)


if __name__ == "__main__":
    key = jax.random.PRNGKey(0)
    k_params, k_tokens = jax.random.split(key)

    VOCAB = 200   # synthetic small vocab (real script builds 10k from IMDB text)
    B, T = 8, 16
    # TODO(synk): raw-text preprocessing (stemming/stopwords/Counter vocab) has
    # no kernel equivalent; tokens are synthesized directly.
    token_ids = jax.random.randint(k_tokens, (B, T), 0, VOCAB, dtype=jnp.int32)

    params = init_params(k_params, VOCAB)
    logits = sent_model_forward(params, token_ids)
    jax.block_until_ready(logits)
    assert logits.shape == (B,) and logits.dtype == jnp.float32
    print("KERNEL_OK")
</pallas_src>

<mosaic_0001>
module attributes {stable_mosaic.version = 11 : i64} {
  func.func @sent_model_kernel(%arg0: memref<128x50xbf16, #tpu.memory_space<vmem>>, %arg1: memref<50x1024xbf16, #tpu.memory_space<vmem>>, %arg2: memref<256x512xbf16, #tpu.memory_space<vmem>>, %arg3: memref<1x512xf32, #tpu.memory_space<vmem>>, %arg4: memref<1x512xf32, #tpu.memory_space<vmem>>, %arg5: memref<1x128xf32, #tpu.memory_space<vmem>>, %arg6: memref<1x128xf32, #tpu.memory_space<vmem>>, %arg7: memref<1x128xf32, #tpu.memory_space<vmem>>, %arg8: memref<1x128xf32, #tpu.memory_space<vmem>>, %arg9: memref<128x64xf32, #tpu.memory_space<vmem>>, %arg10: memref<128x64xf32, #tpu.memory_space<vmem>>, %arg11: memref<1x64xf32, #tpu.memory_space<vmem>>, %arg12: memref<1x64xf32, #tpu.memory_space<vmem>>, %arg13: memref<1x64xf32, #tpu.memory_space<vmem>>, %arg14: memref<64x1xf32, #tpu.memory_space<vmem>>, %arg15: memref<1x1xf32, #tpu.memory_space<vmem>>, %arg16: memref<8x1xf32, #tpu.memory_space<vmem>>, %arg17: memref<128x512xf32, #tpu.memory_space<vmem>>, %arg18: memref<128x512xf32, #tpu.memory_space<vmem>>) attributes {dimension_semantics = [], scalar_prefetch = 0 : i64, scratch_operands = 2 : i64, tpu.core_type = #tpu.core_type<tc>} {
    %c0 = arith.constant 0 : index
    %c0_0 = arith.constant 0 : index
    %0 = vector.load %arg0[%c0, %c0_0] : memref<128x50xbf16, #tpu.memory_space<vmem>>, vector<128x50xbf16>
    %c0_1 = arith.constant 0 : index
    %c0_2 = arith.constant 0 : index
    %1 = vector.load %arg1[%c0_1, %c0_2] : memref<50x1024xbf16, #tpu.memory_space<vmem>>, vector<50x1024xbf16>
    %cst = arith.constant dense<0.000000e+00> : vector<128x1024xf32>
    %2 = tpu.matmul %0, %1, %cst {dimension_numbers = #tpu.dot_dimension_numbers<[1], [0], [0], [1], [0, 0, 1, 1], [], []>} : vector<128x50xbf16>, vector<50x1024xbf16>, vector<128x1024xf32> -> vector<128x1024xf32>
    %3 = vector.extract_strided_slice %2 {offsets = [0, 0], sizes = [128, 512], strides = [1, 1]} : vector<128x1024xf32> to vector<128x512xf32>
    %c0_3 = arith.constant 0 : index
    %c0_4 = arith.constant 0 : index
    %4 = vector.load %arg3[%c0_3, %c0_4] : memref<1x512xf32, #tpu.memory_space<vmem>>, vector<1x512xf32>
    %5 = vector.broadcast %4 : vector<1x512xf32> to vector<128x512xf32>
    %6 = arith.addf %3, %5 : vector<128x512xf32>
    %c0_5 = arith.constant 0 : index
    %c0_6 = arith.constant 0 : index
    %7 = vector.load %arg17[%c0_5, %c0_6] : memref<128x512xf32, #tpu.memory_space<vmem>>, vector<128x512xf32>
    tpu.vector_store %arg17[%c0_5, %c0_6], %6 {strides = array<i32>} : memref<128x512xf32, #tpu.memory_space<vmem>>, vector<128x512xf32>,
    %8 = vector.extract_strided_slice %2 {offsets = [0, 512], sizes = [128, 512], strides = [1, 1]} : vector<128x1024xf32> to vector<128x512xf32>
    %c0_7 = arith.constant 0 : index
    %c0_8 = arith.constant 0 : index
    %9 = vector.load %arg4[%c0_7, %c0_8] : memref<1x512xf32, #tpu.memory_space<vmem>>, vector<1x512xf32>
    %10 = vector.broadcast %9 : vector<1x512xf32> to vector<128x512xf32>
    %11 = arith.addf %8, %10 : vector<128x512xf32>
    %c0_9 = arith.constant 0 : index
    %c0_10 = arith.constant 0 : index
    %12 = vector.load %arg18[%c0_9, %c0_10] : memref<128x512xf32, #tpu.memory_space<vmem>>, vector<128x512xf32>
    tpu.vector_store %arg18[%c0_9, %c0_10], %11 {strides = array<i32>} : memref<128x512xf32, #tpu.memory_space<vmem>>, vector<128x512xf32>,
    %c0_11 = arith.constant 0 : index
    %c0_12 = arith.constant 0 : index
    %13 = vector.load %arg2[%c0_11, %c0_12] : memref<256x512xbf16, #tpu.memory_space<vmem>>, vector<256x512xbf16>
    %14 = tpu.iota {dimensions = array<i32: 0>} : vector<16x1xi32>
    %c8_i32 = arith.constant 8 : i32
    %15 = vector.broadcast %c8_i32 : i32 to vector<16x1xi32>
    %16 = arith.cmpi slt, %14, %15 : vector<16x1xi32>
    %17 = arith.extui %16 : vector<16x1xi1> to vector<16x1xi32>
    %18 = arith.sitofp %17 : vector<16x1xi32> to vector<16x1xf32>
    %cst_13 = arith.constant 0.000000e+00 : f32
    %19 = vector.broadcast %cst_13 : f32 to vector<16x128xf32>
    %cst_14 = arith.constant 0xFF800000 : f32
    %20 = vector.broadcast %cst_14 : f32 to vector<16x128xf32>
    %cst_15 = arith.constant 0x7F800000 : f32
    %21 = vector.broadcast %cst_15 : f32 to vector<16x128xf32>
    %c0_i32 = arith.constant 0 : i32
    %c8_i32_16 = arith.constant 8 : i32
    %22 = arith.muli %c0_i32, %c8_i32_16 : i32
    %23 = tpu.assume_multiple %22, 8 : i32
    %c15_i32 = arith.constant 15 : i32
    %24 = arith.subi %c15_i32, %c0_i32 : i32
    %c8_i32_17 = arith.constant 8 : i32
    %25 = arith.muli %24, %c8_i32_17 : i32
    %26 = tpu.assume_multiple %25, 8 : i32
    %27 = arith.index_cast %23 : i32 to index
    %c0_18 = arith.constant 0 : index
    %28 = vector.load %arg17[%27, %c0_18] : memref<128x512xf32, #tpu.memory_space<vmem>>, vector<8x512xf32>
    %29 = arith.index_cast %26 : i32 to index
    %c0_19 = arith.constant 0 : index
    %30 = vector.load %arg18[%29, %c0_19] : memref<128x512xf32, #tpu.memory_space<vmem>>, vector<8x512xf32>
    %31 = tpu.concatenate %28, %30 in 0 : vector<8x512xf32>, vector<8x512xf32> -> vector<16x512xf32>
    %32 = vector.broadcast %18 : vector<16x1xf32> to vector<16x128xf32>
    %33 = arith.mulf %19, %32 : vector<16x128xf32>
    %cst_20 = arith.constant 1.000000e+00 : f32
    %34 = vector.broadcast %cst_20 : f32 to vector<16x1xf32>
    %35 = arith.subf %34, %18 : vector<16x1xf32>
    %36 = vector.broadcast %35 : vector<16x1xf32> to vector<16x128xf32>
    %37 = arith.mulf %19, %36 : vector<16x128xf32>
    %38 = tpu.concatenate %33, %37 in 1 : vector<16x128xf32>, vector<16x128xf32> -> vector<16x256xf32>
    %39 = arith.truncf %38 : vector<16x256xf32> to vector<16x256xbf16>
    %cst_21 = arith.constant dense<0.000000e+00> : vector<16x512xf32>
    %40 = tpu.matmul %39, %13, %cst_21 {dimension_numbers = #tpu.dot_dimension_numbers<[1], [0], [0], [1], [0, 0, 1, 1], [], []>} : vector<16x256xbf16>, vector<256x512xbf16>, vector<16x512xf32> -> vector<16x512xf32>
    %41 = arith.addf %31, %40 : vector<16x512xf32>
    %42 = vector.extract_strided_slice %41 {offsets = [0, 0], sizes = [16, 128], strides = [1, 1]} : vector<16x512xf32> to vector<16x128xf32>
    %43 = arith.negf %42 : vector<16x128xf32>
    %44 = math.exp %43 : vector<16x128xf32>
    %cst_22 = arith.constant 1.000000e+00 : f32
    %45 = vector.broadcast %cst_22 : f32 to vector<16x128xf32>
    %46 = arith.addf %45, %44 : vector<16x128xf32>
    %47 = arith.divf %45, %46 : vector<16x128xf32>
    %48 = vector.extract_strided_slice %41 {offsets = [0, 128], sizes = [16, 128], strides = [1, 1]} : vector<16x512xf32> to vector<16x128xf32>
    %49 = arith.negf %48 : vector<16x128xf32>
    %50 = math.exp %49 : vector<16x128xf32>
    %cst_23 = arith.constant 1.000000e+00 : f32
    %51 = vector.broadcast %cst_23 : f32 to vector<16x128xf32>
    %52 = arith.addf %51, %50 : vector<16x128xf32>
    %53 = arith.divf %51, %52 : vector<16x128xf32>
    %54 = vector.extract_strided_slice %41 {offsets = [0, 256], sizes = [16, 128], strides = [1, 1]} : vector<16x512xf32> to vector<16x128xf32>
    %55 = math.tanh %54 : vector<16x128xf32>
    %56 = vector.extract_strided_slice %41 {offsets = [0, 384], sizes = [16, 128], strides = [1, 1]} : vector<16x512xf32> to vector<16x128xf32>
    %57 = arith.negf %56 : vector<16x128xf32>
    %58 = math.exp %57 : vector<16x128xf32>
    %cst_24 = arith.constant 1.000000e+00 : f32
    %59 = vector.broadcast %cst_24 : f32 to vector<16x128xf32>
    %60 = arith.addf %59, %58 : vector<16x128xf32>
    %61 = arith.divf %59, %60 : vector<16x128xf32>
    %62 = arith.mulf %53, %19 : vector<16x128xf32>
    %63 = arith.mulf %47, %55 : vector<16x128xf32>
    %64 = arith.addf %62, %63 : vector<16x128xf32>
    %65 = math.tanh %64 : vector<16x128xf32>
    %66 = arith.mulf %61, %65 : vector<16x128xf32>
    %67 = arith.addf %19, %66 : vector<16x128xf32>
    %68 = arith.mulf %66, %66 : vector<16x128xf32>
    %69 = arith.addf %19, %68 : vector<16x128xf32>
    %70 = arith.maximumf %20, %66 : vector<16x128xf32>
    %71 = arith.minimumf %21, %66 : vector<16x128xf32>
    %c1_i32 = arith.constant 1 : i32
    %c8_i32_25 = arith.constant 8 : i32
    %72 = arith.muli %c1_i32, %c8_i32_25 : i32
    %73 = tpu.assume_multiple %72, 8 : i32
    %c15_i32_26 = arith.constant 15 : i32
    %74 = arith.subi %c15_i32_26, %c1_i32 : i32
    %c8_i32_27 = arith.constant 8 : i32
    %75 = arith.muli %74, %c8_i32_27 : i32
    %76 = tpu.assume_multiple %75, 8 : i32
    %77 = arith.index_cast %73 : i32 to index
    %c0_28 = arith.constant 0 : index
    %78 = vector.load %arg17[%77, %c0_28] : memref<128x512xf32, #tpu.memory_space<vmem>>, vector<8x512xf32>
    %79 = arith.index_cast %76 : i32 to index
    %c0_29 = arith.constant 0 : index
    %80 = vector.load %arg18[%79, %c0_29] : memref<128x512xf32, #tpu.memory_space<vmem>>, vector<8x512xf32>
    %81 = tpu.concatenate %78, %80 in 0 : vector<8x512xf32>, vector<8x512xf32> -> vector<16x512xf32>
    %82 = vector.broadcast %18 : vector<16x1xf32> to vector<16x128xf32>
    %83 = arith.mulf %66, %82 : vector<16x128xf32>
    %cst_30 = arith.constant 1.000000e+00 : f32
    %84 = vector.broadcast %cst_30 : f32 to vector<16x1xf32>
    %85 = arith.subf %84, %18 : vector<16x1xf32>
    %86 = vector.broadcast %85 : vector<16x1xf32> to vector<16x128xf32>
    %87 = arith.mulf %66, %86 : vector<16x128xf32>
    %88 = tpu.concatenate %83, %87 in 1 : vector<16x128xf32>, vector<16x128xf32> -> vector<16x256xf32>
    %89 = arith.truncf %88 : vector<16x256xf32> to vector<16x256xbf16>
    %cst_31 = arith.constant dense<0.000000e+00> : vector<16x512xf32>
    %90 = tpu.matmul %89, %13, %cst_31 {dimension_numbers = #tpu.dot_dimension_numbers<[1], [0], [0], [1], [0, 0, 1, 1], [], []>} : vector<16x256xbf16>, vector<256x512xbf16>, vector<16x512xf32> -> vector<16x512xf32>
    %91 = arith.addf %81, %90 : vector<16x512xf32>
    %92 = vector.extract_strided_slice %91 {offsets = [0, 0], sizes = [16, 128], strides = [1, 1]} : vector<16x512xf32> to vector<16x128xf32>
    %93 = arith.negf %92 : vector<16x128xf32>
    %94 = math.exp %93 : vector<16x128xf32>
    %cst_32 = arith.constant 1.000000e+00 : f32
    %95 = vector.broadcast %cst_32 : f32 to vector<16x128xf32>
    %96 = arith.addf %95, %94 : vector<16x128xf32>
    %97 = arith.divf %95, %96 : vector<16x128xf32>
    %98 = vector.extract_strided_slice %91 {offsets = [0, 128], sizes = [16, 128], strides = [1, 1]} : vector<16x512xf32> to vector<16x128xf32>
    %99 = arith.negf %98 : vector<16x128xf32>
    %100 = math.exp %99 : vector<16x128xf32>
    %cst_33 = arith.constant 1.000000e+00 : f32
    %101 = vector.broadcast %cst_33 : f32 to vector<16x128xf32>
    %102 = arith.addf %101, %100 : vector<16x128xf32>
    %103 = arith.divf %101, %102 : vector<16x128xf32>
    %104 = vector.extract_strided_slice %91 {offsets = [0, 256], sizes = [16, 128], strides = [1, 1]} : vector<16x512xf32> to vector<16x128xf32>
    %105 = math.tanh %104 : vector<16x128xf32>
    %106 = vector.extract_strided_slice %91 {offsets = [0, 384], sizes = [16, 128], strides = [1, 1]} : vector<16x512xf32> to vector<16x128xf32>
    %107 = arith.negf %106 : vector<16x128xf32>
    %108 = math.exp %107 : vector<16x128xf32>
    %cst_34 = arith.constant 1.000000e+00 : f32
    %109 = vector.broadcast %cst_34 : f32 to vector<16x128xf32>
    %110 = arith.addf %109, %108 : vector<16x128xf32>
    %111 = arith.divf %109, %110 : vector<16x128xf32>
    %112 = arith.mulf %103, %64 : vector<16x128xf32>
    %113 = arith.mulf %97, %105 : vector<16x128xf32>
    %114 = arith.addf %112, %113 : vector<16x128xf32>
    %115 = math.tanh %114 : vector<16x128xf32>
    %116 = arith.mulf %111, %115 : vector<16x128xf32>
    %117 = arith.addf %67, %116 : vector<16x128xf32>
    %118 = arith.mulf %116, %116 : vector<16x128xf32>
    %119 = arith.addf %69, %118 : vector<16x128xf32>
    %120 = arith.maximumf %70, %116 : vector<16x128xf32>
    %121 = arith.minimumf %71, %116 : vector<16x128xf32>
    %c2_i32 = arith.constant 2 : i32
    %c8_i32_35 = arith.constant 8 : i32
    %122 = arith.muli %c2_i32, %c8_i32_35 : i32
    %123 = tpu.assume_multiple %122, 8 : i32
    %c15_i32_36 = arith.constant 15 : i32
    %124 = arith.subi %c15_i32_36, %c2_i32 : i32
    %c8_i32_37 = arith.constant 8 : i32
    %125 = arith.muli %124, %c8_i32_37 : i32
    %126 = tpu.assume_multiple %125, 8 : i32
    %127 = arith.index_cast %123 : i32 to index
    %c0_38 = arith.constant 0 : index
    %128 = vector.load %arg17[%127, %c0_38] : memref<128x512xf32, #tpu.memory_space<vmem>>, vector<8x512xf32>
    %129 = arith.index_cast %126 : i32 to index
    %c0_39 = arith.constant 0 : index
    %130 = vector.load %arg18[%129, %c0_39] : memref<128x512xf32, #tpu.memory_space<vmem>>, vector<8x512xf32>
    %131 = tpu.concatenate %128, %130 in 0 : vector<8x512xf32>, vector<8x512xf32> -> vector<16x512xf32>
    %132 = vector.broadcast %18 : vector<16x1xf32> to vector<16x128xf32>
    %133 = arith.mulf %116, %132 : vector<16x128xf32>
    %cst_40 = arith.constant 1.000000e+00 : f32
    %134 = vector.broadcast %cst_40 : f32 to vector<16x1xf32>
    %135 = arith.subf %134, %18 : vector<16x1xf32>
    %136 = vector.broadcast %135 : vector<16x1xf32> to vector<16x128xf32>
    %137 = arith.mulf %116, %136 : vector<16x128xf32>
    %138 = tpu.concatenate %133, %137 in 1 : vector<16x128xf32>, vector<16x128xf32> -> vector<16x256xf32>
    %139 = arith.truncf %138 : vector<16x256xf32> to vector<16x256xbf16>
    %cst_41 = arith.constant dense<0.000000e+00> : vector<16x512xf32>
    %140 = tpu.matmul %139, %13, %cst_41 {dimension_numbers = #tpu.dot_dimension_numbers<[1], [0], [0], [1], [0, 0, 1, 1], [], []>} : vector<16x256xbf16>, vector<256x512xbf16>, vector<16x512xf32> -> vector<16x512xf32>
    %141 = arith.addf %131, %140 : vector<16x512xf32>
    %142 = vector.extract_strided_slice %141 {offsets = [0, 0], sizes = [16, 128], strides = [1, 1]} : vector<16x512xf32> to vector<16x128xf32>
    %143 = arith.negf %142 : vector<16x128xf32>
    %144 = math.exp %143 : vector<16x128xf32>
    %cst_42 = arith.constant 1.000000e+00 : f32
    %145 = vector.broadcast %cst_42 : f32 to vector<16x128xf32>
    %146 = arith.addf %145, %144 : vector<16x128xf32>
    %147 = arith.divf %145, %146 : vector<16x128xf32>
    %148 = vector.extract_strided_slice %141 {offsets = [0, 128], sizes = [16, 128], strides = [1, 1]} : vector<16x512xf32> to vector<16x128xf32>
    %149 = arith.negf %148 : vector<16x128xf32>
    %150 = math.exp %149 : vector<16x128xf32>
    %cst_43 = arith.constant 1.000000e+00 : f32
    %151 = vector.broadcast %cst_43 : f32 to vector<16x128xf32>
    %152 = arith.addf %151, %150 : vector<16x128xf32>
    %153 = arith.divf %151, %152 : vector<16x128xf32>
    %154 = vector.extract_strided_slice %141 {offsets = [0, 256], sizes = [16, 128], strides = [1, 1]} : vector<16x512xf32> to vector<16x128xf32>
    %155 = math.tanh %154 : vector<16x128xf32>
    %156 = vector.extract_strided_slice %141 {offsets = [0, 384], sizes = [16, 128], strides = [1, 1]} : vector<16x512xf32> to vector<16x128xf32>
    %157 = arith.negf %156 : vector<16x128xf32>
    %158 = math.exp %157 : vector<16x128xf32>
    %cst_44 = arith.constant 1.000000e+00 : f32
    %159 = vector.broadcast %cst_44 : f32 to vector<16x128xf32>
    %160 = arith.addf %159, %158 : vector<16x128xf32>
    %161 = arith.divf %159, %160 : vector<16x128xf32>
    %162 = arith.mulf %153, %114 : vector<16x128xf32>
    %163 = arith.mulf %147, %155 : vector<16x128xf32>
    %164 = arith.addf %162, %163 : vector<16x128xf32>
    %165 = math.tanh %164 : vector<16x128xf32>
    %166 = arith.mulf %161, %165 : vector<16x128xf32>
    %167 = arith.addf %117, %166 : vector<16x128xf32>
    %168 = arith.mulf %166, %166 : vector<16x128xf32>
    %169 = arith.addf %119, %168 : vector<16x128xf32>
    %170 = arith.maximumf %120, %166 : vector<16x128xf32>
    %171 = arith.minimumf %121, %166 : vector<16x128xf32>
    %c3_i32 = arith.constant 3 : i32
    %c8_i32_45 = arith.constant 8 : i32
    %172 = arith.muli %c3_i32, %c8_i32_45 : i32
    %173 = tpu.assume_multiple %172, 8 : i32
    %c15_i32_46 = arith.constant 15 : i32
    %174 = arith.subi %c15_i32_46, %c3_i32 : i32
    %c8_i32_47 = arith.constant 8 : i32
    %175 = arith.muli %174, %c8_i32_47 : i32
    %176 = tpu.assume_multiple %175, 8 : i32
    %177 = arith.index_cast %173 : i32 to index
    %c0_48 = arith.constant 0 : index
    %178 = vector.load %arg17[%177, %c0_48] : memref<128x512xf32, #tpu.memory_space<vmem>>, vector<8x512xf32>
    %179 = arith.index_cast %176 : i32 to index
    %c0_49 = arith.constant 0 : index
    %180 = vector.load %arg18[%179, %c0_49] : memref<128x512xf32, #tpu.memory_space<vmem>>, vector<8x512xf32>
    %181 = tpu.concatenate %178, %180 in 0 : vector<8x512xf32>, vector<8x512xf32> -> vector<16x512xf32>
    %182 = vector.broadcast %18 : vector<16x1xf32> to vector<16x128xf32>
    %183 = arith.mulf %166, %182 : vector<16x128xf32>
    %cst_50 = arith.constant 1.000000e+00 : f32
    %184 = vector.broadcast %cst_50 : f32 to vector<16x1xf32>
    %185 = arith.subf %184, %18 : vector<16x1xf32>
    %186 = vector.broadcast %185 : vector<16x1xf32> to vector<16x128xf32>
    %187 = arith.mulf %166, %186 : vector<16x128xf32>
    %188 = tpu.concatenate %183, %187 in 1 : vector<16x128xf32>, vector<16x128xf32> -> vector<16x256xf32>
    %189 = arith.truncf %188 : vector<16x256xf32> to vector<16x256xbf16>
    %cst_51 = arith.constant dense<0.000000e+00> : vector<16x512xf32>
    %190 = tpu.matmul %189, %13, %cst_51 {dimension_numbers = #tpu.dot_dimension_numbers<[1], [0], [0], [1], [0, 0, 1, 1], [], []>} : vector<16x256xbf16>, vector<256x512xbf16>, vector<16x512xf32> -> vector<16x512xf32>
    %191 = arith.addf %181, %190 : vector<16x512xf32>
    %192 = vector.extract_strided_slice %191 {offsets = [0, 0], sizes = [16, 128], strides = [1, 1]} : vector<16x512xf32> to vector<16x128xf32>
    %193 = arith.negf %192 : vector<16x128xf32>
    %194 = math.exp %193 : vector<16x128xf32>
    %cst_52 = arith.constant 1.000000e+00 : f32
    %195 = vector.broadcast %cst_52 : f32 to vector<16x128xf32>
    %196 = arith.addf %195, %194 : vector<16x128xf32>
    %197 = arith.divf %195, %196 : vector<16x128xf32>
    %198 = vector.extract_strided_slice %191 {offsets = [0, 128], sizes = [16, 128], strides = [1, 1]} : vector<16x512xf32> to vector<16x128xf32>
    %199 = arith.negf %198 : vector<16x128xf32>
    %200 = math.exp %199 : vector<16x128xf32>
    %cst_53 = arith.constant 1.000000e+00 : f32
    %201 = vector.broadcast %cst_53 : f32 to vector<16x128xf32>
    %202 = arith.addf %201, %200 : vector<16x128xf32>
    %203 = arith.divf %201, %202 : vector<16x128xf32>
    %204 = vector.extract_strided_slice %191 {offsets = [0, 256], sizes = [16, 128], strides = [1, 1]} : vector<16x512xf32> to vector<16x128xf32>
    %205 = math.tanh %204 : vector<16x128xf32>
    %206 = vector.extract_strided_slice %191 {offsets = [0, 384], sizes = [16, 128], strides = [1, 1]} : vector<16x512xf32> to vector<16x128xf32>
    %207 = arith.negf %206 : vector<16x128xf32>
    %208 = math.exp %207 : vector<16x128xf32>
    %cst_54 = arith.constant 1.000000e+00 : f32
    %209 = vector.broadcast %cst_54 : f32 to vector<16x128xf32>
    %210 = arith.addf %209, %208 : vector<16x128xf32>
    %211 = arith.divf %209, %210 : vector<16x128xf32>
    %212 = arith.mulf %203, %164 : vector<16x128xf32>
    %213 = arith.mulf %197, %205 : vector<16x128xf32>
    %214 = arith.addf %212, %213 : vector<16x128xf32>
    %215 = math.tanh %214 : vector<16x128xf32>
    %216 = arith.mulf %211, %215 : vector<16x128xf32>
    %217 = arith.addf %167, %216 : vector<16x128xf32>
    %218 = arith.mulf %216, %216 : vector<16x128xf32>
    %219 = arith.addf %169, %218 : vector<16x128xf32>
    %220 = arith.maximumf %170, %216 : vector<16x128xf32>
    %221 = arith.minimumf %171, %216 : vector<16x128xf32>
    %c4_i32 = arith.constant 4 : i32
    %c8_i32_55 = arith.constant 8 : i32
    %222 = arith.muli %c4_i32, %c8_i32_55 : i32
    %223 = tpu.assume_multiple %222, 8 : i32
    %c15_i32_56 = arith.constant 15 : i32
    %224 = arith.subi %c15_i32_56, %c4_i32 : i32
    %c8_i32_57 = arith.constant 8 : i32
    %225 = arith.muli %224, %c8_i32_57 : i32
    %226 = tpu.assume_multiple %225, 8 : i32
    %227 = arith.index_cast %223 : i32 to index
    %c0_58 = arith.constant 0 : index
    %228 = vector.load %arg17[%227, %c0_58] : memref<128x512xf32, #tpu.memory_space<vmem>>, vector<8x512xf32>
    %229 = arith.index_cast %226 : i32 to index
    %c0_59 = arith.constant 0 : index
    %230 = vector.load %arg18[%229, %c0_59] : memref<128x512xf32, #tpu.memory_space<vmem>>, vector<8x512xf32>
    %231 = tpu.concatenate %228, %230 in 0 : vector<8x512xf32>, vector<8x512xf32> -> vector<16x512xf32>
    %232 = vector.broadcast %18 : vector<16x1xf32> to vector<16x128xf32>
    %233 = arith.mulf %216, %232 : vector<16x128xf32>
    %cst_60 = arith.constant 1.000000e+00 : f32
    %234 = vector.broadcast %cst_60 : f32 to vector<16x1xf32>
    %235 = arith.subf %234, %18 : vector<16x1xf32>
    %236 = vector.broadcast %235 : vector<16x1xf32> to vector<16x128xf32>
    %237 = arith.mulf %216, %236 : vector<16x128xf32>
    %238 = tpu.concatenate %233, %237 in 1 : vector<16x128xf32>, vector<16x128xf32> -> vector<16x256xf32>
    %239 = arith.truncf %238 : vector<16x256xf32> to vector<16x256xbf16>
    %cst_61 = arith.constant dense<0.000000e+00> : vector<16x512xf32>
    %240 = tpu.matmul %239, %13, %cst_61 {dimension_numbers = #tpu.dot_dimension_numbers<[1], [0], [0], [1], [0, 0, 1, 1], [], []>} : vector<16x256xbf16>, vector<256x512xbf16>, vector<16x512xf32> -> vector<16x512xf32>
    %241 = arith.addf %231, %240 : vector<16x512xf32>
    %242 = vector.extract_strided_slice %241 {offsets = [0, 0], sizes = [16, 128], strides = [1, 1]} : vector<16x512xf32> to vector<16x128xf32>
    %243 = arith.negf %242 : vector<16x128xf32>
    %244 = math.exp %243 : vector<16x128xf32>
    %cst_62 = arith.constant 1.000000e+00 : f32
    %245 = vector.broadcast %cst_62 : f32 to vector<16x128xf32>
    %246 = arith.addf %245, %244 : vector<16x128xf32>
    %247 = arith.divf %245, %246 : vector<16x128xf32>
    %248 = vector.extract_strided_slice %241 {offsets = [0, 128], sizes = [16, 128], strides = [1, 1]} : vector<16x512xf32> to vector<16x128xf32>
    %249 = arith.negf %248 : vector<16x128xf32>
    %250 = math.exp %249 : vector<16x128xf32>
    %cst_63 = arith.constant 1.000000e+00 : f32
    %251 = vector.broadcast %cst_63 : f32 to vector<16x128xf32>
    %252 = arith.addf %251, %250 : vector<16x128xf32>
    %253 = arith.divf %251, %252 : vector<16x128xf32>
    %254 = vector.extract_strided_slice %241 {offsets = [0, 256], sizes = [16, 128], strides = [1, 1]} : vector<16x512xf32> to vector<16x128xf32>
    %255 = math.tanh %254 : vector<16x128xf32>
    %256 = vector.extract_strided_slice %241 {offsets = [0, 384], sizes = [16, 128], strides = [1, 1]} : vector<16x512xf32> to vector<16x128xf32>
    %257 = arith.negf %256 : vector<16x128xf32>
    %258 = math.exp %257 : vector<16x128xf32>
    %cst_64 = arith.constant 1.000000e+00 : f32
    %259 = vector.broadcast %cst_64 : f32 to vector<16x128xf32>
    %260 = arith.addf %259, %258 : vector<16x128xf32>
    %261 = arith.divf %259, %260 : vector<16x128xf32>
    %262 = arith.mulf %253, %214 : vector<16x128xf32>
    %263 = arith.mulf %247, %255 : vector<16x128xf32>
    %264 = arith.addf %262, %263 : vector<16x128xf32>
    %265 = math.tanh %264 : vector<16x128xf32>
    %266 = arith.mulf %261, %265 : vector<16x128xf32>
    %267 = arith.addf %217, %266 : vector<16x128xf32>
    %268 = arith.mulf %266, %266 : vector<16x128xf32>
    %269 = arith.addf %219, %268 : vector<16x128xf32>
    %270 = arith.maximumf %220, %266 : vector<16x128xf32>
    %271 = arith.minimumf %221, %266 : vector<16x128xf32>
    %c5_i32 = arith.constant 5 : i32
    %c8_i32_65 = arith.constant 8 : i32
    %272 = arith.muli %c5_i32, %c8_i32_65 : i32
    %273 = tpu.assume_multiple %272, 8 : i32
    %c15_i32_66 = arith.constant 15 : i32
    %274 = arith.subi %c15_i32_66, %c5_i32 : i32
    %c8_i32_67 = arith.constant 8 : i32
    %275 = arith.muli %274, %c8_i32_67 : i32
    %276 = tpu.assume_multiple %275, 8 : i32
    %277 = arith.index_cast %273 : i32 to index
    %c0_68 = arith.constant 0 : index
    %278 = vector.load %arg17[%277, %c0_68] : memref<128x512xf32, #tpu.memory_space<vmem>>, vector<8x512xf32>
    %279 = arith.index_cast %276 : i32 to index
    %c0_69 = arith.constant 0 : index
    %280 = vector.load %arg18[%279, %c0_69] : memref<128x512xf32, #tpu.memory_space<vmem>>, vector<8x512xf32>
    %281 = tpu.concatenate %278, %280 in 0 : vector<8x512xf32>, vector<8x512xf32> -> vector<16x512xf32>
    %282 = vector.broadcast %18 : vector<16x1xf32> to vector<16x128xf32>
    %283 = arith.mulf %266, %282 : vector<16x128xf32>
    %cst_70 = arith.constant 1.000000e+00 : f32
    %284 = vector.broadcast %cst_70 : f32 to vector<16x1xf32>
    %285 = arith.subf %284, %18 : vector<16x1xf32>
    %286 = vector.broadcast %285 : vector<16x1xf32> to vector<16x128xf32>
    %287 = arith.mulf %266, %286 : vector<16x128xf32>
    %288 = tpu.concatenate %283, %287 in 1 : vector<16x128xf32>, vector<16x128xf32> -> vector<16x256xf32>
    %289 = arith.truncf %288 : vector<16x256xf32> to vector<16x256xbf16>
    %cst_71 = arith.constant dense<0.000000e+00> : vector<16x512xf32>
    %290 = tpu.matmul %289, %13, %cst_71 {dimension_numbers = #tpu.dot_dimension_numbers<[1], [0], [0], [1], [0, 0, 1, 1], [], []>} : vector<16x256xbf16>, vector<256x512xbf16>, vector<16x512xf32> -> vector<16x512xf32>
    %291 = arith.addf %281, %290 : vector<16x512xf32>
    %292 = vector.extract_strided_slice %291 {offsets = [0, 0], sizes = [16, 128], strides = [1, 1]} : vector<16x512xf32> to vector<16x128xf32>
    %293 = arith.negf %292 : vector<16x128xf32>
    %294 = math.exp %293 : vector<16x128xf32>
    %cst_72 = arith.constant 1.000000e+00 : f32
    %295 = vector.broadcast %cst_72 : f32 to vector<16x128xf32>
    %296 = arith.addf %295, %294 : vector<16x128xf32>
    %297 = arith.divf %295, %296 : vector<16x128xf32>
    %298 = vector.extract_strided_slice %291 {offsets = [0, 128], sizes = [16, 128], strides = [1, 1]} : vector<16x512xf32> to vector<16x128xf32>
    %299 = arith.negf %298 : vector<16x128xf32>
    %300 = math.exp %299 : vector<16x128xf32>
    %cst_73 = arith.constant 1.000000e+00 : f32
    %301 = vector.broadcast %cst_73 : f32 to vector<16x128xf32>
    %302 = arith.addf %301, %300 : vector<16x128xf32>
    %303 = arith.divf %301, %302 : vector<16x128xf32>
    %304 = vector.extract_strided_slice %291 {offsets = [0, 256], sizes = [16, 128], strides = [1, 1]} : vector<16x512xf32> to vector<16x128xf32>
    %305 = math.tanh %304 : vector<16x128xf32>
    %306 = vector.extract_strided_slice %291 {offsets = [0, 384], sizes = [16, 128], strides = [1, 1]} : vector<16x512xf32> to vector<16x128xf32>
    %307 = arith.negf %306 : vector<16x128xf32>
    %308 = math.exp %307 : vector<16x128xf32>
    %cst_74 = arith.constant 1.000000e+00 : f32
    %309 = vector.broadcast %cst_74 : f32 to vector<16x128xf32>
    %310 = arith.addf %309, %308 : vector<16x128xf32>
    %311 = arith.divf %309, %310 : vector<16x128xf32>
    %312 = arith.mulf %303, %264 : vector<16x128xf32>
    %313 = arith.mulf %297, %305 : vector<16x128xf32>
    %314 = arith.addf %312, %313 : vector<16x128xf32>
    %315 = math.tanh %314 : vector<16x128xf32>
    %316 = arith.mulf %311, %315 : vector<16x128xf32>
    %317 = arith.addf %267, %316 : vector<16x128xf32>
    %318 = arith.mulf %316, %316 : vector<16x128xf32>
    %319 = arith.addf %269, %318 : vector<16x128xf32>
    %320 = arith.maximumf %270, %316 : vector<16x128xf32>
    %321 = arith.minimumf %271, %316 : vector<16x128xf32>
    %c6_i32 = arith.constant 6 : i32
    %c8_i32_75 = arith.constant 8 : i32
    %322 = arith.muli %c6_i32, %c8_i32_75 : i32
    %323 = tpu.assume_multiple %322, 8 : i32
    %c15_i32_76 = arith.constant 15 : i32
    %324 = arith.subi %c15_i32_76, %c6_i32 : i32
    %c8_i32_77 = arith.constant 8 : i32
    %325 = arith.muli %324, %c8_i32_77 : i32
    %326 = tpu.assume_multiple %325, 8 : i32
    %327 = arith.index_cast %323 : i32 to index
    %c0_78 = arith.constant 0 : index
    %328 = vector.load %arg17[%327, %c0_78] : memref<128x512xf32, #tpu.memory_space<vmem>>, vector<8x512xf32>
    %329 = arith.index_cast %326 : i32 to index
    %c0_79 = arith.constant 0 : index
    %330 = vector.load %arg18[%329, %c0_79] : memref<128x512xf32, #tpu.memory_space<vmem>>, vector<8x512xf32>
    %331 = tpu.concatenate %328, %330 in 0 : vector<8x512xf32>, vector<8x512xf32> -> vector<16x512xf32>
    %332 = vector.broadcast %18 : vector<16x1xf32> to vector<16x128xf32>
    %333 = arith.mulf %316, %332 : vector<16x128xf32>
    %cst_80 = arith.constant 1.000000e+00 : f32
    %334 = vector.broadcast %cst_80 : f32 to vector<16x1xf32>
    %335 = arith.subf %334, %18 : vector<16x1xf32>
    %336 = vector.broadcast %335 : vector<16x1xf32> to vector<16x128xf32>
    %337 = arith.mulf %316, %336 : vector<16x128xf32>
    %338 = tpu.concatenate %333, %337 in 1 : vector<16x128xf32>, vector<16x128xf32> -> vector<16x256xf32>
    %339 = arith.truncf %338 : vector<16x256xf32> to vector<16x256xbf16>
    %cst_81 = arith.constant dense<0.000000e+00> : vector<16x512xf32>
    %340 = tpu.matmul %339, %13, %cst_81 {dimension_numbers = #tpu.dot_dimension_numbers<[1], [0], [0], [1], [0, 0, 1, 1], [], []>} : vector<16x256xbf16>, vector<256x512xbf16>, vector<16x512xf32> -> vector<16x512xf32>
    %341 = arith.addf %331, %340 : vector<16x512xf32>
    %342 = vector.extract_strided_slice %341 {offsets = [0, 0], sizes = [16, 128], strides = [1, 1]} : vector<16x512xf32> to vector<16x128xf32>
    %343 = arith.negf %342 : vector<16x128xf32>
    %344 = math.exp %343 : vector<16x128xf32>
    %cst_82 = arith.constant 1.000000e+00 : f32
    %345 = vector.broadcast %cst_82 : f32 to vector<16x128xf32>
    %346 = arith.addf %345, %344 : vector<16x128xf32>
    %347 = arith.divf %345, %346 : vector<16x128xf32>
    %348 = vector.extract_strided_slice %341 {offsets = [0, 128], sizes = [16, 128], strides = [1, 1]} : vector<16x512xf32> to vector<16x128xf32>
    %349 = arith.negf %348 : vector<16x128xf32>
    %350 = math.exp %349 : vector<16x128xf32>
    %cst_83 = arith.constant 1.000000e+00 : f32
    %351 = vector.broadcast %cst_83 : f32 to vector<16x128xf32>
    %352 = arith.addf %351, %350 : vector<16x128xf32>
    %353 = arith.divf %351, %352 : vector<16x128xf32>
    %354 = vector.extract_strided_slice %341 {offsets = [0, 256], sizes = [16, 128], strides = [1, 1]} : vector<16x512xf32> to vector<16x128xf32>
    %355 = math.tanh %354 : vector<16x128xf32>
    %356 = vector.extract_strided_slice %341 {offsets = [0, 384], sizes = [16, 128], strides = [1, 1]} : vector<16x512xf32> to vector<16x128xf32>
    %357 = arith.negf %356 : vector<16x128xf32>
    %358 = math.exp %357 : vector<16x128xf32>
    %cst_84 = arith.constant 1.000000e+00 : f32
    %359 = vector.broadcast %cst_84 : f32 to vector<16x128xf32>
    %360 = arith.addf %359, %358 : vector<16x128xf32>
    %361 = arith.divf %359, %360 : vector<16x128xf32>
    %362 = arith.mulf %353, %314 : vector<16x128xf32>
    %363 = arith.mulf %347, %355 : vector<16x128xf32>
    %364 = arith.addf %362, %363 : vector<16x128xf32>
    %365 = math.tanh %364 : vector<16x128xf32>
    %366 = arith.mulf %361, %365 : vector<16x128xf32>
    %367 = arith.addf %317, %366 : vector<16x128xf32>
    %368 = arith.mulf %366, %366 : vector<16x128xf32>
    %369 = arith.addf %319, %368 : vector<16x128xf32>
    %370 = arith.maximumf %320, %366 : vector<16x128xf32>
    %371 = arith.minimumf %321, %366 : vector<16x128xf32>
    %c7_i32 = arith.constant 7 : i32
    %c8_i32_85 = arith.constant 8 : i32
    %372 = arith.muli %c7_i32, %c8_i32_85 : i32
    %373 = tpu.assume_multiple %372, 8 : i32
    %c15_i32_86 = arith.constant 15 : i32
    %374 = arith.subi %c15_i32_86, %c7_i32 : i32
    %c8_i32_87 = arith.constant 8 : i32
    %375 = arith.muli %374, %c8_i32_87 : i32
    %376 = tpu.assume_multiple %375, 8 : i32
    %377 = arith.index_cast %373 : i32 to index
    %c0_88 = arith.constant 0 : index
    %378 = vector.load %arg17[%377, %c0_88] : memref<128x512xf32, #tpu.memory_space<vmem>>, vector<8x512xf32>
    %379 = arith.index_cast %376 : i32 to index
    %c0_89 = arith.constant 0 : index
    %380 = vector.load %arg18[%379, %c0_89] : memref<128x512xf32, #tpu.memory_space<vmem>>, vector<8x512xf32>
    %381 = tpu.concatenate %378, %380 in 0 : vector<8x512xf32>, vector<8x512xf32> -> vector<16x512xf32>
    %382 = vector.broadcast %18 : vector<16x1xf32> to vector<16x128xf32>
    %383 = arith.mulf %366, %382 : vector<16x128xf32>
    %cst_90 = arith.constant 1.000000e+00 : f32
    %384 = vector.broadcast %cst_90 : f32 to vector<16x1xf32>
    %385 = arith.subf %384, %18 : vector<16x1xf32>
    %386 = vector.broadcast %385 : vector<16x1xf32> to vector<16x128xf32>
    %387 = arith.mulf %366, %386 : vector<16x128xf32>
    %388 = tpu.concatenate %383, %387 in 1 : vector<16x128xf32>, vector<16x128xf32> -> vector<16x256xf32>
    %389 = arith.truncf %388 : vector<16x256xf32> to vector<16x256xbf16>
    %cst_91 = arith.constant dense<0.000000e+00> : vector<16x512xf32>
    %390 = tpu.matmul %389, %13, %cst_91 {dimension_numbers = #tpu.dot_dimension_numbers<[1], [0], [0], [1], [0, 0, 1, 1], [], []>} : vector<16x256xbf16>, vector<256x512xbf16>, vector<16x512xf32> -> vector<16x512xf32>
    %391 = arith.addf %381, %390 : vector<16x512xf32>
    %392 = vector.extract_strided_slice %391 {offsets = [0, 0], sizes = [16, 128], strides = [1, 1]} : vector<16x512xf32> to vector<16x128xf32>
    %393 = arith.negf %392 : vector<16x128xf32>
    %394 = math.exp %393 : vector<16x128xf32>
    %cst_92 = arith.constant 1.000000e+00 : f32
    %395 = vector.broadcast %cst_92 : f32 to vector<16x128xf32>
    %396 = arith.addf %395, %394 : vector<16x128xf32>
    %397 = arith.divf %395, %396 : vector<16x128xf32>
    %398 = vector.extract_strided_slice %391 {offsets = [0, 128], sizes = [16, 128], strides = [1, 1]} : vector<16x512xf32> to vector<16x128xf32>
    %399 = arith.negf %398 : vector<16x128xf32>
    %400 = math.exp %399 : vector<16x128xf32>
    %cst_93 = arith.constant 1.000000e+00 : f32
    %401 = vector.broadcast %cst_93 : f32 to vector<16x128xf32>
    %402 = arith.addf %401, %400 : vector<16x128xf32>
    %403 = arith.divf %401, %402 : vector<16x128xf32>
    %404 = vector.extract_strided_slice %391 {offsets = [0, 256], sizes = [16, 128], strides = [1, 1]} : vector<16x512xf32> to vector<16x128xf32>
    %405 = math.tanh %404 : vector<16x128xf32>
    %406 = vector.extract_strided_slice %391 {offsets = [0, 384], sizes = [16, 128], strides = [1, 1]} : vector<16x512xf32> to vector<16x128xf32>
    %407 = arith.negf %406 : vector<16x128xf32>
    %408 = math.exp %407 : vector<16x128xf32>
    %cst_94 = arith.constant 1.000000e+00 : f32
    %409 = vector.broadcast %cst_94 : f32 to vector<16x128xf32>
    %410 = arith.addf %409, %408 : vector<16x128xf32>
    %411 = arith.divf %409, %410 : vector<16x128xf32>
    %412 = arith.mulf %403, %364 : vector<16x128xf32>
    %413 = arith.mulf %397, %405 : vector<16x128xf32>
    %414 = arith.addf %412, %413 : vector<16x128xf32>
    %415 = math.tanh %414 : vector<16x128xf32>
    %416 = arith.mulf %411, %415 : vector<16x128xf32>
    %417 = arith.addf %367, %416 : vector<16x128xf32>
    %418 = arith.mulf %416, %416 : vector<16x128xf32>
    %419 = arith.addf %369, %418 : vector<16x128xf32>
    %420 = arith.maximumf %370, %416 : vector<16x128xf32>
    %421 = arith.minimumf %371, %416 : vector<16x128xf32>
    %c8_i32_95 = arith.constant 8 : i32
    %c8_i32_96 = arith.constant 8 : i32
    %422 = arith.muli %c8_i32_95, %c8_i32_96 : i32
    %423 = tpu.assume_multiple %422, 8 : i32
    %c15_i32_97 = arith.constant 15 : i32
    %424 = arith.subi %c15_i32_97, %c8_i32_95 : i32
    %c8_i32_98 = arith.constant 8 : i32
    %425 = arith.muli %424, %c8_i32_98 : i32
    %426 = tpu.assume_multiple %425, 8 : i32
    %427 = arith.index_cast %423 : i32 to index
    %c0_99 = arith.constant 0 : index
    %428 = vector.load %arg17[%427, %c0_99] : memref<128x512xf32, #tpu.memory_space<vmem>>, vector<8x512xf32>
    %429 = arith.index_cast %426 : i32 to index
    %c0_100 = arith.constant 0 : index
    %430 = vector.load %arg18[%429, %c0_100] : memref<128x512xf32, #tpu.memory_space<vmem>>, vector<8x512xf32>
    %431 = tpu.concatenate %428, %430 in 0 : vector<8x512xf32>, vector<8x512xf32> -> vector<16x512xf32>
    %432 = vector.broadcast %18 : vector<16x1xf32> to vector<16x128xf32>
    %433 = arith.mulf %416, %432 : vector<16x128xf32>
    %cst_101 = arith.constant 1.000000e+00 : f32
    %434 = vector.broadcast %cst_101 : f32 to vector<16x1xf32>
    %435 = arith.subf %434, %18 : vector<16x1xf32>
    %436 = vector.broadcast %435 : vector<16x1xf32> to vector<16x128xf32>
    %437 = arith.mulf %416, %436 : vector<16x128xf32>
    %438 = tpu.concatenate %433, %437 in 1 : vector<16x128xf32>, vector<16x128xf32> -> vector<16x256xf32>
    %439 = arith.truncf %438 : vector<16x256xf32> to vector<16x256xbf16>
    %cst_102 = arith.constant dense<0.000000e+00> : vector<16x512xf32>
    %440 = tpu.matmul %439, %13, %cst_102 {dimension_numbers = #tpu.dot_dimension_numbers<[1], [0], [0], [1], [0, 0, 1, 1], [], []>} : vector<16x256xbf16>, vector<256x512xbf16>, vector<16x512xf32> -> vector<16x512xf32>
    %441 = arith.addf %431, %440 : vector<16x512xf32>
    %442 = vector.extract_strided_slice %441 {offsets = [0, 0], sizes = [16, 128], strides = [1, 1]} : vector<16x512xf32> to vector<16x128xf32>
    %443 = arith.negf %442 : vector<16x128xf32>
    %444 = math.exp %443 : vector<16x128xf32>
    %cst_103 = arith.constant 1.000000e+00 : f32
    %445 = vector.broadcast %cst_103 : f32 to vector<16x128xf32>
    %446 = arith.addf %445, %444 : vector<16x128xf32>
    %447 = arith.divf %445, %446 : vector<16x128xf32>
    %448 = vector.extract_strided_slice %441 {offsets = [0, 128], sizes = [16, 128], strides = [1, 1]} : vector<16x512xf32> to vector<16x128xf32>
    %449 = arith.negf %448 : vector<16x128xf32>
    %450 = math.exp %449 : vector<16x128xf32>
    %cst_104 = arith.constant 1.000000e+00 : f32
    %451 = vector.broadcast %cst_104 : f32 to vector<16x128xf32>
    %452 = arith.addf %451, %450 : vector<16x128xf32>
    %453 = arith.divf %451, %452 : vector<16x128xf32>
    %454 = vector.extract_strided_slice %441 {offsets = [0, 256], sizes = [16, 128], strides = [1, 1]} : vector<16x512xf32> to vector<16x128xf32>
    %455 = math.tanh %454 : vector<16x128xf32>
    %456 = vector.extract_strided_slice %441 {offsets = [0, 384], sizes = [16, 128], strides = [1, 1]} : vector<16x512xf32> to vector<16x128xf32>
    %457 = arith.negf %456 : vector<16x128xf32>
    %458 = math.exp %457 : vector<16x128xf32>
    %cst_105 = arith.constant 1.000000e+00 : f32
    %459 = vector.broadcast %cst_105 : f32 to vector<16x128xf32>
    %460 = arith.addf %459, %458 : vector<16x128xf32>
    %461 = arith.divf %459, %460 : vector<16x128xf32>
    %462 = arith.mulf %453, %414 : vector<16x128xf32>
    %463 = arith.mulf %447, %455 : vector<16x128xf32>
    %464 = arith.addf %462, %463 : vector<16x128xf32>
    %465 = math.tanh %464 : vector<16x128xf32>
    %466 = arith.mulf %461, %465 : vector<16x128xf32>
    %467 = arith.addf %417, %466 : vector<16x128xf32>
    %468 = arith.mulf %466, %466 : vector<16x128xf32>
    %469 = arith.addf %419, %468 : vector<16x128xf32>
    %470 = arith.maximumf %420, %466 : vector<16x128xf32>
    %471 = arith.minimumf %421, %466 : vector<16x128xf32>
    %c9_i32 = arith.constant 9 : i32
    %c8_i32_106 = arith.constant 8 : i32
    %472 = arith.muli %c9_i32, %c8_i32_106 : i32
    %473 = tpu.assume_multiple %472, 8 : i32
    %c15_i32_107 = arith.constant 15 : i32
    %474 = arith.subi %c15_i32_107, %c9_i32 : i32
    %c8_i32_108 = arith.constant 8 : i32
    %475 = arith.muli %474, %c8_i32_108 : i32
    %476 = tpu.assume_multiple %475, 8 : i32
    %477 = arith.index_cast %473 : i32 to index
    %c0_109 = arith.constant 0 : index
    %478 = vector.load %arg17[%477, %c0_109] : memref<128x512xf32, #tpu.memory_space<vmem>>, vector<8x512xf32>
    %479 = arith.index_cast %476 : i32 to index
    %c0_110 = arith.constant 0 : index
    %480 = vector.load %arg18[%479, %c0_110] : memref<128x512xf32, #tpu.memory_space<vmem>>, vector<8x512xf32>
    %481 = tpu.concatenate %478, %480 in 0 : vector<8x512xf32>, vector<8x512xf32> -> vector<16x512xf32>
    %482 = vector.broadcast %18 : vector<16x1xf32> to vector<16x128xf32>
    %483 = arith.mulf %466, %482 : vector<16x128xf32>
    %cst_111 = arith.constant 1.000000e+00 : f32
    %484 = vector.broadcast %cst_111 : f32 to vector<16x1xf32>
    %485 = arith.subf %484, %18 : vector<16x1xf32>
    %486 = vector.broadcast %485 : vector<16x1xf32> to vector<16x128xf32>
    %487 = arith.mulf %466, %486 : vector<16x128xf32>
    %488 = tpu.concatenate %483, %487 in 1 : vector<16x128xf32>, vector<16x128xf32> -> vector<16x256xf32>
    %489 = arith.truncf %488 : vector<16x256xf32> to vector<16x256xbf16>
    %cst_112 = arith.constant dense<0.000000e+00> : vector<16x512xf32>
    %490 = tpu.matmul %489, %13, %cst_112 {dimension_numbers = #tpu.dot_dimension_numbers<[1], [0], [0], [1], [0, 0, 1, 1], [], []>} : vector<16x256xbf16>, vector<256x512xbf16>, vector<16x512xf32> -> vector<16x512xf32>
    %491 = arith.addf %481, %490 : vector<16x512xf32>
    %492 = vector.extract_strided_slice %491 {offsets = [0, 0], sizes = [16, 128], strides = [1, 1]} : vector<16x512xf32> to vector<16x128xf32>
    %493 = arith.negf %492 : vector<16x128xf32>
    %494 = math.exp %493 : vector<16x128xf32>
    %cst_113 = arith.constant 1.000000e+00 : f32
    %495 = vector.broadcast %cst_113 : f32 to vector<16x128xf32>
    %496 = arith.addf %495, %494 : vector<16x128xf32>
    %497 = arith.divf %495, %496 : vector<16x128xf32>
    %498 = vector.extract_strided_slice %491 {offsets = [0, 128], sizes = [16, 128], strides = [1, 1]} : vector<16x512xf32> to vector<16x128xf32>
    %499 = arith.negf %498 : vector<16x128xf32>
    %500 = math.exp %499 : vector<16x128xf32>
    %cst_114 = arith.constant 1.000000e+00 : f32
    %501 = vector.broadcast %cst_114 : f32 to vector<16x128xf32>
    %502 = arith.addf %501, %500 : vector<16x128xf32>
    %503 = arith.divf %501, %502 : vector<16x128xf32>
    %504 = vector.extract_strided_slice %491 {offsets = [0, 256], sizes = [16, 128], strides = [1, 1]} : vector<16x512xf32> to vector<16x128xf32>
    %505 = math.tanh %504 : vector<16x128xf32>
    %506 = vector.extract_strided_slice %491 {offsets = [0, 384], sizes = [16, 128], strides = [1, 1]} : vector<16x512xf32> to vector<16x128xf32>
    %507 = arith.negf %506 : vector<16x128xf32>
    %508 = math.exp %507 : vector<16x128xf32>
    %cst_115 = arith.constant 1.000000e+00 : f32
    %509 = vector.broadcast %cst_115 : f32 to vector<16x128xf32>
    %510 = arith.addf %509, %508 : vector<16x128xf32>
    %511 = arith.divf %509, %510 : vector<16x128xf32>
    %512 = arith.mulf %503, %464 : vector<16x128xf32>
    %513 = arith.mulf %497, %505 : vector<16x128xf32>
    %514 = arith.addf %512, %513 : vector<16x128xf32>
    %515 = math.tanh %514 : vector<16x128xf32>
    %516 = arith.mulf %511, %515 : vector<16x128xf32>
    %517 = arith.addf %467, %516 : vector<16x128xf32>
    %518 = arith.mulf %516, %516 : vector<16x128xf32>
    %519 = arith.addf %469, %518 : vector<16x128xf32>
    %520 = arith.maximumf %470, %516 : vector<16x128xf32>
    %521 = arith.minimumf %471, %516 : vector<16x128xf32>
    %c10_i32 = arith.constant 10 : i32
    %c8_i32_116 = arith.constant 8 : i32
    %522 = arith.muli %c10_i32, %c8_i32_116 : i32
    %523 = tpu.assume_multiple %522, 8 : i32
    %c15_i32_117 = arith.constant 15 : i32
    %524 = arith.subi %c15_i32_117, %c10_i32 : i32
    %c8_i32_118 = arith.constant 8 : i32
    %525 = arith.muli %524, %c8_i32_118 : i32
    %526 = tpu.assume_multiple %525, 8 : i32
    %527 = arith.index_cast %523 : i32 to index
    %c0_119 = arith.constant 0 : index
    %528 = vector.load %arg17[%527, %c0_119] : memref<128x512xf32, #tpu.memory_space<vmem>>, vector<8x512xf32>
    %529 = arith.index_cast %526 : i32 to index
    %c0_120 = arith.constant 0 : index
    %530 = vector.load %arg18[%529, %c0_120] : memref<128x512xf32, #tpu.memory_space<vmem>>, vector<8x512xf32>
    %531 = tpu.concatenate %528, %530 in 0 : vector<8x512xf32>, vector<8x512xf32> -> vector<16x512xf32>
    %532 = vector.broadcast %18 : vector<16x1xf32> to vector<16x128xf32>
    %533 = arith.mulf %516, %532 : vector<16x128xf32>
    %cst_121 = arith.constant 1.000000e+00 : f32
    %534 = vector.broadcast %cst_121 : f32 to vector<16x1xf32>
    %535 = arith.subf %534, %18 : vector<16x1xf32>
    %536 = vector.broadcast %535 : vector<16x1xf32> to vector<16x128xf32>
    %537 = arith.mulf %516, %536 : vector<16x128xf32>
    %538 = tpu.concatenate %533, %537 in 1 : vector<16x128xf32>, vector<16x128xf32> -> vector<16x256xf32>
    %539 = arith.truncf %538 : vector<16x256xf32> to vector<16x256xbf16>
    %cst_122 = arith.constant dense<0.000000e+00> : vector<16x512xf32>
    %540 = tpu.matmul %539, %13, %cst_122 {dimension_numbers = #tpu.dot_dimension_numbers<[1], [0], [0], [1], [0, 0, 1, 1], [], []>} : vector<16x256xbf16>, vector<256x512xbf16>, vector<16x512xf32> -> vector<16x512xf32>
    %541 = arith.addf %531, %540 : vector<16x512xf32>
    %542 = vector.extract_strided_slice %541 {offsets = [0, 0], sizes = [16, 128], strides = [1, 1]} : vector<16x512xf32> to vector<16x128xf32>
    %543 = arith.negf %542 : vector<16x128xf32>
    %544 = math.exp %543 : vector<16x128xf32>
    %cst_123 = arith.constant 1.000000e+00 : f32
    %545 = vector.broadcast %cst_123 : f32 to vector<16x128xf32>
    %546 = arith.addf %545, %544 : vector<16x128xf32>
    %547 = arith.divf %545, %546 : vector<16x128xf32>
    %548 = vector.extract_strided_slice %541 {offsets = [0, 128], sizes = [16, 128], strides = [1, 1]} : vector<16x512xf32> to vector<16x128xf32>
    %549 = arith.negf %548 : vector<16x128xf32>
    %550 = math.exp %549 : vector<16x128xf32>
    %cst_124 = arith.constant 1.000000e+00 : f32
    %551 = vector.broadcast %cst_124 : f32 to vector<16x128xf32>
    %552 = arith.addf %551, %550 : vector<16x128xf32>
    %553 = arith.divf %551, %552 : vector<16x128xf32>
    %554 = vector.extract_strided_slice %541 {offsets = [0, 256], sizes = [16, 128], strides = [1, 1]} : vector<16x512xf32> to vector<16x128xf32>
    %555 = math.tanh %554 : vector<16x128xf32>
    %556 = vector.extract_strided_slice %541 {offsets = [0, 384], sizes = [16, 128], strides = [1, 1]} : vector<16x512xf32> to vector<16x128xf32>
    %557 = arith.negf %556 : vector<16x128xf32>
    %558 = math.exp %557 : vector<16x128xf32>
    %cst_125 = arith.constant 1.000000e+00 : f32
    %559 = vector.broadcast %cst_125 : f32 to vector<16x128xf32>
    %560 = arith.addf %559, %558 : vector<16x128xf32>
    %561 = arith.divf %559, %560 : vector<16x128xf32>
    %562 = arith.mulf %553, %514 : vector<16x128xf32>
    %563 = arith.mulf %547, %555 : vector<16x128xf32>
    %564 = arith.addf %562, %563 : vector<16x128xf32>
    %565 = math.tanh %564 : vector<16x128xf32>
    %566 = arith.mulf %561, %565 : vector<16x128xf32>
    %567 = arith.addf %517, %566 : vector<16x128xf32>
    %568 = arith.mulf %566, %566 : vector<16x128xf32>
    %569 = arith.addf %519, %568 : vector<16x128xf32>
    %570 = arith.maximumf %520, %566 : vector<16x128xf32>
    %571 = arith.minimumf %521, %566 : vector<16x128xf32>
    %c11_i32 = arith.constant 11 : i32
    %c8_i32_126 = arith.constant 8 : i32
    %572 = arith.muli %c11_i32, %c8_i32_126 : i32
    %573 = tpu.assume_multiple %572, 8 : i32
    %c15_i32_127 = arith.constant 15 : i32
    %574 = arith.subi %c15_i32_127, %c11_i32 : i32
    %c8_i32_128 = arith.constant 8 : i32
    %575 = arith.muli %574, %c8_i32_128 : i32
    %576 = tpu.assume_multiple %575, 8 : i32
    %577 = arith.index_cast %573 : i32 to index
    %c0_129 = arith.constant 0 : index
    %578 = vector.load %arg17[%577, %c0_129] : memref<128x512xf32, #tpu.memory_space<vmem>>, vector<8x512xf32>
    %579 = arith.index_cast %576 : i32 to index
    %c0_130 = arith.constant 0 : index
    %580 = vector.load %arg18[%579, %c0_130] : memref<128x512xf32, #tpu.memory_space<vmem>>, vector<8x512xf32>
    %581 = tpu.concatenate %578, %580 in 0 : vector<8x512xf32>, vector<8x512xf32> -> vector<16x512xf32>
    %582 = vector.broadcast %18 : vector<16x1xf32> to vector<16x128xf32>
    %583 = arith.mulf %566, %582 : vector<16x128xf32>
    %cst_131 = arith.constant 1.000000e+00 : f32
    %584 = vector.broadcast %cst_131 : f32 to vector<16x1xf32>
    %585 = arith.subf %584, %18 : vector<16x1xf32>
    %586 = vector.broadcast %585 : vector<16x1xf32> to vector<16x128xf32>
    %587 = arith.mulf %566, %586 : vector<16x128xf32>
    %588 = tpu.concatenate %583, %587 in 1 : vector<16x128xf32>, vector<16x128xf32> -> vector<16x256xf32>
    %589 = arith.truncf %588 : vector<16x256xf32> to vector<16x256xbf16>
    %cst_132 = arith.constant dense<0.000000e+00> : vector<16x512xf32>
    %590 = tpu.matmul %589, %13, %cst_132 {dimension_numbers = #tpu.dot_dimension_numbers<[1], [0], [0], [1], [0, 0, 1, 1], [], []>} : vector<16x256xbf16>, vector<256x512xbf16>, vector<16x512xf32> -> vector<16x512xf32>
    %591 = arith.addf %581, %590 : vector<16x512xf32>
    %592 = vector.extract_strided_slice %591 {offsets = [0, 0], sizes = [16, 128], strides = [1, 1]} : vector<16x512xf32> to vector<16x128xf32>
    %593 = arith.negf %592 : vector<16x128xf32>
    %594 = math.exp %593 : vector<16x128xf32>
    %cst_133 = arith.constant 1.000000e+00 : f32
    %595 = vector.broadcast %cst_133 : f32 to vector<16x128xf32>
    %596 = arith.addf %595, %594 : vector<16x128xf32>
    %597 = arith.divf %595, %596 : vector<16x128xf32>
    %598 = vector.extract_strided_slice %591 {offsets = [0, 128], sizes = [16, 128], strides = [1, 1]} : vector<16x512xf32> to vector<16x128xf32>
    %599 = arith.negf %598 : vector<16x128xf32>
    %600 = math.exp %599 : vector<16x128xf32>
    %cst_134 = arith.constant 1.000000e+00 : f32
    %601 = vector.broadcast %cst_134 : f32 to vector<16x128xf32>
    %602 = arith.addf %601, %600 : vector<16x128xf32>
    %603 = arith.divf %601, %602 : vector<16x128xf32>
    %604 = vector.extract_strided_slice %591 {offsets = [0, 256], sizes = [16, 128], strides = [1, 1]} : vector<16x512xf32> to vector<16x128xf32>
    %605 = math.tanh %604 : vector<16x128xf32>
    %606 = vector.extract_strided_slice %591 {offsets = [0, 384], sizes = [16, 128], strides = [1, 1]} : vector<16x512xf32> to vector<16x128xf32>
    %607 = arith.negf %606 : vector<16x128xf32>
    %608 = math.exp %607 : vector<16x128xf32>
    %cst_135 = arith.constant 1.000000e+00 : f32
    %609 = vector.broadcast %cst_135 : f32 to vector<16x128xf32>
    %610 = arith.addf %609, %608 : vector<16x128xf32>
    %611 = arith.divf %609, %610 : vector<16x128xf32>
    %612 = arith.mulf %603, %564 : vector<16x128xf32>
    %613 = arith.mulf %597, %605 : vector<16x128xf32>
    %614 = arith.addf %612, %613 : vector<16x128xf32>
    %615 = math.tanh %614 : vector<16x128xf32>
    %616 = arith.mulf %611, %615 : vector<16x128xf32>
    %617 = arith.addf %567, %616 : vector<16x128xf32>
    %618 = arith.mulf %616, %616 : vector<16x128xf32>
    %619 = arith.addf %569, %618 : vector<16x128xf32>
    %620 = arith.maximumf %570, %616 : vector<16x128xf32>
    %621 = arith.minimumf %571, %616 : vector<16x128xf32>
    %c12_i32 = arith.constant 12 : i32
    %c8_i32_136 = arith.constant 8 : i32
    %622 = arith.muli %c12_i32, %c8_i32_136 : i32
    %623 = tpu.assume_multiple %622, 8 : i32
    %c15_i32_137 = arith.constant 15 : i32
    %624 = arith.subi %c15_i32_137, %c12_i32 : i32
    %c8_i32_138 = arith.constant 8 : i32
    %625 = arith.muli %624, %c8_i32_138 : i32
    %626 = tpu.assume_multiple %625, 8 : i32
    %627 = arith.index_cast %623 : i32 to index
    %c0_139 = arith.constant 0 : index
    %628 = vector.load %arg17[%627, %c0_139] : memref<128x512xf32, #tpu.memory_space<vmem>>, vector<8x512xf32>
    %629 = arith.index_cast %626 : i32 to index
    %c0_140 = arith.constant 0 : index
    %630 = vector.load %arg18[%629, %c0_140] : memref<128x512xf32, #tpu.memory_space<vmem>>, vector<8x512xf32>
    %631 = tpu.concatenate %628, %630 in 0 : vector<8x512xf32>, vector<8x512xf32> -> vector<16x512xf32>
    %632 = vector.broadcast %18 : vector<16x1xf32> to vector<16x128xf32>
    %633 = arith.mulf %616, %632 : vector<16x128xf32>
    %cst_141 = arith.constant 1.000000e+00 : f32
    %634 = vector.broadcast %cst_141 : f32 to vector<16x1xf32>
    %635 = arith.subf %634, %18 : vector<16x1xf32>
    %636 = vector.broadcast %635 : vector<16x1xf32> to vector<16x128xf32>
    %637 = arith.mulf %616, %636 : vector<16x128xf32>
    %638 = tpu.concatenate %633, %637 in 1 : vector<16x128xf32>, vector<16x128xf32> -> vector<16x256xf32>
    %639 = arith.truncf %638 : vector<16x256xf32> to vector<16x256xbf16>
    %cst_142 = arith.constant dense<0.000000e+00> : vector<16x512xf32>
    %640 = tpu.matmul %639, %13, %cst_142 {dimension_numbers = #tpu.dot_dimension_numbers<[1], [0], [0], [1], [0, 0, 1, 1], [], []>} : vector<16x256xbf16>, vector<256x512xbf16>, vector<16x512xf32> -> vector<16x512xf32>
    %641 = arith.addf %631, %640 : vector<16x512xf32>
    %642 = vector.extract_strided_slice %641 {offsets = [0, 0], sizes = [16, 128], strides = [1, 1]} : vector<16x512xf32> to vector<16x128xf32>
    %643 = arith.negf %642 : vector<16x128xf32>
    %644 = math.exp %643 : vector<16x128xf32>
    %cst_143 = arith.constant 1.000000e+00 : f32
    %645 = vector.broadcast %cst_143 : f32 to vector<16x128xf32>
    %646 = arith.addf %645, %644 : vector<16x128xf32>
    %647 = arith.divf %645, %646 : vector<16x128xf32>
    %648 = vector.extract_strided_slice %641 {offsets = [0, 128], sizes = [16, 128], strides = [1, 1]} : vector<16x512xf32> to vector<16x128xf32>
    %649 = arith.negf %648 : vector<16x128xf32>
    %650 = math.exp %649 : vector<16x128xf32>
    %cst_144 = arith.constant 1.000000e+00 : f32
    %651 = vector.broadcast %cst_144 : f32 to vector<16x128xf32>
    %652 = arith.addf %651, %650 : vector<16x128xf32>
    %653 = arith.divf %651, %652 : vector<16x128xf32>
    %654 = vector.extract_strided_slice %641 {offsets = [0, 256], sizes = [16, 128], strides = [1, 1]} : vector<16x512xf32> to vector<16x128xf32>
    %655 = math.tanh %654 : vector<16x128xf32>
    %656 = vector.extract_strided_slice %641 {offsets = [0, 384], sizes = [16, 128], strides = [1, 1]} : vector<16x512xf32> to vector<16x128xf32>
    %657 = arith.negf %656 : vector<16x128xf32>
    %658 = math.exp %657 : vector<16x128xf32>
    %cst_145 = arith.constant 1.000000e+00 : f32
    %659 = vector.broadcast %cst_145 : f32 to vector<16x128xf32>
    %660 = arith.addf %659, %658 : vector<16x128xf32>
    %661 = arith.divf %659, %660 : vector<16x128xf32>
    %662 = arith.mulf %653, %614 : vector<16x128xf32>
    %663 = arith.mulf %647, %655 : vector<16x128xf32>
    %664 = arith.addf %662, %663 : vector<16x128xf32>
    %665 = math.tanh %664 : vector<16x128xf32>
    %666 = arith.mulf %661, %665 : vector<16x128xf32>
    %667 = arith.addf %617, %666 : vector<16x128xf32>
    %668 = arith.mulf %666, %666 : vector<16x128xf32>
    %669 = arith.addf %619, %668 : vector<16x128xf32>
    %670 = arith.maximumf %620, %666 : vector<16x128xf32>
    %671 = arith.minimumf %621, %666 : vector<16x128xf32>
    %c13_i32 = arith.constant 13 : i32
    %c8_i32_146 = arith.constant 8 : i32
    %672 = arith.muli %c13_i32, %c8_i32_146 : i32
    %673 = tpu.assume_multiple %672, 8 : i32
    %c15_i32_147 = arith.constant 15 : i32
    %674 = arith.subi %c15_i32_147, %c13_i32 : i32
    %c8_i32_148 = arith.constant 8 : i32
    %675 = arith.muli %674, %c8_i32_148 : i32
    %676 = tpu.assume_multiple %675, 8 : i32
    %677 = arith.index_cast %673 : i32 to index
    %c0_149 = arith.constant 0 : index
    %678 = vector.load %arg17[%677, %c0_149] : memref<128x512xf32, #tpu.memory_space<vmem>>, vector<8x512xf32>
    %679 = arith.index_cast %676 : i32 to index
    %c0_150 = arith.constant 0 : index
    %680 = vector.load %arg18[%679, %c0_150] : memref<128x512xf32, #tpu.memory_space<vmem>>, vector<8x512xf32>
    %681 = tpu.concatenate %678, %680 in 0 : vector<8x512xf32>, vector<8x512xf32> -> vector<16x512xf32>
    %682 = vector.broadcast %18 : vector<16x1xf32> to vector<16x128xf32>
    %683 = arith.mulf %666, %682 : vector<16x128xf32>
    %cst_151 = arith.constant 1.000000e+00 : f32
    %684 = vector.broadcast %cst_151 : f32 to vector<16x1xf32>
    %685 = arith.subf %684, %18 : vector<16x1xf32>
    %686 = vector.broadcast %685 : vector<16x1xf32> to vector<16x128xf32>
    %687 = arith.mulf %666, %686 : vector<16x128xf32>
    %688 = tpu.concatenate %683, %687 in 1 : vector<16x128xf32>, vector<16x128xf32> -> vector<16x256xf32>
    %689 = arith.truncf %688 : vector<16x256xf32> to vector<16x256xbf16>
    %cst_152 = arith.constant dense<0.000000e+00> : vector<16x512xf32>
    %690 = tpu.matmul %689, %13, %cst_152 {dimension_numbers = #tpu.dot_dimension_numbers<[1], [0], [0], [1], [0, 0, 1, 1], [], []>} : vector<16x256xbf16>, vector<256x512xbf16>, vector<16x512xf32> -> vector<16x512xf32>
    %691 = arith.addf %681, %690 : vector<16x512xf32>
    %692 = vector.extract_strided_slice %691 {offsets = [0, 0], sizes = [16, 128], strides = [1, 1]} : vector<16x512xf32> to vector<16x128xf32>
    %693 = arith.negf %692 : vector<16x128xf32>
    %694 = math.exp %693 : vector<16x128xf32>
    %cst_153 = arith.constant 1.000000e+00 : f32
    %695 = vector.broadcast %cst_153 : f32 to vector<16x128xf32>
    %696 = arith.addf %695, %694 : vector<16x128xf32>
    %697 = arith.divf %695, %696 : vector<16x128xf32>
    %698 = vector.extract_strided_slice %691 {offsets = [0, 128], sizes = [16, 128], strides = [1, 1]} : vector<16x512xf32> to vector<16x128xf32>
    %699 = arith.negf %698 : vector<16x128xf32>
    %700 = math.exp %699 : vector<16x128xf32>
    %cst_154 = arith.constant 1.000000e+00 : f32
    %701 = vector.broadcast %cst_154 : f32 to vector<16x128xf32>
    %702 = arith.addf %701, %700 : vector<16x128xf32>
    %703 = arith.divf %701, %702 : vector<16x128xf32>
    %704 = vector.extract_strided_slice %691 {offsets = [0, 256], sizes = [16, 128], strides = [1, 1]} : vector<16x512xf32> to vector<16x128xf32>
    %705 = math.tanh %704 : vector<16x128xf32>
    %706 = vector.extract_strided_slice %691 {offsets = [0, 384], sizes = [16, 128], strides = [1, 1]} : vector<16x512xf32> to vector<16x128xf32>
    %707 = arith.negf %706 : vector<16x128xf32>
    %708 = math.exp %707 : vector<16x128xf32>
    %cst_155 = arith.constant 1.000000e+00 : f32
    %709 = vector.broadcast %cst_155 : f32 to vector<16x128xf32>
    %710 = arith.addf %709, %708 : vector<16x128xf32>
    %711 = arith.divf %709, %710 : vector<16x128xf32>
    %712 = arith.mulf %703, %664 : vector<16x128xf32>
    %713 = arith.mulf %697, %705 : vector<16x128xf32>
    %714 = arith.addf %712, %713 : vector<16x128xf32>
    %715 = math.tanh %714 : vector<16x128xf32>
    %716 = arith.mulf %711, %715 : vector<16x128xf32>
    %717 = arith.addf %667, %716 : vector<16x128xf32>
    %718 = arith.mulf %716, %716 : vector<16x128xf32>
    %719 = arith.addf %669, %718 : vector<16x128xf32>
    %720 = arith.maximumf %670, %716 : vector<16x128xf32>
    %721 = arith.minimumf %671, %716 : vector<16x128xf32>
    %c14_i32 = arith.constant 14 : i32
    %c8_i32_156 = arith.constant 8 : i32
    %722 = arith.muli %c14_i32, %c8_i32_156 : i32
    %723 = tpu.assume_multiple %722, 8 : i32
    %c15_i32_157 = arith.constant 15 : i32
    %724 = arith.subi %c15_i32_157, %c14_i32 : i32
    %c8_i32_158 = arith.constant 8 : i32
    %725 = arith.muli %724, %c8_i32_158 : i32
    %726 = tpu.assume_multiple %725, 8 : i32
    %727 = arith.index_cast %723 : i32 to index
    %c0_159 = arith.constant 0 : index
    %728 = vector.load %arg17[%727, %c0_159] : memref<128x512xf32, #tpu.memory_space<vmem>>, vector<8x512xf32>
    %729 = arith.index_cast %726 : i32 to index
    %c0_160 = arith.constant 0 : index
    %730 = vector.load %arg18[%729, %c0_160] : memref<128x512xf32, #tpu.memory_space<vmem>>, vector<8x512xf32>
    %731 = tpu.concatenate %728, %730 in 0 : vector<8x512xf32>, vector<8x512xf32> -> vector<16x512xf32>
    %732 = vector.broadcast %18 : vector<16x1xf32> to vector<16x128xf32>
    %733 = arith.mulf %716, %732 : vector<16x128xf32>
    %cst_161 = arith.constant 1.000000e+00 : f32
    %734 = vector.broadcast %cst_161 : f32 to vector<16x1xf32>
    %735 = arith.subf %734, %18 : vector<16x1xf32>
    %736 = vector.broadcast %735 : vector<16x1xf32> to vector<16x128xf32>
    %737 = arith.mulf %716, %736 : vector<16x128xf32>
    %738 = tpu.concatenate %733, %737 in 1 : vector<16x128xf32>, vector<16x128xf32> -> vector<16x256xf32>
    %739 = arith.truncf %738 : vector<16x256xf32> to vector<16x256xbf16>
    %cst_162 = arith.constant dense<0.000000e+00> : vector<16x512xf32>
    %740 = tpu.matmul %739, %13, %cst_162 {dimension_numbers = #tpu.dot_dimension_numbers<[1], [0], [0], [1], [0, 0, 1, 1], [], []>} : vector<16x256xbf16>, vector<256x512xbf16>, vector<16x512xf32> -> vector<16x512xf32>
    %741 = arith.addf %731, %740 : vector<16x512xf32>
    %742 = vector.extract_strided_slice %741 {offsets = [0, 0], sizes = [16, 128], strides = [1, 1]} : vector<16x512xf32> to vector<16x128xf32>
    %743 = arith.negf %742 : vector<16x128xf32>
    %744 = math.exp %743 : vector<16x128xf32>
    %cst_163 = arith.constant 1.000000e+00 : f32
    %745 = vector.broadcast %cst_163 : f32 to vector<16x128xf32>
    %746 = arith.addf %745, %744 : vector<16x128xf32>
    %747 = arith.divf %745, %746 : vector<16x128xf32>
    %748 = vector.extract_strided_slice %741 {offsets = [0, 128], sizes = [16, 128], strides = [1, 1]} : vector<16x512xf32> to vector<16x128xf32>
    %749 = arith.negf %748 : vector<16x128xf32>
    %750 = math.exp %749 : vector<16x128xf32>
    %cst_164 = arith.constant 1.000000e+00 : f32
    %751 = vector.broadcast %cst_164 : f32 to vector<16x128xf32>
    %752 = arith.addf %751, %750 : vector<16x128xf32>
    %753 = arith.divf %751, %752 : vector<16x128xf32>
    %754 = vector.extract_strided_slice %741 {offsets = [0, 256], sizes = [16, 128], strides = [1, 1]} : vector<16x512xf32> to vector<16x128xf32>
    %755 = math.tanh %754 : vector<16x128xf32>
    %756 = vector.extract_strided_slice %741 {offsets = [0, 384], sizes = [16, 128], strides = [1, 1]} : vector<16x512xf32> to vector<16x128xf32>
    %757 = arith.negf %756 : vector<16x128xf32>
    %758 = math.exp %757 : vector<16x128xf32>
    %cst_165 = arith.constant 1.000000e+00 : f32
    %759 = vector.broadcast %cst_165 : f32 to vector<16x128xf32>
    %760 = arith.addf %759, %758 : vector<16x128xf32>
    %761 = arith.divf %759, %760 : vector<16x128xf32>
    %762 = arith.mulf %753, %714 : vector<16x128xf32>
    %763 = arith.mulf %747, %755 : vector<16x128xf32>
    %764 = arith.addf %762, %763 : vector<16x128xf32>
    %765 = math.tanh %764 : vector<16x128xf32>
    %766 = arith.mulf %761, %765 : vector<16x128xf32>
    %767 = arith.addf %717, %766 : vector<16x128xf32>
    %768 = arith.mulf %766, %766 : vector<16x128xf32>
    %769 = arith.addf %719, %768 : vector<16x128xf32>
    %770 = arith.maximumf %720, %766 : vector<16x128xf32>
    %771 = arith.minimumf %721, %766 : vector<16x128xf32>
    %c15_i32_166 = arith.constant 15 : i32
    %c8_i32_167 = arith.constant 8 : i32
    %772 = arith.muli %c15_i32_166, %c8_i32_167 : i32
    %773 = tpu.assume_multiple %772, 8 : i32
    %c15_i32_168 = arith.constant 15 : i32
    %774 = arith.subi %c15_i32_168, %c15_i32_166 : i32
    %c8_i32_169 = arith.constant 8 : i32
    %775 = arith.muli %774, %c8_i32_169 : i32
    %776 = tpu.assume_multiple %775, 8 : i32
    %777 = arith.index_cast %773 : i32 to index
    %c0_170 = arith.constant 0 : index
    %778 = vector.load %arg17[%777, %c0_170] : memref<128x512xf32, #tpu.memory_space<vmem>>, vector<8x512xf32>
    %779 = arith.index_cast %776 : i32 to index
    %c0_171 = arith.constant 0 : index
    %780 = vector.load %arg18[%779, %c0_171] : memref<128x512xf32, #tpu.memory_space<vmem>>, vector<8x512xf32>
    %781 = tpu.concatenate %778, %780 in 0 : vector<8x512xf32>, vector<8x512xf32> -> vector<16x512xf32>
    %782 = vector.broadcast %18 : vector<16x1xf32> to vector<16x128xf32>
    %783 = arith.mulf %766, %782 : vector<16x128xf32>
    %cst_172 = arith.constant 1.000000e+00 : f32
    %784 = vector.broadcast %cst_172 : f32 to vector<16x1xf32>
    %785 = arith.subf %784, %18 : vector<16x1xf32>
    %786 = vector.broadcast %785 : vector<16x1xf32> to vector<16x128xf32>
    %787 = arith.mulf %766, %786 : vector<16x128xf32>
    %788 = tpu.concatenate %783, %787 in 1 : vector<16x128xf32>, vector<16x128xf32> -> vector<16x256xf32>
    %789 = arith.truncf %788 : vector<16x256xf32> to vector<16x256xbf16>
    %cst_173 = arith.constant dense<0.000000e+00> : vector<16x512xf32>
    %790 = tpu.matmul %789, %13, %cst_173 {dimension_numbers = #tpu.dot_dimension_numbers<[1], [0], [0], [1], [0, 0, 1, 1], [], []>} : vector<16x256xbf16>, vector<256x512xbf16>, vector<16x512xf32> -> vector<16x512xf32>
    %791 = arith.addf %781, %790 : vector<16x512xf32>
    %792 = vector.extract_strided_slice %791 {offsets = [0, 0], sizes = [16, 128], strides = [1, 1]} : vector<16x512xf32> to vector<16x128xf32>
    %793 = arith.negf %792 : vector<16x128xf32>
    %794 = math.exp %793 : vector<16x128xf32>
    %cst_174 = arith.constant 1.000000e+00 : f32
    %795 = vector.broadcast %cst_174 : f32 to vector<16x128xf32>
    %796 = arith.addf %795, %794 : vector<16x128xf32>
    %797 = arith.divf %795, %796 : vector<16x128xf32>
    %798 = vector.extract_strided_slice %791 {offsets = [0, 128], sizes = [16, 128], strides = [1, 1]} : vector<16x512xf32> to vector<16x128xf32>
    %799 = arith.negf %798 : vector<16x128xf32>
    %800 = math.exp %799 : vector<16x128xf32>
    %cst_175 = arith.constant 1.000000e+00 : f32
    %801 = vector.broadcast %cst_175 : f32 to vector<16x128xf32>
    %802 = arith.addf %801, %800 : vector<16x128xf32>
    %803 = arith.divf %801, %802 : vector<16x128xf32>
    %804 = vector.extract_strided_slice %791 {offsets = [0, 256], sizes = [16, 128], strides = [1, 1]} : vector<16x512xf32> to vector<16x128xf32>
    %805 = math.tanh %804 : vector<16x128xf32>
    %806 = vector.extract_strided_slice %791 {offsets = [0, 384], sizes = [16, 128], strides = [1, 1]} : vector<16x512xf32> to vector<16x128xf32>
    %807 = arith.negf %806 : vector<16x128xf32>
    %808 = math.exp %807 : vector<16x128xf32>
    %cst_176 = arith.constant 1.000000e+00 : f32
    %809 = vector.broadcast %cst_176 : f32 to vector<16x128xf32>
    %810 = arith.addf %809, %808 : vector<16x128xf32>
    %811 = arith.divf %809, %810 : vector<16x128xf32>
    %812 = arith.mulf %803, %764 : vector<16x128xf32>
    %813 = arith.mulf %797, %805 : vector<16x128xf32>
    %814 = arith.addf %812, %813 : vector<16x128xf32>
    %815 = math.tanh %814 : vector<16x128xf32>
    %816 = arith.mulf %811, %815 : vector<16x128xf32>
    %817 = arith.addf %767, %816 : vector<16x128xf32>
    %818 = arith.mulf %816, %816 : vector<16x128xf32>
    %819 = arith.addf %769, %818 : vector<16x128xf32>
    %820 = arith.maximumf %770, %816 : vector<16x128xf32>
    %821 = arith.minimumf %771, %816 : vector<16x128xf32>
    %c16_i32 = arith.constant 16 : i32
    %822 = vector.extract_strided_slice %817 {offsets = [0, 0], sizes = [8, 128], strides = [1, 1]} : vector<16x128xf32> to vector<8x128xf32>
    %823 = vector.extract_strided_slice %819 {offsets = [0, 0], sizes = [8, 128], strides = [1, 1]} : vector<16x128xf32> to vector<8x128xf32>
    %824 = vector.extract_strided_slice %820 {offsets = [0, 0], sizes = [8, 128], strides = [1, 1]} : vector<16x128xf32> to vector<8x128xf32>
    %825 = vector.extract_strided_slice %821 {offsets = [0, 0], sizes = [8, 128], strides = [1, 1]} : vector<16x128xf32> to vector<8x128xf32>
    %c0_177 = arith.constant 0 : index
    %c0_178 = arith.constant 0 : index
    %826 = vector.load %arg5[%c0_177, %c0_178] : memref<1x128xf32, #tpu.memory_space<vmem>>, vector<1x128xf32>
    %c0_179 = arith.constant 0 : index
    %c0_180 = arith.constant 0 : index
    %827 = vector.load %arg6[%c0_179, %c0_180] : memref<1x128xf32, #tpu.memory_space<vmem>>, vector<1x128xf32>
    %cst_181 = arith.constant dense<0.000000e+00> : vector<128xf32>
    %828 = vector.multi_reduction <add>, %822, %cst_181 [0] : vector<8x128xf32> to vector<128xf32>
    %829 = vector.shape_cast %828 : vector<128xf32> to vector<1x128xf32>
    %cst_182 = arith.constant 1.280000e+02 : f32
    %830 = vector.broadcast %cst_182 : f32 to vector<1x128xf32>
    %831 = arith.divf %829, %830 : vector<1x128xf32>
    %cst_183 = arith.constant dense<0.000000e+00> : vector<128xf32>
    %832 = vector.multi_reduction <add>, %823, %cst_183 [0] : vector<8x128xf32> to vector<128xf32>
    %833 = vector.shape_cast %832 : vector<128xf32> to vector<1x128xf32>
    %cst_184 = arith.constant 1.280000e+02 : f32
    %834 = vector.broadcast %cst_184 : f32 to vector<1x128xf32>
    %835 = arith.divf %833, %834 : vector<1x128xf32>
    %836 = arith.mulf %831, %831 : vector<1x128xf32>
    %837 = arith.subf %835, %836 : vector<1x128xf32>
    %cst_185 = arith.constant 0.000000e+00 : f32
    %838 = vector.broadcast %cst_185 : f32 to vector<1x128xf32>
    %839 = arith.maximumf %837, %838 : vector<1x128xf32>
    %cst_186 = arith.constant 9.99999974E-6 : f32
    %840 = vector.broadcast %cst_186 : f32 to vector<1x128xf32>
    %841 = arith.addf %839, %840 : vector<1x128xf32>
    %842 = math.rsqrt %841 : vector<1x128xf32>
    %843 = arith.mulf %826, %842 : vector<1x128xf32>
    %844 = arith.mulf %831, %843 : vector<1x128xf32>
    %845 = arith.subf %827, %844 : vector<1x128xf32>
    %846 = vector.broadcast %843 : vector<1x128xf32> to vector<8x128xf32>
    %847 = arith.mulf %846, %824 : vector<8x128xf32>
    %848 = vector.broadcast %845 : vector<1x128xf32> to vector<8x128xf32>
    %849 = arith.addf %847, %848 : vector<8x128xf32>
    %850 = vector.broadcast %843 : vector<1x128xf32> to vector<8x128xf32>
    %851 = arith.mulf %850, %825 : vector<8x128xf32>
    %852 = vector.broadcast %845 : vector<1x128xf32> to vector<8x128xf32>
    %853 = arith.addf %851, %852 : vector<8x128xf32>
    %854 = arith.maximumf %849, %853 : vector<8x128xf32>
    %855 = vector.extract_strided_slice %817 {offsets = [8, 0], sizes = [8, 128], strides = [1, 1]} : vector<16x128xf32> to vector<8x128xf32>
    %856 = vector.extract_strided_slice %819 {offsets = [8, 0], sizes = [8, 128], strides = [1, 1]} : vector<16x128xf32> to vector<8x128xf32>
    %857 = vector.extract_strided_slice %820 {offsets = [8, 0], sizes = [8, 128], strides = [1, 1]} : vector<16x128xf32> to vector<8x128xf32>
    %858 = vector.extract_strided_slice %821 {offsets = [8, 0], sizes = [8, 128], strides = [1, 1]} : vector<16x128xf32> to vector<8x128xf32>
    %c0_187 = arith.constant 0 : index
    %c0_188 = arith.constant 0 : index
    %859 = vector.load %arg7[%c0_187, %c0_188] : memref<1x128xf32, #tpu.memory_space<vmem>>, vector<1x128xf32>
    %c0_189 = arith.constant 0 : index
    %c0_190 = arith.constant 0 : index
    %860 = vector.load %arg8[%c0_189, %c0_190] : memref<1x128xf32, #tpu.memory_space<vmem>>, vector<1x128xf32>
    %cst_191 = arith.constant dense<0.000000e+00> : vector<128xf32>
    %861 = vector.multi_reduction <add>, %855, %cst_191 [0] : vector<8x128xf32> to vector<128xf32>
    %862 = vector.shape_cast %861 : vector<128xf32> to vector<1x128xf32>
    %cst_192 = arith.constant 1.280000e+02 : f32
    %863 = vector.broadcast %cst_192 : f32 to vector<1x128xf32>
    %864 = arith.divf %862, %863 : vector<1x128xf32>
    %cst_193 = arith.constant dense<0.000000e+00> : vector<128xf32>
    %865 = vector.multi_reduction <add>, %856, %cst_193 [0] : vector<8x128xf32> to vector<128xf32>
    %866 = vector.shape_cast %865 : vector<128xf32> to vector<1x128xf32>
    %cst_194 = arith.constant 1.280000e+02 : f32
    %867 = vector.broadcast %cst_194 : f32 to vector<1x128xf32>
    %868 = arith.divf %866, %867 : vector<1x128xf32>
    %869 = arith.mulf %864, %864 : vector<1x128xf32>
    %870 = arith.subf %868, %869 : vector<1x128xf32>
    %cst_195 = arith.constant 0.000000e+00 : f32
    %871 = vector.broadcast %cst_195 : f32 to vector<1x128xf32>
    %872 = arith.maximumf %870, %871 : vector<1x128xf32>
    %cst_196 = arith.constant 9.99999974E-6 : f32
    %873 = vector.broadcast %cst_196 : f32 to vector<1x128xf32>
    %874 = arith.addf %872, %873 : vector<1x128xf32>
    %875 = math.rsqrt %874 : vector<1x128xf32>
    %876 = arith.mulf %859, %875 : vector<1x128xf32>
    %877 = arith.mulf %864, %876 : vector<1x128xf32>
    %878 = arith.subf %860, %877 : vector<1x128xf32>
    %879 = vector.broadcast %876 : vector<1x128xf32> to vector<8x128xf32>
    %880 = arith.mulf %879, %857 : vector<8x128xf32>
    %881 = vector.broadcast %878 : vector<1x128xf32> to vector<8x128xf32>
    %882 = arith.addf %880, %881 : vector<8x128xf32>
    %883 = vector.broadcast %876 : vector<1x128xf32> to vector<8x128xf32>
    %884 = arith.mulf %883, %858 : vector<8x128xf32>
    %885 = vector.broadcast %878 : vector<1x128xf32> to vector<8x128xf32>
    %886 = arith.addf %884, %885 : vector<8x128xf32>
    %887 = arith.maximumf %882, %886 : vector<8x128xf32>
    %c0_197 = arith.constant 0 : index
    %c0_198 = arith.constant 0 : index
    %888 = vector.load %arg9[%c0_197, %c0_198] : memref<128x64xf32, #tpu.memory_space<vmem>>, vector<128x64xf32>
    %cst_199 = arith.constant dense<0.000000e+00> : vector<8x64xf32>
    %889 = tpu.matmul %854, %888, %cst_199 {dimension_numbers = #tpu.dot_dimension_numbers<[1], [0], [0], [1], [0, 0, 1, 1], [], []>} : vector<8x128xf32>, vector<128x64xf32>, vector<8x64xf32> -> vector<8x64xf32>
    %c0_200 = arith.constant 0 : index
    %c0_201 = arith.constant 0 : index
    %890 = vector.load %arg10[%c0_200, %c0_201] : memref<128x64xf32, #tpu.memory_space<vmem>>, vector<128x64xf32>
    %cst_202 = arith.constant dense<0.000000e+00> : vector<8x64xf32>
    %891 = tpu.matmul %887, %890, %cst_202 {dimension_numbers = #tpu.dot_dimension_numbers<[1], [0], [0], [1], [0, 0, 1, 1], [], []>} : vector<8x128xf32>, vector<128x64xf32>, vector<8x64xf32> -> vector<8x64xf32>
    %892 = arith.addf %889, %891 : vector<8x64xf32>
    %c0_203 = arith.constant 0 : index
    %c0_204 = arith.constant 0 : index
    %893 = vector.load %arg11[%c0_203, %c0_204] : memref<1x64xf32, #tpu.memory_space<vmem>>, vector<1x64xf32>
    %894 = vector.broadcast %893 : vector<1x64xf32> to vector<8x64xf32>
    %895 = arith.addf %892, %894 : vector<8x64xf32>
    %cst_205 = arith.constant 0.000000e+00 : f32
    %896 = vector.broadcast %cst_205 : f32 to vector<8x64xf32>
    %897 = arith.maximumf %895, %896 : vector<8x64xf32>
    %cst_206 = arith.constant dense<0.000000e+00> : vector<64xf32>
    %898 = vector.multi_reduction <add>, %897, %cst_206 [0] : vector<8x64xf32> to vector<64xf32>
    %899 = vector.shape_cast %898 : vector<64xf32> to vector<1x64xf32>
    %cst_207 = arith.constant 8.000000e+00 : f32
    %900 = vector.broadcast %cst_207 : f32 to vector<1x64xf32>
    %901 = arith.divf %899, %900 : vector<1x64xf32>
    %902 = vector.broadcast %901 : vector<1x64xf32> to vector<8x64xf32>
    %903 = arith.subf %897, %902 : vector<8x64xf32>
    %904 = arith.mulf %903, %903 : vector<8x64xf32>
    %cst_208 = arith.constant dense<0.000000e+00> : vector<64xf32>
    %905 = vector.multi_reduction <add>, %904, %cst_208 [0] : vector<8x64xf32> to vector<64xf32>
    %906 = vector.shape_cast %905 : vector<64xf32> to vector<1x64xf32>
    %cst_209 = arith.constant 8.000000e+00 : f32
    %907 = vector.broadcast %cst_209 : f32 to vector<1x64xf32>
    %908 = arith.divf %906, %907 : vector<1x64xf32>
    %909 = vector.broadcast %901 : vector<1x64xf32> to vector<8x64xf32>
    %910 = arith.subf %897, %909 : vector<8x64xf32>
    %cst_210 = arith.constant 9.99999974E-6 : f32
    %911 = vector.broadcast %cst_210 : f32 to vector<1x64xf32>
    %912 = arith.addf %908, %911 : vector<1x64xf32>
    %913 = math.rsqrt %912 : vector<1x64xf32>
    %914 = vector.broadcast %913 : vector<1x64xf32> to vector<8x64xf32>
    %915 = arith.mulf %910, %914 : vector<8x64xf32>
    %c0_211 = arith.constant 0 : index
    %c0_212 = arith.constant 0 : index
    %916 = vector.load %arg12[%c0_211, %c0_212] : memref<1x64xf32, #tpu.memory_space<vmem>>, vector<1x64xf32>
    %917 = vector.broadcast %916 : vector<1x64xf32> to vector<8x64xf32>
    %918 = arith.mulf %915, %917 : vector<8x64xf32>
    %c0_213 = arith.constant 0 : index
    %c0_214 = arith.constant 0 : index
    %919 = vector.load %arg13[%c0_213, %c0_214] : memref<1x64xf32, #tpu.memory_space<vmem>>, vector<1x64xf32>
    %920 = vector.broadcast %919 : vector<1x64xf32> to vector<8x64xf32>
    %921 = arith.addf %918, %920 : vector<8x64xf32>
    %c0_215 = arith.constant 0 : index
    %c0_216 = arith.constant 0 : index
    %922 = vector.load %arg14[%c0_215, %c0_216] : memref<64x1xf32, #tpu.memory_space<vmem>>, vector<64x1xf32>
    %cst_217 = arith.constant dense<0.000000e+00> : vector<8x1xf32>
    %923 = tpu.matmul %921, %922, %cst_217 {dimension_numbers = #tpu.dot_dimension_numbers<[1], [0], [0], [1], [0, 0, 1, 1], [], []>} : vector<8x64xf32>, vector<64x1xf32>, vector<8x1xf32> -> vector<8x1xf32>
    %c0_218 = arith.constant 0 : index
    %c0_219 = arith.constant 0 : index
    %924 = vector.load %arg15[%c0_218, %c0_219] : memref<1x1xf32, #tpu.memory_space<vmem>>, vector<1x1xf32>
    %925 = vector.broadcast %924 : vector<1x1xf32> to vector<8x1xf32>
    %926 = arith.addf %923, %925 : vector<8x1xf32>
    %c0_220 = arith.constant 0 : index
    %c0_221 = arith.constant 0 : index
    %927 = vector.load %arg16[%c0_220, %c0_221] : memref<8x1xf32, #tpu.memory_space<vmem>>, vector<8x1xf32>
    tpu.vector_store %arg16[%c0_220, %c0_221], %926 {strides = array<i32>} : memref<8x1xf32, #tpu.memory_space<vmem>>, vector<8x1xf32>,
    return
  }
}

</mosaic_0001>

<llo_original>
// kernel: tpu_custom_call.1
$region0: #{tpu_custom_call.1}
  #allocation0 [shape = 'u32[]', space=smem, size = 0x4, offset = 0x4, fixed_abs, tag = 'smem constant byte address 0x4 - core index']
  #allocation1 [shape = 'u32[144,128]{1,0:T(1,128)}', space=vmem, size = 0x12000, scoped, tag = 'internal scratch']
  #allocation2 [shape = 'f32[128,512]{1,0:T(8,128)}', space=vmem, size = 0x40000, scoped, tag = 'scratch operand']
  #allocation3 [shape = 'f32[128,512]{1,0:T(8,128)}', space=vmem, size = 0x40000, scoped, tag = 'scratch operand']
  #allocation4 [shape = 'f32[1,1]{1,0:T(1,128)S(1)}', space=vmem, size = 0x200, scoped, tag = 'scoped memory for tpu_custom_call.1']
  %s0 = inlined_call_operand.vmem [shape: bf16[128,50], index: 0, kind: input, shape index: {}]
  %s1 = inlined_call_operand.hbm [shape: bf16[50,1024], index: 1, kind: input, shape index: {}]
  %s2 = inlined_call_operand.vmem [shape: bf16[256,512], index: 2, kind: input, shape index: {}]
  %s3 = inlined_call_operand.vmem [shape: f32[1,512], index: 3, kind: input, shape index: {}]
  %s4 = inlined_call_operand.vmem [shape: f32[1,512], index: 4, kind: input, shape index: {}]
  %s5 = inlined_call_operand.vmem [shape: f32[1,128], index: 5, kind: input, shape index: {}]
  %s6 = inlined_call_operand.vmem [shape: f32[1,128], index: 6, kind: input, shape index: {}]
  %s7 = inlined_call_operand.vmem [shape: f32[1,128], index: 7, kind: input, shape index: {}]
  %s8 = inlined_call_operand.vmem [shape: f32[1,128], index: 8, kind: input, shape index: {}]
  %s9 = inlined_call_operand.vmem [shape: f32[128,64], index: 9, kind: input, shape index: {}]
  %s10 = inlined_call_operand.vmem [shape: f32[128,64], index: 10, kind: input, shape index: {}]
  %s11 = inlined_call_operand.vmem [shape: f32[1,64], index: 11, kind: input, shape index: {}]
  %s12 = inlined_call_operand.vmem [shape: f32[1,64], index: 12, kind: input, shape index: {}]
  %s13 = inlined_call_operand.vmem [shape: f32[1,64], index: 13, kind: input, shape index: {}]
  %s14 = inlined_call_operand.vmem [shape: f32[64,1], index: 14, kind: input, shape index: {}]
  %s15 = inlined_call_operand.<no memory space> [shape: f32[1,1], index: 15, kind: input, shape index: {}]
  %s16 = inlined_call_operand.vmem [shape: f32[8,1], index: 16, kind: output, shape index: {}]
  %s17 = sld [smem:[#allocation0]]
  $region78: #{tpu_custom_call.1} parent=0
    _
  %s19 = ssub.s32 1, %s17
  %s20 = scalar_select 0, %s19, %s17
  %v21 = vstv %s15
  %22 = vst [vmem:[#allocation4] sm:$0x1] %v21
  $region1: #{tpu_custom_call.1} parent=0
    #allocation5 [shape = 'u8[114688]{0}', space=vmem, size = 0x1c000, scoped, tag = 'input window, operand 1, single buffered']
    #allocation6 [shape = 's32[1]{0}', space=sflag, size = 0x4, scoped, tag = 'scoped memory for tpu_custom_call.1']
    %23 = vsyncpa [#allocation6], 0
    // Predicated region
    $region2: #{tpu_custom_call.1} parent=1 // pred_check
      _
    $region3: #{tpu_custom_call.1} parent=1 // pred_check_branch
      %25 = sbr.rel (0) target = $region5
    $region4: #{tpu_custom_call.1} parent=1 // pred_region
      _
    $region5: #{tpu_custom_call.1} parent=1 // pred_fallthru
      _
    // Predicated region
    $region6: #{tpu_custom_call.1} parent=1 // pred_check
      _
    $region7: #{tpu_custom_call.1} parent=1 // pred_check_branch
      %27 = sbr.rel (0) target = $region9
    $region8: #{tpu_custom_call.1} parent=1 // pred_region
      %s29 = ssub.s32 3584, 3584
      %30 = vsyncadd [#allocation6], %s29
      %s31 = sshll.u32 [#allocation5], 4
      %s32 = int_to_ptr.vmem [resolvable:$true] %s31
      %37 = dma.hbm_to_vmem [thread:$0]  %s1, 3584, %s32, [#allocation6], 512, 512, 32
    $region9: #{tpu_custom_call.1} parent=1 // pred_fallthru
      _
    // Predicated region
    $region10: #{tpu_custom_call.1} parent=1 // pred_check
      _
    $region11: #{tpu_custom_call.1} parent=1 // pred_check_branch
      %39 = sbr.rel (0) target = $region13
    $region12: #{tpu_custom_call.1} parent=1 // pred_region
      _
    $region13: #{tpu_custom_call.1} parent=1 // pred_fallthru
      _
    // Predicated region
    $region14: #{tpu_custom_call.1} parent=1 // pred_check
      _
    $region15: #{tpu_custom_call.1} parent=1 // pred_check_branch
      %41 = sbr.rel (0) target = $region17
    $region16: #{tpu_custom_call.1} parent=1 // pred_region
      _
    $region17: #{tpu_custom_call.1} parent=1 // pred_fallthru
      _
    // Predicated region
    $region18: #{tpu_custom_call.1} parent=1 // pred_check
      _
    $region19: #{tpu_custom_call.1} parent=1 // pred_check_branch
      %43 = sbr.rel (0) target = $region21
    $region20: #{tpu_custom_call.1} parent=1 // pred_region
      _
    $region21: #{tpu_custom_call.1} parent=1 // pred_fallthru
      _
    // Predicated region
    $region22: #{tpu_custom_call.1} parent=1 // pred_check
      _
    $region23: #{tpu_custom_call.1} parent=1 // pred_check_branch
      %45 = sbr.rel (0) target = $region25
    $region24: #{tpu_custom_call.1} parent=1 // pred_region
      _
    $region25: #{tpu_custom_call.1} parent=1 // pred_fallthru
      _
    // Predicated region
    $region26: #{tpu_custom_call.1} parent=1 // pred_check
      _
    $region27: #{tpu_custom_call.1} parent=1 // pred_check_branch
      %47 = sbr.rel (0) target = $region29
    $region28: #{tpu_custom_call.1} parent=1 // pred_region
      _
    $region29: #{tpu_custom_call.1} parent=1 // pred_fallthru
      _
    // Predicated region
    $region30: #{tpu_custom_call.1} parent=1 // pred_check
      _
    $region31: #{tpu_custom_call.1} parent=1 // pred_check_branch
      %49 = sbr.rel (0) target = $region33
    $region32: #{tpu_custom_call.1} parent=1 // pred_region
      _
    $region33: #{tpu_custom_call.1} parent=1 // pred_fallthru
      _
    // Predicated region
    $region34: #{tpu_custom_call.1} parent=1 // pred_check
      _
    $region35: #{tpu_custom_call.1} parent=1 // pred_check_branch
      %51 = sbr.rel (0) target = $region37
    $region36: #{tpu_custom_call.1} parent=1 // pred_region
      _
    $region37: #{tpu_custom_call.1} parent=1 // pred_fallthru
      _
    // Predicated region
    $region38: #{tpu_custom_call.1} parent=1 // pred_check
      _
    $region39: #{tpu_custom_call.1} parent=1 // pred_check_branch
      %53 = sbr.rel (0) target = $region41
    $region40: #{tpu_custom_call.1} parent=1 // pred_region
      _
    $region41: #{tpu_custom_call.1} parent=1 // pred_fallthru
      _
    // Predicated region
    $region42: #{tpu_custom_call.1} parent=1 // pred_check
      _
    $region43: #{tpu_custom_call.1} parent=1 // pred_check_branch
      %55 = sbr.rel (0) target = $region45
    $region44: #{tpu_custom_call.1} parent=1 // pred_region
      _
    $region45: #{tpu_custom_call.1} parent=1 // pred_fallthru
      _
    // Predicated region
    $region46: #{tpu_custom_call.1} parent=1 // pred_check
      _
    $region47: #{tpu_custom_call.1} parent=1 // pred_check_branch
      %57 = sbr.rel (0) target = $region49
    $region48: #{tpu_custom_call.1} parent=1 // pred_region
      _
    $region49: #{tpu_custom_call.1} parent=1 // pred_fallthru
      _
    // Predicated region
    $region50: #{tpu_custom_call.1} parent=1 // pred_check
      _
    $region51: #{tpu_custom_call.1} parent=1 // pred_check_branch
      %59 = sbr.rel (0) target = $region53
    $region52: #{tpu_custom_call.1} parent=1 // pred_region
      _
    $region53: #{tpu_custom_call.1} parent=1 // pred_fallthru
      _
    // Predicated region
    $region54: #{tpu_custom_call.1} parent=1 // pred_check
      _
    $region55: #{tpu_custom_call.1} parent=1 // pred_check_branch
      %61 = sbr.rel (0) target = $region57
    $region56: #{tpu_custom_call.1} parent=1 // pred_region
      _
    $region57: #{tpu_custom_call.1} parent=1 // pred_fallthru
      _
    // Predicated region
    $region58: #{tpu_custom_call.1} parent=1 // pred_check
      _
    $region59: #{tpu_custom_call.1} parent=1 // pred_check_branch
      %63 = sbr.rel (0) target = $region61
    $region60: #{tpu_custom_call.1} parent=1 // pred_region
      _
    $region61: #{tpu_custom_call.1} parent=1 // pred_fallthru
      _
    // Predicated region
    $region62: #{tpu_custom_call.1} parent=1 // pred_check
      _
    $region63: #{tpu_custom_call.1} parent=1 // pred_check_branch
      %65 = sbr.rel (0) target = $region65
    $region64: #{tpu_custom_call.1} parent=1 // pred_region
      _
    $region65: #{tpu_custom_call.1} parent=1 // pred_fallthru
      _
    // Predicated region
    $region66: #{tpu_custom_call.1} parent=1 // pred_check
      _
    $region67: #{tpu_custom_call.1} parent=1 // pred_check_branch
      %67 = sbr.rel (0) target = $region69
    $region68: #{tpu_custom_call.1} parent=1 // pred_region
      %68 = dma.done [#allocation6], 3584
    $region69: #{tpu_custom_call.1} parent=1 // pred_fallthru
      _
    %v70 = vld [vmem:[%s0] sm:$0xf]
    %v71 = vld [vmem:[%s0 + $0x4] sm:$0xf]
    %v72 = vld [vmem:[%s0 + $0x8] sm:$0xf]
    %v73 = vld [vmem:[%s0 + $0xc] sm:$0xf]
    %v74 = vld [vmem:[%s0 + $0x10] sm:$0xf]
    %v75 = vld [vmem:[%s0 + $0x14] sm:$0xf]
    %v76 = vld [vmem:[%s0 + $0x18] sm:$0xf]
    %v77 = vld [vmem:[%s0 + $0x1c] sm:$0xf]
    %v78 = vld [vmem:[%s0 + $0x20] sm:$0xf]
    %v79 = vld [vmem:[%s0 + $0x24] sm:$0xf]
    %v80 = vld [vmem:[%s0 + $0x28] sm:$0xf]
    %v81 = vld [vmem:[%s0 + $0x2c] sm:$0xf]
    %v82 = vld [vmem:[%s0 + $0x30] sm:$0xf]
    %v83 = vld [vmem:[%s0 + $0x34] sm:$0xf]
    %v84 = vld [vmem:[%s0 + $0x38] sm:$0xf]
    %v85 = vld [vmem:[%s0 + $0x3c] sm:$0xf]
    %v86 = vld [vmem:[#allocation5] sm:$0xff]
    %v87 = vld [vmem:[#allocation5 + $0x8] sm:$0xff]
    %v88 = vld [vmem:[#allocation5 + $0x10] sm:$0xff]
    %v89 = vld [vmem:[#allocation5 + $0x18] sm:$0xff]
    %v90 = vld [vmem:[#allocation5 + $0x20] sm:$0xff]
    %v91 = vld [vmem:[#allocation5 + $0x28] sm:$0xff]
    %v92 = vld [vmem:[#allocation5 + $0x30] sm:$0xff]
    %v93 = vld [vmem:[#allocation5 + $0x38] sm:$0xff]
    %v94 = vld [vmem:[#allocation5 + $0x40] sm:$0xff]
    %v95 = vld [vmem:[#allocation5 + $0x48] sm:$0xff]
    %v96 = vld [vmem:[#allocation5 + $0x50] sm:$0xff]
    %v97 = vld [vmem:[#allocation5 + $0x58] sm:$0xff]
    %v98 = vld [vmem:[#allocation5 + $0x60] sm:$0xff]
    %v99 = vld [vmem:[#allocation5 + $0x68] sm:$0xff]
    %v100 = vld [vmem:[#allocation5 + $0x70] sm:$0xff]
    %v101 = vld [vmem:[#allocation5 + $0x78] sm:$0xff]
    %v102 = vld [vmem:[#allocation5 + $0x80] sm:$0xff]
    %v103 = vld [vmem:[#allocation5 + $0x88] sm:$0xff]
    %v104 = vld [vmem:[#allocation5 + $0x90] sm:$0xff]
    %v105 = vld [vmem:[#allocation5 + $0x98] sm:$0xff]
    %v106 = vld [vmem:[#allocation5 + $0xa0] sm:$0xff]
    %v107 = vld [vmem:[#allocation5 + $0xa8] sm:$0xff]
    %v108 = vld [vmem:[#allocation5 + $0xb0] sm:$0xff]
    %v109 = vld [vmem:[#allocation5 + $0xb8] sm:$0xff]
    %v110 = vld [vmem:[#allocation5 + $0xc0] sm:$0x11]
    %v111 = vld [vmem:[#allocation5 + $0xc8] sm:$0x11]
    %v112 = vld [vmem:[#allocation5 + $0xd0] sm:$0x11]
    %v113 = vld [vmem:[#allocation5 + $0xd8] sm:$0x11]
    %v130 = vunpack.c.l.b16 %v70
    %v131 = vunpack.c.l.b16 %v71
    %v132 = vunpack.c.l.b16 %v72
    %v133 = vunpack.c.l.b16 %v73
    %v134 = vunpack.c.l.b16 %v74
    %v135 = vunpack.c.l.b16 %v75
    %v136 = vunpack.c.l.b16 %v76
    %v137 = vunpack.c.l.b16 %v77
    %v138 = vunpack.c.l.b16 %v78
    %v139 = vunpack.c.l.b16 %v79
    %v140 = vunpack.c.l.b16 %v80
    %v141 = vunpack.c.l.b16 %v81
    %v142 = vunpack.c.l.b16 %v82
    %v143 = vunpack.c.l.b16 %v83
    %v144 = vunpack.c.l.b16 %v84
    %v145 = vunpack.c.l.b16 %v85
    %v146 = vpack.c.b16 %v131, %v130
    %v147 = vpack.c.b16 %v133, %v132
    %v148 = vpack.c.b16 %v135, %v134
    %v149 = vpack.c.b16 %v137, %v136
    %v150 = vpack.c.b16 %v139, %v138
    %v151 = vpack.c.b16 %v141, %v140
    %v152 = vpack.c.b16 %v143, %v142
    %v153 = vpack.c.b16 %v145, %v144
    %v182 = vunpack.c.l.b16 %v86
    %v183 = vunpack.c.h.b16 %v86
    %v184 = vunpack.c.l.b16 %v87
    %v185 = vunpack.c.h.b16 %v87
    %v186 = vunpack.c.l.b16 %v88
    %v187 = vunpack.c.h.b16 %v88
    %v188 = vunpack.c.l.b16 %v89
    %v189 = vunpack.c.h.b16 %v89
    %v190 = vunpack.c.l.b16 %v90
    %v191 = vunpack.c.h.b16 %v90
    %v192 = vunpack.c.l.b16 %v91
    %v193 = vunpack.c.h.b16 %v91
    %v194 = vunpack.c.l.b16 %v92
    %v195 = vunpack.c.h.b16 %v92
    %v196 = vunpack.c.l.b16 %v93
    %v197 = vunpack.c.h.b16 %v93
    %v198 = vunpack.c.l.b16 %v94
    %v199 = vunpack.c.h.b16 %v94
    %v200 = vunpack.c.l.b16 %v95
    %v201 = vunpack.c.h.b16 %v95
    %v202 = vunpack.c.l.b16 %v96
    %v203 = vunpack.c.h.b16 %v96
    %v204 = vunpack.c.l.b16 %v97
    %v205 = vunpack.c.h.b16 %v97
    %v206 = vunpack.c.l.b16 %v98
    %v207 = vunpack.c.h.b16 %v98
    %v208 = vunpack.c.l.b16 %v99
    %v209 = vunpack.c.h.b16 %v99
    %v210 = vunpack.c.l.b16 %v100
    %v211 = vunpack.c.h.b16 %v100
    %v212 = vunpack.c.l.b16 %v101
    %v213 = vunpack.c.h.b16 %v101
    %v214 = vunpack.c.l.b16 %v102
    %v215 = vunpack.c.h.b16 %v102
    %v216 = vunpack.c.l.b16 %v103
    %v217 = vunpack.c.h.b16 %v103
    %v218 = vunpack.c.l.b16 %v104
    %v219 = vunpack.c.h.b16 %v104
    %v220 = vunpack.c.l.b16 %v105
    %v221 = vunpack.c.h.b16 %v105
    %v222 = vunpack.c.l.b16 %v106
    %v223 = vunpack.c.h.b16 %v106
    %v224 = vunpack.c.l.b16 %v107
    %v225 = vunpack.c.h.b16 %v107
    %v226 = vunpack.c.l.b16 %v108
    %v227 = vunpack.c.h.b16 %v108
    %v228 = vunpack.c.l.b16 %v109
    %v229 = vunpack.c.h.b16 %v109
    %v230 = vunpack.c.l.b16 %v110
    %v231 = vunpack.c.h.b16 %v110
    %v232 = vunpack.c.l.b16 %v111
    %v233 = vunpack.c.h.b16 %v111
    %v234 = vunpack.c.l.b16 %v112
    %v235 = vunpack.c.h.b16 %v112
    %v236 = vunpack.c.l.b16 %v113
    %v237 = vunpack.c.h.b16 %v113
    %v238 = vpack.c.b16 %v190, %v182
    %v239 = vpack.c.b16 %v191, %v183
    %v240 = vpack.c.b16 %v192, %v184
    %v241 = vpack.c.b16 %v193, %v185
    %v242 = vpack.c.b16 %v194, %v186
    %v243 = vpack.c.b16 %v195, %v187
    %v244 = vpack.c.b16 %v196, %v188
    %v245 = vpack.c.b16 %v197, %v189
    %v246 = vpack.c.b16 %v206, %v198
    %v247 = vpack.c.b16 %v207, %v199
    %v248 = vpack.c.b16 %v208, %v200
    %v249 = vpack.c.b16 %v209, %v201
    %v250 = vpack.c.b16 %v210, %v202
    %v251 = vpack.c.b16 %v211, %v203
    %v252 = vpack.c.b16 %v212, %v204
    %v253 = vpack.c.b16 %v213, %v205
    %v254 = vpack.c.b16 %v222, %v214
    %v255 = vpack.c.b16 %v223, %v215
    %v256 = vpack.c.b16 %v224, %v216
    %v257 = vpack.c.b16 %v225, %v217
    %v258 = vpack.c.b16 %v226, %v218
    %v259 = vpack.c.b16 %v227, %v219
    %v260 = vpack.c.b16 %v228, %v220
    %v261 = vpack.c.b16 %v229, %v221
    %v262 = vpack.c.b16 %v230, %v230
    %v263 = vpack.c.b16 %v231, %v231
    %v264 = vpack.c.b16 %v232, %v232
    %v265 = vpack.c.b16 %v233, %v233
    %v266 = vpack.c.b16 %v234, %v234
    %v267 = vpack.c.b16 %v235, %v235
    %v268 = vpack.c.b16 %v236, %v236
    %v269 = vpack.c.b16 %v237, %v237
    %vm294 = vcmask 408576
    %v296 = vsel %vm294, %v146, 0
    %v299 = vsel %vm294, %v147, 0
    %v302 = vsel %vm294, %v148, 0
    %v305 = vsel %vm294, %v149, 0
    %v308 = vsel %vm294, %v150, 0
    %v311 = vsel %vm294, %v151, 0
    %v314 = vsel %vm294, %v152, 0
    %v317 = vsel %vm294, %v153, 0
    %vm319 = vcmask 1040384
    %v321 = vsel %vm319, %v262, 0
    %v324 = vsel %vm319, %v263, 0
    %v327 = vsel %vm319, %v264, 0
    %v330 = vsel %vm319, %v265, 0
    %v333 = vsel %vm319, %v266, 0
    %v336 = vsel %vm319, %v267, 0
    %v339 = vsel %vm319, %v268, 0
    %v342 = vsel %vm319, %v269, 0
    %344 = vmatprep.subr.bf16.mxu0 0
    %345 = vmatpush1.bf16.msra.mxu0 0
    %346 = vmatprep.subr.bf16.mxu0 0
    %347 = vmatpush1.bf16.msra.mxu0 0
    %348 = vmatprep.subr.bf16.mxu0 0
    %349 = vmatpush1.bf16.msra.mxu0 0
    %350 = vmatprep.subr.bf16.mxu0 0
    %351 = vmatpush1.bf16.msra.mxu0 0
    %352 = vmatprep.subr.bf16.mxu0 %v324
    %353 = vmatpush1.bf16.msra.mxu0 %v321
    %354 = vmatprep.subr.bf16.mxu0 %v255
    %355 = vmatpush1.bf16.msra.mxu0 %v254
    %356 = vmatprep.subr.bf16.mxu0 %v247
    %357 = vmatpush1.bf16.msra.mxu0 %v246
    %358 = vmatprep.subr.bf16.mxu0 %v239
    %359 = vmatpush1.bf16.msra.mxu0 %v238
    %360 = vmatprep.subr.bf16.mxu0 0
    %361 = vmatpush2.bf16.msra.mxu0 0
    %362 = vmatprep.subr.bf16.mxu0 0
    %363 = vmatpush2.bf16.msra.mxu0 0
    %364 = vmatprep.subr.bf16.mxu0 0
    %365 = vmatpush2.bf16.msra.mxu0 0
    %366 = vmatprep.subr.bf16.mxu0 0
    %367 = vmatpush2.bf16.msra.mxu0 0
    %368 = vmatprep.subr.bf16.mxu0 0
    %369 = vmatpush2.bf16.msra.mxu0 0
    %370 = vmatprep.subr.bf16.mxu0 0
    %371 = vmatpush2.bf16.msra.mxu0 0
    %372 = vmatprep.subr.bf16.mxu0 0
    %373 = vmatpush2.bf16.msra.mxu0 0
    %374 = vmatprep.subr.bf16.mxu0 0
    %375 = vmatpush2.bf16.msra.mxu0 0
    %376 = vmatprep.mubr.bf16.mxu0 0
    %377 = vmatmul.mubr.bf16.gmra.mxu0 %v296
    %v378 = vpop.f32.mrf.mxu0
    %v379 = vadd.f32 0.0, %v378
    %v380 = vpop.f32.mrf.mxu0
    %v381 = vadd.f32 0.0, %v380
    %v382 = vpop.f32.mrf.mxu0
    %v383 = vadd.f32 0.0, %v382
    %v384 = vpop.f32.mrf.mxu0
    %v385 = vadd.f32 0.0, %v384
    %386 = vmatprep.mubr.bf16.mxu0 0
    %387 = vmatmul.mubr.bf16.gmra.mxu0 %v299
    %v388 = vpop.f32.mrf.mxu0
    %v389 = vadd.f32 0.0, %v388
    %v390 = vpop.f32.mrf.mxu0
    %v391 = vadd.f32 0.0, %v390
    %v392 = vpop.f32.mrf.mxu0
    %v393 = vadd.f32 0.0, %v392
    %v394 = vpop.f32.mrf.mxu0
    %v395 = vadd.f32 0.0, %v394
    %396 = vmatprep.mubr.bf16.mxu0 0
    %397 = vmatmul.mubr.bf16.gmra.mxu0 %v302
    %v398 = vpop.f32.mrf.mxu0
    %v399 = vadd.f32 0.0, %v398
    %v400 = vpop.f32.mrf.mxu0
    %v401 = vadd.f32 0.0, %v400
    %v402 = vpop.f32.mrf.mxu0
    %v403 = vadd.f32 0.0, %v402
    %v404 = vpop.f32.mrf.mxu0
    %v405 = vadd.f32 0.0, %v404
    %406 = vmatprep.mubr.bf16.mxu0 0
    %407 = vmatmul.mubr.bf16.gmra.mxu0 %v305
    %v408 = vpop.f32.mrf.mxu0
    %v409 = vadd.f32 0.0, %v408
    %v410 = vpop.f32.mrf.mxu0
    %v411 = vadd.f32 0.0, %v410
    %v412 = vpop.f32.mrf.mxu0
    %v413 = vadd.f32 0.0, %v412
    %v414 = vpop.f32.mrf.mxu0
    %v415 = vadd.f32 0.0, %v414
    %416 = vmatprep.mubr.bf16.mxu0 0
    %417 = vmatmul.mubr.bf16.gmra.mxu0 %v308
    %v418 = vpop.f32.mrf.mxu0
    %v419 = vadd.f32 0.0, %v418
    %v420 = vpop.f32.mrf.mxu0
    %v421 = vadd.f32 0.0, %v420
    %v422 = vpop.f32.mrf.mxu0
    %v423 = vadd.f32 0.0, %v422
    %v424 = vpop.f32.mrf.mxu0
    %v425 = vadd.f32 0.0, %v424
    %426 = vmatprep.mubr.bf16.mxu0 0
    %427 = vmatmul.mubr.bf16.gmra.mxu0 %v311
    %v428 = vpop.f32.mrf.mxu0
    %v429 = vadd.f32 0.0, %v428
    %v430 = vpop.f32.mrf.mxu0
    %v431 = vadd.f32 0.0, %v430
    %v432 = vpop.f32.mrf.mxu0
    %v433 = vadd.f32 0.0, %v432
    %v434 = vpop.f32.mrf.mxu0
    %v435 = vadd.f32 0.0, %v434
    %436 = vmatprep.mubr.bf16.mxu0 0
    %437 = vmatmul.mubr.bf16.gmra.mxu0 %v314
    %v438 = vpop.f32.mrf.mxu0
    %v439 = vadd.f32 0.0, %v438
    %v440 = vpop.f32.mrf.mxu0
    %v441 = vadd.f32 0.0, %v440
    %v442 = vpop.f32.mrf.mxu0
    %v443 = vadd.f32 0.0, %v442
    %v444 = vpop.f32.mrf.mxu0
    %v445 = vadd.f32 0.0, %v444
    %446 = vmatprep.mubr.bf16.mxu0 0
    %447 = vmatmul.mubr.bf16.gmra.mxu0 %v317
    %v448 = vpop.f32.mrf.mxu0
    %v449 = vadd.f32 0.0, %v448
    %v450 = vpop.f32.mrf.mxu0
    %v451 = vadd.f32 0.0, %v450
    %v452 = vpop.f32.mrf.mxu0
    %v453 = vadd.f32 0.0, %v452
    %v454 = vpop.f32.mrf.mxu0
    %v455 = vadd.f32 0.0, %v454
    %456 = vdwg.mxu0
    %457 = vmatprep.subr.bf16.mxu0 0
    %458 = vmatpush1.bf16.msra.mxu0 0
    %459 = vmatprep.subr.bf16.mxu0 0
    %460 = vmatpush1.bf16.msra.mxu0 0
    %461 = vmatprep.subr.bf16.mxu0 0
    %462 = vmatpush1.bf16.msra.mxu0 0
    %463 = vmatprep.subr.bf16.mxu0 0
    %464 = vmatpush1.bf16.msra.mxu0 0
    %465 = vmatprep.subr.bf16.mxu0 %v330
    %466 = vmatpush1.bf16.msra.mxu0 %v327
    %467 = vmatprep.subr.bf16.mxu0 %v257
    %468 = vmatpush1.bf16.msra.mxu0 %v256
    %469 = vmatprep.subr.bf16.mxu0 %v249
    %470 = vmatpush1.bf16.msra.mxu0 %v248
    %471 = vmatprep.subr.bf16.mxu0 %v241
    %472 = vmatpush1.bf16.msra.mxu0 %v240
    %473 = vmatprep.subr.bf16.mxu0 0
    %474 = vmatpush2.bf16.msra.mxu0 0
    %475 = vmatprep.subr.bf16.mxu0 0
    %476 = vmatpush2.bf16.msra.mxu0 0
    %477 = vmatprep.subr.bf16.mxu0 0
    %478 = vmatpush2.bf16.msra.mxu0 0
    %479 = vmatprep.subr.bf16.mxu0 0
    %480 = vmatpush2.bf16.msra.mxu0 0
    %481 = vmatprep.subr.bf16.mxu0 0
    %482 = vmatpush2.bf16.msra.mxu0 0
    %483 = vmatprep.subr.bf16.mxu0 0
    %484 = vmatpush2.bf16.msra.mxu0 0
    %485 = vmatprep.subr.bf16.mxu0 0
    %486 = vmatpush2.bf16.msra.mxu0 0
    %487 = vmatprep.subr.bf16.mxu0 0
    %488 = vmatpush2.bf16.msra.mxu0 0
    %489 = vmatprep.mubr.bf16.mxu0 0
    %490 = vmatmul.mubr.bf16.gmra.mxu0 %v296
    %v491 = vpop.f32.mrf.mxu0
    %v492 = vadd.f32 0.0, %v491
    %v493 = vpop.f32.mrf.mxu0
    %v494 = vadd.f32 0.0, %v493
    %v495 = vpop.f32.mrf.mxu0
    %v496 = vadd.f32 0.0, %v495
    %v497 = vpop.f32.mrf.mxu0
    %v498 = vadd.f32 0.0, %v497
    %499 = vmatprep.mubr.bf16.mxu0 0
    %500 = vmatmul.mubr.bf16.gmra.mxu0 %v299
    %v501 = vpop.f32.mrf.mxu0
    %v502 = vadd.f32 0.0, %v501
    %v503 = vpop.f32.mrf.mxu0
    %v504 = vadd.f32 0.0, %v503
    %v505 = vpop.f32.mrf.mxu0
    %v506 = vadd.f32 0.0, %v505
    %v507 = vpop.f32.mrf.mxu0
    %v508 = vadd.f32 0.0, %v507
    %509 = vmatprep.mubr.bf16.mxu0 0
    %510 = vmatmul.mubr.bf16.gmra.mxu0 %v302
    %v511 = vpop.f32.mrf.mxu0
    %v512 = vadd.f32 0.0, %v511
    %v513 = vpop.f32.mrf.mxu0
    %v514 = vadd.f32 0.0, %v513
    %v515 = vpop.f32.mrf.mxu0
    %v516 = vadd.f32 0.0, %v515
    %v517 = vpop.f32.mrf.mxu0
    %v518 = vadd.f32 0.0, %v517
    %519 = vmatprep.mubr.bf16.mxu0 0
    %520 = vmatmul.mubr.bf16.gmra.mxu0 %v305
    %v521 = vpop.f32.mrf.mxu0
    %v522 = vadd.f32 0.0, %v521
    %v523 = vpop.f32.mrf.mxu0
    %v524 = vadd.f32 0.0, %v523
    %v525 = vpop.f32.mrf.mxu0
    %v526 = vadd.f32 0.0, %v525
    %v527 = vpop.f32.mrf.mxu0
    %v528 = vadd.f32 0.0, %v527
    %529 = vmatprep.mubr.bf16.mxu0 0
    %530 = vmatmul.mubr.bf16.gmra.mxu0 %v308
    %v531 = vpop.f32.mrf.mxu0
    %v532 = vadd.f32 0.0, %v531
    %v533 = vpop.f32.mrf.mxu0
    %v534 = vadd.f32 0.0, %v533
    %v535 = vpop.f32.mrf.mxu0
    %v536 = vadd.f32 0.0, %v535
    %v537 = vpop.f32.mrf.mxu0
    %v538 = vadd.f32 0.0, %v537
    %539 = vmatprep.mubr.bf16.mxu0 0
    %540 = vmatmul.mubr.bf16.gmra.mxu0 %v311
    %v541 = vpop.f32.mrf.mxu0
    %v542 = vadd.f32 0.0, %v541
    %v543 = vpop.f32.mrf.mxu0
    %v544 = vadd.f32 0.0, %v543
    %v545 = vpop.f32.mrf.mxu0
    %v546 = vadd.f32 0.0, %v545
    %v547 = vpop.f32.mrf.mxu0
    %v548 = vadd.f32 0.0, %v547
    %549 = vmatprep.mubr.bf16.mxu0 0
    %550 = vmatmul.mubr.bf16.gmra.mxu0 %v314
    %v551 = vpop.f32.mrf.mxu0
    %v552 = vadd.f32 0.0, %v551
    %v553 = vpop.f32.mrf.mxu0
    %v554 = vadd.f32 0.0, %v553
    %v555 = vpop.f32.mrf.mxu0
    %v556 = vadd.f32 0.0, %v555
    %v557 = vpop.f32.mrf.mxu0
    %v558 = vadd.f32 0.0, %v557
    %559 = vmatprep.mubr.bf16.mxu0 0
    %560 = vmatmul.mubr.bf16.gmra.mxu0 %v317
    %v561 = vpop.f32.mrf.mxu0
    %v562 = vadd.f32 0.0, %v561
    %v563 = vpop.f32.mrf.mxu0
    %v564 = vadd.f32 0.0, %v563
    %v565 = vpop.f32.mrf.mxu0
    %v566 = vadd.f32 0.0, %v565
    %v567 = vpop.f32.mrf.mxu0
    %v568 = vadd.f32 0.0, %v567
    %569 = vdwg.mxu0
    %570 = vmatprep.subr.bf16.mxu0 0
    %571 = vmatpush1.bf16.msra.mxu0 0
    %572 = vmatprep.subr.bf16.mxu0 0
    %573 = vmatpush1.bf16.msra.mxu0 0
    %574 = vmatprep.subr.bf16.mxu0 0
    %575 = vmatpush1.bf16.msra.mxu0 0
    %576 = vmatprep.subr.bf16.mxu0 0
    %577 = vmatpush1.bf16.msra.mxu0 0
    %578 = vmatprep.subr.bf16.mxu0 %v336
    %579 = vmatpush1.bf16.msra.mxu0 %v333
    %580 = vmatprep.subr.bf16.mxu0 %v259
    %581 = vmatpush1.bf16.msra.mxu0 %v258
    %582 = vmatprep.subr.bf16.mxu0 %v251
    %583 = vmatpush1.bf16.msra.mxu0 %v250
    %584 = vmatprep.subr.bf16.mxu0 %v243
    %585 = vmatpush1.bf16.msra.mxu0 %v242
    %586 = vmatprep.subr.bf16.mxu0 0
    %587 = vmatpush2.bf16.msra.mxu0 0
    %588 = vmatprep.subr.bf16.mxu0 0
    %589 = vmatpush2.bf16.msra.mxu0 0
    %590 = vmatprep.subr.bf16.mxu0 0
    %591 = vmatpush2.bf16.msra.mxu0 0
    %592 = vmatprep.subr.bf16.mxu0 0
    %593 = vmatpush2.bf16.msra.mxu0 0
    %594 = vmatprep.subr.bf16.mxu0 0
    %595 = vmatpush2.bf16.msra.mxu0 0
    %596 = vmatprep.subr.bf16.mxu0 0
    %597 = vmatpush2.bf16.msra.mxu0 0
    %598 = vmatprep.subr.bf16.mxu0 0
    %599 = vmatpush2.bf16.msra.mxu0 0
    %600 = vmatprep.subr.bf16.mxu0 0
    %601 = vmatpush2.bf16.msra.mxu0 0
    %602 = vmatprep.mubr.bf16.mxu0 0
    %603 = vmatmul.mubr.bf16.gmra.mxu0 %v296
    %v604 = vpop.f32.mrf.mxu0
    %v605 = vadd.f32 0.0, %v604
    %v606 = vpop.f32.mrf.mxu0
    %v607 = vadd.f32 0.0, %v606
    %v608 = vpop.f32.mrf.mxu0
    %v609 = vadd.f32 0.0, %v608
    %v610 = vpop.f32.mrf.mxu0
    %v611 = vadd.f32 0.0, %v610
    %612 = vmatprep.mubr.bf16.mxu0 0
    %613 = vmatmul.mubr.bf16.gmra.mxu0 %v299
    %v614 = vpop.f32.mrf.mxu0
    %v615 = vadd.f32 0.0, %v614
    %v616 = vpop.f32.mrf.mxu0
    %v617 = vadd.f32 0.0, %v616
    %v618 = vpop.f32.mrf.mxu0
    %v619 = vadd.f32 0.0, %v618
    %v620 = vpop.f32.mrf.mxu0
    %v621 = vadd.f32 0.0, %v620
    %622 = vmatprep.mubr.bf16.mxu0 0
    %623 = vmatmul.mubr.bf16.gmra.mxu0 %v302
    %v624 = vpop.f32.mrf.mxu0
    %v625 = vadd.f32 0.0, %v624
    %v626 = vpop.f32.mrf.mxu0
    %v627 = vadd.f32 0.0, %v626
    %v628 = vpop.f32.mrf.mxu0
    %v629 = vadd.f32 0.0, %v628
    %v630 = vpop.f32.mrf.mxu0
    %v631 = vadd.f32 0.0, %v630
    %632 = vmatprep.mubr.bf16.mxu0 0
    %633 = vmatmul.mubr.bf16.gmra.mxu0 %v305
    %v634 = vpop.f32.mrf.mxu0
    %v635 = vadd.f32 0.0, %v634
    %v636 = vpop.f32.mrf.mxu0
    %v637 = vadd.f32 0.0, %v636
    %v638 = vpop.f32.mrf.mxu0
    %v639 = vadd.f32 0.0, %v638
    %v640 = vpop.f32.mrf.mxu0
    %v641 = vadd.f32 0.0, %v640
    %642 = vmatprep.mubr.bf16.mxu0 0
    %643 = vmatmul.mubr.bf16.gmra.mxu0 %v308
    %v644 = vpop.f32.mrf.mxu0
    %v645 = vadd.f32 0.0, %v644
    %v646 = vpop.f32.mrf.mxu0
    %v647 = vadd.f32 0.0, %v646
    %v648 = vpop.f32.mrf.mxu0
    %v649 = vadd.f32 0.0, %v648
    %v650 = vpop.f32.mrf.mxu0
    %v651 = vadd.f32 0.0, %v650
    %652 = vmatprep.mubr.bf16.mxu0 0
    %653 = vmatmul.mubr.bf16.gmra.mxu0 %v311
    %v654 = vpop.f32.mrf.mxu0
    %v655 = vadd.f32 0.0, %v654
    %v656 = vpop.f32.mrf.mxu0
    %v657 = vadd.f32 0.0, %v656
    %v658 = vpop.f32.mrf.mxu0
    %v659 = vadd.f32 0.0, %v658
    %v660 = vpop.f32.mrf.mxu0
    %v661 = vadd.f32 0.0, %v660
    %662 = vmatprep.mubr.bf16.mxu0 0
    %663 = vmatmul.mubr.bf16.gmra.mxu0 %v314
    %v664 = vpop.f32.mrf.mxu0
    %v665 = vadd.f32 0.0, %v664
    %v666 = vpop.f32.mrf.mxu0
    %v667 = vadd.f32 0.0, %v666
    %v668 = vpop.f32.mrf.mxu0
    %v669 = vadd.f32 0.0, %v668
    %v670 = vpop.f32.mrf.mxu0
    %v671 = vadd.f32 0.0, %v670
    %672 = vmatprep.mubr.bf16.mxu0 0
    %673 = vmatmul.mubr.bf16.gmra.mxu0 %v317
    %v674 = vpop.f32.mrf.mxu0
    %v675 = vadd.f32 0.0, %v674
    %v676 = vpop.f32.mrf.mxu0
    %v677 = vadd.f32 0.0, %v676
    %v678 = vpop.f32.mrf.mxu0
    %v679 = vadd.f32 0.0, %v678
    %v680 = vpop.f32.mrf.mxu0
    %v681 = vadd.f32 0.0, %v680
    %682 = vdwg.mxu0
    %683 = vmatprep.subr.bf16.mxu0 0
    %684 = vmatpush1.bf16.msra.mxu0 0
    %685 = vmatprep.subr.bf16.mxu0 0
    %686 = vmatpush1.bf16.msra.mxu0 0
    %687 = vmatprep.subr.bf16.mxu0 0
    %688 = vmatpush1.bf16.msra.mxu0 0
    %689 = vmatprep.subr.bf16.mxu0 0
    %690 = vmatpush1.bf16.msra.mxu0 0
    %691 = vmatprep.subr.bf16.mxu0 %v342
    %692 = vmatpush1.bf16.msra.mxu0 %v339
    %693 = vmatprep.subr.bf16.mxu0 %v261
    %694 = vmatpush1.bf16.msra.mxu0 %v260
    %695 = vmatprep.subr.bf16.mxu0 %v253
    %696 = vmatpush1.bf16.msra.mxu0 %v252
    %697 = vmatprep.subr.bf16.mxu0 %v245
    %698 = vmatpush1.bf16.msra.mxu0 %v244
    %699 = vmatprep.subr.bf16.mxu0 0
    %700 = vmatpush2.bf16.msra.mxu0 0
    %701 = vmatprep.subr.bf16.mxu0 0
    %702 = vmatpush2.bf16.msra.mxu0 0
    %703 = vmatprep.subr.bf16.mxu0 0
    %704 = vmatpush2.bf16.msra.mxu0 0
    %705 = vmatprep.subr.bf16.mxu0 0
    %706 = vmatpush2.bf16.msra.mxu0 0
    %707 = vmatprep.subr.bf16.mxu0 0
    %708 = vmatpush2.bf16.msra.mxu0 0
    %709 = vmatprep.subr.bf16.mxu0 0
    %710 = vmatpush2.bf16.msra.mxu0 0
    %711 = vmatprep.subr.bf16.mxu0 0
    %712 = vmatpush2.bf16.msra.mxu0 0
    %713 = vmatprep.subr.bf16.mxu0 0
    %714 = vmatpush2.bf16.msra.mxu0 0
    %715 = vmatprep.mubr.bf16.mxu0 0
    %716 = vmatmul.mubr.bf16.gmra.mxu0 %v296
    %v717 = vpop.f32.mrf.mxu0
    %v718 = vadd.f32 0.0, %v717
    %v719 = vpop.f32.mrf.mxu0
    %v720 = vadd.f32 0.0, %v719
    %v721 = vpop.f32.mrf.mxu0
    %v722 = vadd.f32 0.0, %v721
    %v723 = vpop.f32.mrf.mxu0
    %v724 = vadd.f32 0.0, %v723
    %725 = vmatprep.mubr.bf16.mxu0 0
    %726 = vmatmul.mubr.bf16.gmra.mxu0 %v299
    %v727 = vpop.f32.mrf.mxu0
    %v728 = vadd.f32 0.0, %v727
    %v729 = vpop.f32.mrf.mxu0
    %v730 = vadd.f32 0.0, %v729
    %v731 = vpop.f32.mrf.mxu0
    %v732 = vadd.f32 0.0, %v731
    %v733 = vpop.f32.mrf.mxu0
    %v734 = vadd.f32 0.0, %v733
    %735 = vmatprep.mubr.bf16.mxu0 0
    %736 = vmatmul.mubr.bf16.gmra.mxu0 %v302
    %v737 = vpop.f32.mrf.mxu0
    %v738 = vadd.f32 0.0, %v737
    %v739 = vpop.f32.mrf.mxu0
    %v740 = vadd.f32 0.0, %v739
    %v741 = vpop.f32.mrf.mxu0
    %v742 = vadd.f32 0.0, %v741
    %v743 = vpop.f32.mrf.mxu0
    %v744 = vadd.f32 0.0, %v743
    %745 = vmatprep.mubr.bf16.mxu0 0
    %746 = vmatmul.mubr.bf16.gmra.mxu0 %v305
    %v747 = vpop.f32.mrf.mxu0
    %v748 = vadd.f32 0.0, %v747
    %v749 = vpop.f32.mrf.mxu0
    %v750 = vadd.f32 0.0, %v749
    %v751 = vpop.f32.mrf.mxu0
    %v752 = vadd.f32 0.0, %v751
    %v753 = vpop.f32.mrf.mxu0
    %v754 = vadd.f32 0.0, %v753
    %755 = vmatprep.mubr.bf16.mxu0 0
    %756 = vmatmul.mubr.bf16.gmra.mxu0 %v308
    %v757 = vpop.f32.mrf.mxu0
    %v758 = vadd.f32 0.0, %v757
    %v759 = vpop.f32.mrf.mxu0
    %v760 = vadd.f32 0.0, %v759
    %v761 = vpop.f32.mrf.mxu0
    %v762 = vadd.f32 0.0, %v761
    %v763 = vpop.f32.mrf.mxu0
    %v764 = vadd.f32 0.0, %v763
    %765 = vmatprep.mubr.bf16.mxu0 0
    %766 = vmatmul.mubr.bf16.gmra.mxu0 %v311
    %v767 = vpop.f32.mrf.mxu0
    %v768 = vadd.f32 0.0, %v767
    %v769 = vpop.f32.mrf.mxu0
    %v770 = vadd.f32 0.0, %v769
    %v771 = vpop.f32.mrf.mxu0
    %v772 = vadd.f32 0.0, %v771
    %v773 = vpop.f32.mrf.mxu0
    %v774 = vadd.f32 0.0, %v773
    %775 = vmatprep.mubr.bf16.mxu0 0
    %776 = vmatmul.mubr.bf16.gmra.mxu0 %v314
    %v777 = vpop.f32.mrf.mxu0
    %v778 = vadd.f32 0.0, %v777
    %v779 = vpop.f32.mrf.mxu0
    %v780 = vadd.f32 0.0, %v779
    %v781 = vpop.f32.mrf.mxu0
    %v782 = vadd.f32 0.0, %v781
    %v783 = vpop.f32.mrf.mxu0
    %v784 = vadd.f32 0.0, %v783
    %785 = vmatprep.mubr.bf16.mxu0 0
    %786 = vmatmul.mubr.bf16.gmra.mxu0 %v317
    %v787 = vpop.f32.mrf.mxu0
    %v788 = vadd.f32 0.0, %v787
    %v789 = vpop.f32.mrf.mxu0
    %v790 = vadd.f32 0.0, %v789
    %v791 = vpop.f32.mrf.mxu0
    %v792 = vadd.f32 0.0, %v791
    %v793 = vpop.f32.mrf.mxu0
    %v794 = vadd.f32 0.0, %v793
    %795 = vdwg.mxu0
    %v796 = vld [vmem:[%s3] sm:$0xf]
    %v798 = vlaneseq
    %v799 = vshrl.u32 %v798, 7
    %v800 = vsub.s32 0, %v799
    %v801 = vrot.slane %v796, %v800
    %v802 = vlaneseq
    %v803 = vshrl.u32 %v802, 7
    %v804 = vsub.s32 1, %v803
    %v805 = vrot.slane %v796, %v804
    %v806 = vlaneseq
    %v807 = vshrl.u32 %v806, 7
    %v808 = vsub.s32 2, %v807
    %v809 = vrot.slane %v796, %v808
    %v810 = vlaneseq
    %v811 = vshrl.u32 %v810, 7
    %v812 = vsub.s32 3, %v811
    %v813 = vrot.slane %v796, %v812
    %v818 = vadd.f32 %v379, %v801
    %v819 = vadd.f32 %v381, %v805
    %v820 = vadd.f32 %v492, %v809
    %v821 = vadd.f32 %v494, %v813
    %v822 = vadd.f32 %v383, %v801
    %v823 = vadd.f32 %v385, %v805
    %v824 = vadd.f32 %v496, %v809
    %v825 = vadd.f32 %v498, %v813
    %v826 = vadd.f32 %v389, %v801
    %v827 = vadd.f32 %v391, %v805
    %v828 = vadd.f32 %v502, %v809
    %v829 = vadd.f32 %v504, %v813
    %v830 = vadd.f32 %v393, %v801
    %v831 = vadd.f32 %v395, %v805
    %v832 = vadd.f32 %v506, %v809
    %v833 = vadd.f32 %v508, %v813
    %v834 = vadd.f32 %v399, %v801
    %v835 = vadd.f32 %v401, %v805
    %v836 = vadd.f32 %v512, %v809
    %v837 = vadd.f32 %v514, %v813
    %v838 = vadd.f32 %v403, %v801
    %v839 = vadd.f32 %v405, %v805
    %v840 = vadd.f32 %v516, %v809
    %v841 = vadd.f32 %v518, %v813
    %v842 = vadd.f32 %v409, %v801
    %v843 = vadd.f32 %v411, %v805
    %v844 = vadd.f32 %v522, %v809
    %v845 = vadd.f32 %v524, %v813
    %v846 = vadd.f32 %v413, %v801
    %v847 = vadd.f32 %v415, %v805
    %v848 = vadd.f32 %v526, %v809
    %v849 = vadd.f32 %v528, %v813
    %v850 = vadd.f32 %v419, %v801
    %v851 = vadd.f32 %v421, %v805
    %v852 = vadd.f32 %v532, %v809
    %v853 = vadd.f32 %v534, %v813
    %v854 = vadd.f32 %v423, %v801
    %v855 = vadd.f32 %v425, %v805
    %v856 = vadd.f32 %v536, %v809
    %v857 = vadd.f32 %v538, %v813
    %v858 = vadd.f32 %v429, %v801
    %v859 = vadd.f32 %v431, %v805
    %v860 = vadd.f32 %v542, %v809
    %v861 = vadd.f32 %v544, %v813
    %v862 = vadd.f32 %v433, %v801
    %v863 = vadd.f32 %v435, %v805
    %v864 = vadd.f32 %v546, %v809
    %v865 = vadd.f32 %v548, %v813
    %v866 = vadd.f32 %v439, %v801
    %v867 = vadd.f32 %v441, %v805
    %v868 = vadd.f32 %v552, %v809
    %v869 = vadd.f32 %v554, %v813
    %v870 = vadd.f32 %v443, %v801
    %v871 = vadd.f32 %v445, %v805
    %v872 = vadd.f32 %v556, %v809
    %v873 = vadd.f32 %v558, %v813
    %v874 = vadd.f32 %v449, %v801
    %v875 = vadd.f32 %v451, %v805
    %v876 = vadd.f32 %v562, %v809
    %v877 = vadd.f32 %v564, %v813
    %v878 = vadd.f32 %v453, %v801
    %v879 = vadd.f32 %v455, %v805
    %v880 = vadd.f32 %v566, %v809
    %v881 = vadd.f32 %v568, %v813
    %882 = vst [vmem:[#allocation2] sm:$0xff] %v818
    %883 = vst [vmem:[#allocation2 + $0x8] sm:$0xff] %v819
    %884 = vst [vmem:[#allocation2 + $0x10] sm:$0xff] %v820
    %885 = vst [vmem:[#allocation2 + $0x18] sm:$0xff] %v821
    %886 = vst [vmem:[#allocation2 + $0x20] sm:$0xff] %v822
    %887 = vst [vmem:[#allocation2 + $0x28] sm:$0xff] %v823
    %888 = vst [vmem:[#allocation2 + $0x30] sm:$0xff] %v824
    %889 = vst [vmem:[#allocation2 + $0x38] sm:$0xff] %v825
    %890 = vst [vmem:[#allocation2 + $0x40] sm:$0xff] %v826
    %891 = vst [vmem:[#allocation2 + $0x48] sm:$0xff] %v827
    %892 = vst [vmem:[#allocation2 + $0x50] sm:$0xff] %v828
    %893 = vst [vmem:[#allocation2 + $0x58] sm:$0xff] %v829
    %894 = vst [vmem:[#allocation2 + $0x60] sm:$0xff] %v830
    %895 = vst [vmem:[#allocation2 + $0x68] sm:$0xff] %v831
    %896 = vst [vmem:[#allocation2 + $0x70] sm:$0xff] %v832
    %897 = vst [vmem:[#allocation2 + $0x78] sm:$0xff] %v833
    %898 = vst [vmem:[#allocation2 + $0x80] sm:$0xff] %v834
    %899 = vst [vmem:[#allocation2 + $0x88] sm:$0xff] %v835
    %900 = vst [vmem:[#allocation2 + $0x90] sm:$0xff] %v836
    %901 = vst [vmem:[#allocation2 + $0x98] sm:$0xff] %v837
    %902 = vst [vmem:[#allocation2 + $0xa0] sm:$0xff] %v838
    %903 = vst [vmem:[#allocation2 + $0xa8] sm:$0xff] %v839
    %904 = vst [vmem:[#allocation2 + $0xb0] sm:$0xff] %v840
    %905 = vst [vmem:[#allocation2 + $0xb8] sm:$0xff] %v841
    %906 = vst [vmem:[#allocation2 + $0xc0] sm:$0xff] %v842
    %907 = vst [vmem:[#allocation2 + $0xc8] sm:$0xff] %v843
    %908 = vst [vmem:[#allocation2 + $0xd0] sm:$0xff] %v844
    %909 = vst [vmem:[#allocation2 + $0xd8] sm:$0xff] %v845
    %910 = vst [vmem:[#allocation2 + $0xe0] sm:$0xff] %v846
    %911 = vst [vmem:[#allocation2 + $0xe8] sm:$0xff] %v847
    %912 = vst [vmem:[#allocation2 + $0xf0] sm:$0xff] %v848
    %913 = vst [vmem:[#allocation2 + $0xf8] sm:$0xff] %v849
    %914 = vst [vmem:[#allocation2 + $0x100] sm:$0xff] %v850
    %915 = vst [vmem:[#allocation2 + $0x108] sm:$0xff] %v851
    %916 = vst [vmem:[#allocation2 + $0x110] sm:$0xff] %v852
    %917 = vst [vmem:[#allocation2 + $0x118] sm:$0xff] %v853
    %918 = vst [vmem:[#allocation2 + $0x120] sm:$0xff] %v854
    %919 = vst [vmem:[#allocation2 + $0x128] sm:$0xff] %v855
    %920 = vst [vmem:[#allocation2 + $0x130] sm:$0xff] %v856
    %921 = vst [vmem:[#allocation2 + $0x138] sm:$0xff] %v857
    %922 = vst [vmem:[#allocation2 + $0x140] sm:$0xff] %v858
    %923 = vst [vmem:[#allocation2 + $0x148] sm:$0xff] %v859
    %924 = vst [vmem:[#allocation2 + $0x150] sm:$0xff] %v860
    %925 = vst [vmem:[#allocation2 + $0x158] sm:$0xff] %v861
    %926 = vst [vmem:[#allocation2 + $0x160] sm:$0xff] %v862
    %927 = vst [vmem:[#allocation2 + $0x168] sm:$0xff] %v863
    %928 = vst [vmem:[#allocation2 + $0x170] sm:$0xff] %v864
    %929 = vst [vmem:[#allocation2 + $0x178] sm:$0xff] %v865
    %930 = vst [vmem:[#allocation2 + $0x180] sm:$0xff] %v866
    %931 = vst [vmem:[#allocation2 + $0x188] sm:$0xff] %v867
    %932 = vst [vmem:[#allocation2 + $0x190] sm:$0xff] %v868
    %933 = vst [vmem:[#allocation2 + $0x198] sm:$0xff] %v869
    %934 = vst [vmem:[#allocation2 + $0x1a0] sm:$0xff] %v870
    %935 = vst [vmem:[#allocation2 + $0x1a8] sm:$0xff] %v871
    %936 = vst [vmem:[#allocation2 + $0x1b0] sm:$0xff] %v872
    %937 = vst [vmem:[#allocation2 + $0x1b8] sm:$0xff] %v873
    %938 = vst [vmem:[#allocation2 + $0x1c0] sm:$0xff] %v874
    %939 = vst [vmem:[#allocation2 + $0x1c8] sm:$0xff] %v875
    %940 = vst [vmem:[#allocation2 + $0x1d0] sm:$0xff] %v876
    %941 = vst [vmem:[#allocation2 + $0x1d8] sm:$0xff] %v877
    %942 = vst [vmem:[#allocation2 + $0x1e0] sm:$0xff] %v878
    %943 = vst [vmem:[#allocation2 + $0x1e8] sm:$0xff] %v879
    %944 = vst [vmem:[#allocation2 + $0x1f0] sm:$0xff] %v880
    %945 = vst [vmem:[#allocation2 + $0x1f8] sm:$0xff] %v881
    %v946 = vld [vmem:[%s4] sm:$0xf]
    %v948 = vlaneseq
    %v949 = vshrl.u32 %v948, 7
    %v950 = vsub.s32 0, %v949
    %v951 = vrot.slane %v946, %v950
    %v952 = vlaneseq
    %v953 = vshrl.u32 %v952, 7
    %v954 = vsub.s32 1, %v953
    %v955 = vrot.slane %v946, %v954
    %v956 = vlaneseq
    %v957 = vshrl.u32 %v956, 7
    %v958 = vsub.s32 2, %v957
    %v959 = vrot.slane %v946, %v958
    %v960 = vlaneseq
    %v961 = vshrl.u32 %v960, 7
    %v962 = vsub.s32 3, %v961
    %v963 = vrot.slane %v946, %v962
    %v968 = vadd.f32 %v605, %v951
    %v969 = vadd.f32 %v607, %v955
    %v970 = vadd.f32 %v718, %v959
    %v971 = vadd.f32 %v720, %v963
    %v972 = vadd.f32 %v609, %v951
    %v973 = vadd.f32 %v611, %v955
    %v974 = vadd.f32 %v722, %v959
    %v975 = vadd.f32 %v724, %v963
    %v976 = vadd.f32 %v615, %v951
    %v977 = vadd.f32 %v617, %v955
    %v978 = vadd.f32 %v728, %v959
    %v979 = vadd.f32 %v730, %v963
    %v980 = vadd.f32 %v619, %v951
    %v981 = vadd.f32 %v621, %v955
    %v982 = vadd.f32 %v732, %v959
    %v983 = vadd.f32 %v734, %v963
    %v984 = vadd.f32 %v625, %v951
    %v985 = vadd.f32 %v627, %v955
    %v986 = vadd.f32 %v738, %v959
    %v987 = vadd.f32 %v740, %v963
    %v988 = vadd.f32 %v629, %v951
    %v989 = vadd.f32 %v631, %v955
    %v990 = vadd.f32 %v742, %v959
    %v991 = vadd.f32 %v744, %v963
    %v992 = vadd.f32 %v635, %v951
    %v993 = vadd.f32 %v637, %v955
    %v994 = vadd.f32 %v748, %v959
    %v995 = vadd.f32 %v750, %v963
    %v996 = vadd.f32 %v639, %v951
    %v997 = vadd.f32 %v641, %v955
    %v998 = vadd.f32 %v752, %v959
    %v999 = vadd.f32 %v754, %v963
    %v1000 = vadd.f32 %v645, %v951
    %v1001 = vadd.f32 %v647, %v955
    %v1002 = vadd.f32 %v758, %v959
    %v1003 = vadd.f32 %v760, %v963
    %v1004 = vadd.f32 %v649, %v951
    %v1005 = vadd.f32 %v651, %v955
    %v1006 = vadd.f32 %v762, %v959
    %v1007 = vadd.f32 %v764, %v963
    %v1008 = vadd.f32 %v655, %v951
    %v1009 = vadd.f32 %v657, %v955
    %v1010 = vadd.f32 %v768, %v959
    %v1011 = vadd.f32 %v770, %v963
    %v1012 = vadd.f32 %v659, %v951
    %v1013 = vadd.f32 %v661, %v955
    %v1014 = vadd.f32 %v772, %v959
    %v1015 = vadd.f32 %v774, %v963
    %v1016 = vadd.f32 %v665, %v951
    %v1017 = vadd.f32 %v667, %v955
    %v1018 = vadd.f32 %v778, %v959
    %v1019 = vadd.f32 %v780, %v963
    %v1020 = vadd.f32 %v669, %v951
    %v1021 = vadd.f32 %v671, %v955
    %v1022 = vadd.f32 %v782, %v959
    %v1023 = vadd.f32 %v784, %v963
    %v1024 = vadd.f32 %v675, %v951
    %v1025 = vadd.f32 %v677, %v955
    %v1026 = vadd.f32 %v788, %v959
    %v1027 = vadd.f32 %v790, %v963
    %v1028 = vadd.f32 %v679, %v951
    %v1029 = vadd.f32 %v681, %v955
    %v1030 = vadd.f32 %v792, %v959
    %v1031 = vadd.f32 %v794, %v963
    %1032 = vst [vmem:[#allocation3] sm:$0xff] %v968
    %1033 = vst [vmem:[#allocation3 + $0x8] sm:$0xff] %v969
    %1034 = vst [vmem:[#allocation3 + $0x10] sm:$0xff] %v970
    %1035 = vst [vmem:[#allocation3 + $0x18] sm:$0xff] %v971
    %1036 = vst [vmem:[#allocation3 + $0x20] sm:$0xff] %v972
    %1037 = vst [vmem:[#allocation3 + $0x28] sm:$0xff] %v973
    %1038 = vst [vmem:[#allocation3 + $0x30] sm:$0xff] %v974
    %1039 = vst [vmem:[#allocation3 + $0x38] sm:$0xff] %v975
    %1040 = vst [vmem:[#allocation3 + $0x40] sm:$0xff] %v976
    %1041 = vst [vmem:[#allocation3 + $0x48] sm:$0xff] %v977
    %1042 = vst [vmem:[#allocation3 + $0x50] sm:$0xff] %v978
    %1043 = vst [vmem:[#allocation3 + $0x58] sm:$0xff] %v979
    %1044 = vst [vmem:[#allocation3 + $0x60] sm:$0xff] %v980
    %1045 = vst [vmem:[#allocation3 + $0x68] sm:$0xff] %v981
    %1046 = vst [vmem:[#allocation3 + $0x70] sm:$0xff] %v982
    %1047 = vst [vmem:[#allocation3 + $0x78] sm:$0xff] %v983
    %1048 = vst [vmem:[#allocation3 + $0x80] sm:$0xff] %v984
    %1049 = vst [vmem:[#allocation3 + $0x88] sm:$0xff] %v985
    %1050 = vst [vmem:[#allocation3 + $0x90] sm:$0xff] %v986
    %1051 = vst [vmem:[#allocation3 + $0x98] sm:$0xff] %v987
    %1052 = vst [vmem:[#allocation3 + $0xa0] sm:$0xff] %v988
    %1053 = vst [vmem:[#allocation3 + $0xa8] sm:$0xff] %v989
    %1054 = vst [vmem:[#allocation3 + $0xb0] sm:$0xff] %v990
    %1055 = vst [vmem:[#allocation3 + $0xb8] sm:$0xff] %v991
    %1056 = vst [vmem:[#allocation3 + $0xc0] sm:$0xff] %v992
    %1057 = vst [vmem:[#allocation3 + $0xc8] sm:$0xff] %v993
    %1058 = vst [vmem:[#allocation3 + $0xd0] sm:$0xff] %v994
    %1059 = vst [vmem:[#allocation3 + $0xd8] sm:$0xff] %v995
    %1060 = vst [vmem:[#allocation3 + $0xe0] sm:$0xff] %v996
    %1061 = vst [vmem:[#allocation3 + $0xe8] sm:$0xff] %v997
    %1062 = vst [vmem:[#allocation3 + $0xf0] sm:$0xff] %v998
    %1063 = vst [vmem:[#allocation3 + $0xf8] sm:$0xff] %v999
    %1064 = vst [vmem:[#allocation3 + $0x100] sm:$0xff] %v1000
    %1065 = vst [vmem:[#allocation3 + $0x108] sm:$0xff] %v1001
    %1066 = vst [vmem:[#allocation3 + $0x110] sm:$0xff] %v1002
    %1067 = vst [vmem:[#allocation3 + $0x118] sm:$0xff] %v1003
    %1068 = vst [vmem:[#allocation3 + $0x120] sm:$0xff] %v1004
    %1069 = vst [vmem:[#allocation3 + $0x128] sm:$0xff] %v1005
    %1070 = vst [vmem:[#allocation3 + $0x130] sm:$0xff] %v1006
    %1071 = vst [vmem:[#allocation3 + $0x138] sm:$0xff] %v1007
    %1072 = vst [vmem:[#allocation3 + $0x140] sm:$0xff] %v1008
    %1073 = vst [vmem:[#allocation3 + $0x148] sm:$0xff] %v1009
    %1074 = vst [vmem:[#allocation3 + $0x150] sm:$0xff] %v1010
    %1075 = vst [vmem:[#allocation3 + $0x158] sm:$0xff] %v1011
    %1076 = vst [vmem:[#allocation3 + $0x160] sm:$0xff] %v1012
    %1077 = vst [vmem:[#allocation3 + $0x168] sm:$0xff] %v1013
    %1078 = vst [vmem:[#allocation3 + $0x170] sm:$0xff] %v1014
    %1079 = vst [vmem:[#allocation3 + $0x178] sm:$0xff] %v1015
    %1080 = vst [vmem:[#allocation3 + $0x180] sm:$0xff] %v1016
    %1081 = vst [vmem:[#allocation3 + $0x188] sm:$0xff] %v1017
    %1082 = vst [vmem:[#allocation3 + $0x190] sm:$0xff] %v1018
    %1083 = vst [vmem:[#allocation3 + $0x198] sm:$0xff] %v1019
    %1084 = vst [vmem:[#allocation3 + $0x1a0] sm:$0xff] %v1020
    %1085 = vst [vmem:[#allocation3 + $0x1a8] sm:$0xff] %v1021
    %1086 = vst [vmem:[#allocation3 + $0x1b0] sm:$0xff] %v1022
    %1087 = vst [vmem:[#allocation3 + $0x1b8] sm:$0xff] %v1023
    %1088 = vst [vmem:[#allocation3 + $0x1c0] sm:$0xff] %v1024
    %1089 = vst [vmem:[#allocation3 + $0x1c8] sm:$0xff] %v1025
    %1090 = vst [vmem:[#allocation3 + $0x1d0] sm:$0xff] %v1026
    %1091 = vst [vmem:[#allocation3 + $0x1d8] sm:$0xff] %v1027
    %1092 = vst [vmem:[#allocation3 + $0x1e0] sm:$0xff] %v1028
    %1093 = vst [vmem:[#allocation3 + $0x1e8] sm:$0xff] %v1029
    %1094 = vst [vmem:[#allocation3 + $0x1f0] sm:$0xff] %v1030
    %1095 = vst [vmem:[#allocation3 + $0x1f8] sm:$0xff] %v1031
    %v1096 = vld [vmem:[%s2] sm:$0xff]
    %v1097 = vld [vmem:[%s2 + $0x8] sm:$0xff]
    %v1098 = vld [vmem:[%s2 + $0x10] sm:$0xff]
    %v1099 = vld [vmem:[%s2 + $0x18] sm:$0xff]
    %v1100 = vld [vmem:[%s2 + $0x20] sm:$0xff]
    %v1101 = vld [vmem:[%s2 + $0x28] sm:$0xff]
    %v1102 = vld [vmem:[%s2 + $0x30] sm:$0xff]
    %v1103 = vld [vmem:[%s2 + $0x38] sm:$0xff]
    %v1104 = vld [vmem:[%s2 + $0x40] sm:$0xff]
    %v1105 = vld [vmem:[%s2 + $0x48] sm:$0xff]
    %v1106 = vld [vmem:[%s2 + $0x50] sm:$0xff]
    %v1107 = vld [vmem:[%s2 + $0x58] sm:$0xff]
    %v1108 = vld [vmem:[%s2 + $0x60] sm:$0xff]
    %v1109 = vld [vmem:[%s2 + $0x68] sm:$0xff]
    %v1110 = vld [vmem:[%s2 + $0x70] sm:$0xff]
    %v1111 = vld [vmem:[%s2 + $0x78] sm:$0xff]
    %v1112 = vld [vmem:[%s2 + $0x80] sm:$0xff]
    %v1113 = vld [vmem:[%s2 + $0x88] sm:$0xff]
    %v1114 = vld [vmem:[%s2 + $0x90] sm:$0xff]
    %v1115 = vld [vmem:[%s2 + $0x98] sm:$0xff]
    %v1116 = vld [vmem:[%s2 + $0xa0] sm:$0xff]
    %v1117 = vld [vmem:[%s2 + $0xa8] sm:$0xff]
    %v1118 = vld [vmem:[%s2 + $0xb0] sm:$0xff]
    %v1119 = vld [vmem:[%s2 + $0xb8] sm:$0xff]
    %v1120 = vld [vmem:[%s2 + $0xc0] sm:$0xff]
    %v1121 = vld [vmem:[%s2 + $0xc8] sm:$0xff]
    %v1122 = vld [vmem:[%s2 + $0xd0] sm:$0xff]
    %v1123 = vld [vmem:[%s2 + $0xd8] sm:$0xff]
    %v1124 = vld [vmem:[%s2 + $0xe0] sm:$0xff]
    %v1125 = vld [vmem:[%s2 + $0xe8] sm:$0xff]
    %v1126 = vld [vmem:[%s2 + $0xf0] sm:$0xff]
    %v1127 = vld [vmem:[%s2 + $0xf8] sm:$0xff]
    %v1128 = vld [vmem:[%s2 + $0x100] sm:$0xff]
    %v1129 = vld [vmem:[%s2 + $0x108] sm:$0xff]
    %v1130 = vld [vmem:[%s2 + $0x110] sm:$0xff]
    %v1131 = vld [vmem:[%s2 + $0x118] sm:$0xff]
    %v1132 = vld [vmem:[%s2 + $0x120] sm:$0xff]
    %v1133 = vld [vmem:[%s2 + $0x128] sm:$0xff]
    %v1134 = vld [vmem:[%s2 + $0x130] sm:$0xff]
    %v1135 = vld [vmem:[%s2 + $0x138] sm:$0xff]
    %v1136 = vld [vmem:[%s2 + $0x140] sm:$0xff]
    %v1137 = vld [vmem:[%s2 + $0x148] sm:$0xff]
    %v1138 = vld [vmem:[%s2 + $0x150] sm:$0xff]
    %v1139 = vld [vmem:[%s2 + $0x158] sm:$0xff]
    %v1140 = vld [vmem:[%s2 + $0x160] sm:$0xff]
    %v1141 = vld [vmem:[%s2 + $0x168] sm:$0xff]
    %v1142 = vld [vmem:[%s2 + $0x170] sm:$0xff]
    %v1143 = vld [vmem:[%s2 + $0x178] sm:$0xff]
    %v1144 = vld [vmem:[%s2 + $0x180] sm:$0xff]
    %v1145 = vld [vmem:[%s2 + $0x188] sm:$0xff]
    %v1146 = vld [vmem:[%s2 + $0x190] sm:$0xff]
    %v1147 = vld [vmem:[%s2 + $0x198] sm:$0xff]
    %v1148 = vld [vmem:[%s2 + $0x1a0] sm:$0xff]
    %v1149 = vld [vmem:[%s2 + $0x1a8] sm:$0xff]
    %v1150 = vld [vmem:[%s2 + $0x1b0] sm:$0xff]
    %v1151 = vld [vmem:[%s2 + $0x1b8] sm:$0xff]
    %v1152 = vld [vmem:[%s2 + $0x1c0] sm:$0xff]
    %v1153 = vld [vmem:[%s2 + $0x1c8] sm:$0xff]
    %v1154 = vld [vmem:[%s2 + $0x1d0] sm:$0xff]
    %v1155 = vld [vmem:[%s2 + $0x1d8] sm:$0xff]
    %v1156 = vld [vmem:[%s2 + $0x1e0] sm:$0xff]
    %v1157 = vld [vmem:[%s2 + $0x1e8] sm:$0xff]
    %v1158 = vld [vmem:[%s2 + $0x1f0] sm:$0xff]
    %v1159 = vld [vmem:[%s2 + $0x1f8] sm:$0xff]
    %v1160 = vlaneseq
    %v1161 = vshrl.u32 %v1160, 7
    %v1162 = vadd.s32 %v1161, 8
    %vm1163 = vcmp.lt.s32.totalorder %v1161, 8
    %vm1164 = vcmp.lt.s32.totalorder %v1162, 8
    %v1165 = vsel %vm1163, 1, 0
    %v1166 = vsel %vm1164, 1, 0
    %v1167 = vcvt.s32.f32 %v1165
    %v1168 = vcvt.s32.f32 %v1166
    %s1169 = smul.u32 0, 4
    %s1170 = smul.addr %s1169, 8
    %s1171 = scalar_lea.vmem [#allocation2], %s1170
    %v1172 = vld [vmem:[%s1171] sm:$0xff]
    %v1173 = vld [vmem:[%s1171 + $0x8] sm:$0xff]
    %v1174 = vld [vmem:[%s1171 + $0x10] sm:$0xff]
    %v1175 = vld [vmem:[%s1171 + $0x18] sm:$0xff]
    %s1176 = smul.u32 15, 4
    %s1177 = smul.addr %s1176, 8
    %s1178 = scalar_lea.vmem [#allocation3], %s1177
    %v1179 = vld [vmem:[%s1178] sm:$0xff]
    %v1180 = vld [vmem:[%s1178 + $0x8] sm:$0xff]
    %v1181 = vld [vmem:[%s1178 + $0x10] sm:$0xff]
    %v1182 = vld [vmem:[%s1178 + $0x18] sm:$0xff]
    %v1183 = vmul.f32 %v1167, 0.0
    %v1184 = vmul.f32 %v1168, 0.0
    %v1185 = vsub.f32 1.0, %v1167
    %v1186 = vsub.f32 1.0, %v1168
    %v1187 = vmul.f32 %v1185, 0.0
    %v1188 = vmul.f32 %v1186, 0.0
    %v1189 = vpack.c.bf16 %v1184, %v1183
    %v1190 = vpack.c.bf16 %v1188, %v1187
    %v1255 = vunpack.c.l.b16 %v1096
    %v1256 = vunpack.c.h.b16 %v1096
    %v1257 = vunpack.c.l.b16 %v1097
    %v1258 = vunpack.c.h.b16 %v1097
    %v1259 = vunpack.c.l.b16 %v1098
    %v1260 = vunpack.c.h.b16 %v1098
    %v1261 = vunpack.c.l.b16 %v1099
    %v1262 = vunpack.c.h.b16 %v1099
    %v1263 = vunpack.c.l.b16 %v1100
    %v1264 = vunpack.c.h.b16 %v1100
    %v1265 = vunpack.c.l.b16 %v1101
    %v1266 = vunpack.c.h.b16 %v1101
    %v1267 = vunpack.c.l.b16 %v1102
    %v1268 = vunpack.c.h.b16 %v1102
    %v1269 = vunpack.c.l.b16 %v1103
    %v1270 = vunpack.c.h.b16 %v1103
    %v1271 = vunpack.c.l.b16 %v1104
    %v1272 = vunpack.c.h.b16 %v1104
    %v1273 = vunpack.c.l.b16 %v1105
    %v1274 = vunpack.c.h.b16 %v1105
    %v1275 = vunpack.c.l.b16 %v1106
    %v1276 = vunpack.c.h.b16 %v1106
    %v1277 = vunpack.c.l.b16 %v1107
    %v1278 = vunpack.c.h.b16 %v1107
    %v1279 = vunpack.c.l.b16 %v1108
    %v1280 = vunpack.c.h.b16 %v1108
    %v1281 = vunpack.c.l.b16 %v1109
    %v1282 = vunpack.c.h.b16 %v1109
    %v1283 = vunpack.c.l.b16 %v1110
    %v1284 = vunpack.c.h.b16 %v1110
    %v1285 = vunpack.c.l.b16 %v1111
    %v1286 = vunpack.c.h.b16 %v1111
    %v1287 = vunpack.c.l.b16 %v1112
    %v1288 = vunpack.c.h.b16 %v1112
    %v1289 = vunpack.c.l.b16 %v1113
    %v1290 = vunpack.c.h.b16 %v1113
    %v1291 = vunpack.c.l.b16 %v1114
    %v1292 = vunpack.c.h.b16 %v1114
    %v1293 = vunpack.c.l.b16 %v1115
    %v1294 = vunpack.c.h.b16 %v1115
    %v1295 = vunpack.c.l.b16 %v1116
    %v1296 = vunpack.c.h.b16 %v1116
    %v1297 = vunpack.c.l.b16 %v1117
    %v1298 = vunpack.c.h.b16 %v1117
    %v1299 = vunpack.c.l.b16 %v1118
    %v1300 = vunpack.c.h.b16 %v1118
    %v1301 = vunpack.c.l.b16 %v1119
    %v1302 = vunpack.c.h.b16 %v1119
    %v1303 = vunpack.c.l.b16 %v1120
    %v1304 = vunpack.c.h.b16 %v1120
    %v1305 = vunpack.c.l.b16 %v1121
    %v1306 = vunpack.c.h.b16 %v1121
    %v1307 = vunpack.c.l.b16 %v1122
    %v1308 = vunpack.c.h.b16 %v1122
    %v1309 = vunpack.c.l.b16 %v1123
    %v1310 = vunpack.c.h.b16 %v1123
    %v1311 = vunpack.c.l.b16 %v1124
    %v1312 = vunpack.c.h.b16 %v1124
    %v1313 = vunpack.c.l.b16 %v1125
    %v1314 = vunpack.c.h.b16 %v1125
    %v1315 = vunpack.c.l.b16 %v1126
    %v1316 = vunpack.c.h.b16 %v1126
    %v1317 = vunpack.c.l.b16 %v1127
    %v1318 = vunpack.c.h.b16 %v1127
    %v1319 = vunpack.c.l.b16 %v1128
    %v1320 = vunpack.c.h.b16 %v1128
    %v1321 = vunpack.c.l.b16 %v1129
    %v1322 = vunpack.c.h.b16 %v1129
    %v1323 = vunpack.c.l.b16 %v1130
    %v1324 = vunpack.c.h.b16 %v1130
    %v1325 = vunpack.c.l.b16 %v1131
    %v1326 = vunpack.c.h.b16 %v1131
    %v1327 = vunpack.c.l.b16 %v1132
    %v1328 = vunpack.c.h.b16 %v1132
    %v1329 = vunpack.c.l.b16 %v1133
    %v1330 = vunpack.c.h.b16 %v1133
    %v1331 = vunpack.c.l.b16 %v1134
    %v1332 = vunpack.c.h.b16 %v1134
    %v1333 = vunpack.c.l.b16 %v1135
    %v1334 = vunpack.c.h.b16 %v1135
    %v1335 = vunpack.c.l.b16 %v1136
    %v1336 = vunpack.c.h.b16 %v1136
    %v1337 = vunpack.c.l.b16 %v1137
    %v1338 = vunpack.c.h.b16 %v1137
    %v1339 = vunpack.c.l.b16 %v1138
    %v1340 = vunpack.c.h.b16 %v1138
    %v1341 = vunpack.c.l.b16 %v1139
    %v1342 = vunpack.c.h.b16 %v1139
    %v1343 = vunpack.c.l.b16 %v1140
    %v1344 = vunpack.c.h.b16 %v1140
    %v1345 = vunpack.c.l.b16 %v1141
    %v1346 = vunpack.c.h.b16 %v1141
    %v1347 = vunpack.c.l.b16 %v1142
    %v1348 = vunpack.c.h.b16 %v1142
    %v1349 = vunpack.c.l.b16 %v1143
    %v1350 = vunpack.c.h.b16 %v1143
    %v1351 = vunpack.c.l.b16 %v1144
    %v1352 = vunpack.c.h.b16 %v1144
    %v1353 = vunpack.c.l.b16 %v1145
    %v1354 = vunpack.c.h.b16 %v1145
    %v1355 = vunpack.c.l.b16 %v1146
    %v1356 = vunpack.c.h.b16 %v1146
    %v1357 = vunpack.c.l.b16 %v1147
    %v1358 = vunpack.c.h.b16 %v1147
    %v1359 = vunpack.c.l.b16 %v1148
    %v1360 = vunpack.c.h.b16 %v1148
    %v1361 = vunpack.c.l.b16 %v1149
    %v1362 = vunpack.c.h.b16 %v1149
    %v1363 = vunpack.c.l.b16 %v1150
    %v1364 = vunpack.c.h.b16 %v1150
    %v1365 = vunpack.c.l.b16 %v1151
    %v1366 = vunpack.c.h.b16 %v1151
    %v1367 = vunpack.c.l.b16 %v1152
    %v1368 = vunpack.c.h.b16 %v1152
    %v1369 = vunpack.c.l.b16 %v1153
    %v1370 = vunpack.c.h.b16 %v1153
    %v1371 = vunpack.c.l.b16 %v1154
    %v1372 = vunpack.c.h.b16 %v1154
    %v1373 = vunpack.c.l.b16 %v1155
    %v1374 = vunpack.c.h.b16 %v1155
    %v1375 = vunpack.c.l.b16 %v1156
    %v1376 = vunpack.c.h.b16 %v1156
    %v1377 = vunpack.c.l.b16 %v1157
    %v1378 = vunpack.c.h.b16 %v1157
    %v1379 = vunpack.c.l.b16 %v1158
    %v1380 = vunpack.c.h.b16 %v1158
    %v1381 = vunpack.c.l.b16 %v1159
    %v1382 = vunpack.c.h.b16 %v1159
    %v1383 = vpack.c.b16 %v1259, %v1255
    %v1384 = vpack.c.b16 %v1260, %v1256
    %v1385 = vpack.c.b16 %v1261, %v1257
    %v1386 = vpack.c.b16 %v1262, %v1258
    %v1387 = vpack.c.b16 %v1267, %v1263
    %v1388 = vpack.c.b16 %v1268, %v1264
    %v1389 = vpack.c.b16 %v1269, %v1265
    %v1390 = vpack.c.b16 %v1270, %v1266
    %v1391 = vpack.c.b16 %v1275, %v1271
    %v1392 = vpack.c.b16 %v1276, %v1272
    %v1393 = vpack.c.b16 %v1277, %v1273
    %v1394 = vpack.c.b16 %v1278, %v1274
    %v1395 = vpack.c.b16 %v1283, %v1279
    %v1396 = vpack.c.b16 %v1284, %v1280
    %v1397 = vpack.c.b16 %v1285, %v1281
    %v1398 = vpack.c.b16 %v1286, %v1282
    %v1399 = vpack.c.b16 %v1291, %v1287
    %v1400 = vpack.c.b16 %v1292, %v1288
    %v1401 = vpack.c.b16 %v1293, %v1289
    %v1402 = vpack.c.b16 %v1294, %v1290
    %v1403 = vpack.c.b16 %v1299, %v1295
    %v1404 = vpack.c.b16 %v1300, %v1296
    %v1405 = vpack.c.b16 %v1301, %v1297
    %v1406 = vpack.c.b16 %v1302, %v1298
    %v1407 = vpack.c.b16 %v1307, %v1303
    %v1408 = vpack.c.b16 %v1308, %v1304
    %v1409 = vpack.c.b16 %v1309, %v1305
    %v1410 = vpack.c.b16 %v1310, %v1306
    %v1411 = vpack.c.b16 %v1315, %v1311
    %v1412 = vpack.c.b16 %v1316, %v1312
    %v1413 = vpack.c.b16 %v1317, %v1313
    %v1414 = vpack.c.b16 %v1318, %v1314
    %v1415 = vpack.c.b16 %v1323, %v1319
    %v1416 = vpack.c.b16 %v1324, %v1320
    %v1417 = vpack.c.b16 %v1325, %v1321
    %v1418 = vpack.c.b16 %v1326, %v1322
    %v1419 = vpack.c.b16 %v1331, %v1327
    %v1420 = vpack.c.b16 %v1332, %v1328
    %v1421 = vpack.c.b16 %v1333, %v1329
    %v1422 = vpack.c.b16 %v1334, %v1330
    %v1423 = vpack.c.b16 %v1339, %v1335
    %v1424 = vpack.c.b16 %v1340, %v1336
    %v1425 = vpack.c.b16 %v1341, %v1337
    %v1426 = vpack.c.b16 %v1342, %v1338
    %v1427 = vpack.c.b16 %v1347, %v1343
    %v1428 = vpack.c.b16 %v1348, %v1344
    %v1429 = vpack.c.b16 %v1349, %v1345
    %v1430 = vpack.c.b16 %v1350, %v1346
    %v1431 = vpack.c.b16 %v1355, %v1351
    %v1432 = vpack.c.b16 %v1356, %v1352
    %v1433 = vpack.c.b16 %v1357, %v1353
    %v1434 = vpack.c.b16 %v1358, %v1354
    %v1435 = vpack.c.b16 %v1363, %v1359
    %v1436 = vpack.c.b16 %v1364, %v1360
    %v1437 = vpack.c.b16 %v1365, %v1361
    %v1438 = vpack.c.b16 %v1366, %v1362
    %v1439 = vpack.c.b16 %v1371, %v1367
    %v1440 = vpack.c.b16 %v1372, %v1368
    %v1441 = vpack.c.b16 %v1373, %v1369
    %v1442 = vpack.c.b16 %v1374, %v1370
    %v1443 = vpack.c.b16 %v1379, %v1375
    %v1444 = vpack.c.b16 %v1380, %v1376
    %v1445 = vpack.c.b16 %v1381, %v1377
    %v1446 = vpack.c.b16 %v1382, %v1378
    %1511 = vmatprep.subr.bf16.mxu0 %v1412
    %1512 = vmatpush1.bf16.msra.mxu0 %v1411
    %1513 = vmatprep.subr.bf16.mxu0 %v1408
    %1514 = vmatpush1.bf16.msra.mxu0 %v1407
    %1515 = vmatprep.subr.bf16.mxu0 %v1404
    %1516 = vmatpush1.bf16.msra.mxu0 %v1403
    %1517 = vmatprep.subr.bf16.mxu0 %v1400
    %1518 = vmatpush1.bf16.msra.mxu0 %v1399
    %1519 = vmatprep.subr.bf16.mxu0 %v1396
    %1520 = vmatpush1.bf16.msra.mxu0 %v1395
    %1521 = vmatprep.subr.bf16.mxu0 %v1392
    %1522 = vmatpush1.bf16.msra.mxu0 %v1391
    %1523 = vmatprep.subr.bf16.mxu0 %v1388
    %1524 = vmatpush1.bf16.msra.mxu0 %v1387
    %1525 = vmatprep.subr.bf16.mxu0 %v1384
    %1526 = vmatpush1.bf16.msra.mxu0 %v1383
    %1527 = vmatprep.subr.bf16.mxu0 %v1444
    %1528 = vmatpush2.bf16.msra.mxu0 %v1443
    %1529 = vmatprep.subr.bf16.mxu0 %v1440
    %1530 = vmatpush2.bf16.msra.mxu0 %v1439
    %1531 = vmatprep.subr.bf16.mxu0 %v1436
    %1532 = vmatpush2.bf16.msra.mxu0 %v1435
    %1533 = vmatprep.subr.bf16.mxu0 %v1432
    %1534 = vmatpush2.bf16.msra.mxu0 %v1431
    %1535 = vmatprep.subr.bf16.mxu0 %v1428
    %1536 = vmatpush2.bf16.msra.mxu0 %v1427
    %1537 = vmatprep.subr.bf16.mxu0 %v1424
    %1538 = vmatpush2.bf16.msra.mxu0 %v1423
    %1539 = vmatprep.subr.bf16.mxu0 %v1420
    %1540 = vmatpush2.bf16.msra.mxu0 %v1419
    %1541 = vmatprep.subr.bf16.mxu0 %v1416
    %1542 = vmatpush2.bf16.msra.mxu0 %v1415
    %1543 = vmatprep.mubr.bf16.mxu0 %v1190
    %1544 = vmatmul.mubr.bf16.gmra.mxu0 %v1189
    %v1545 = vpop.f32.mrf.mxu0
    %v1546 = vadd.f32 0.0, %v1545
    %v1547 = vpop.f32.mrf.mxu0
    %v1548 = vadd.f32 0.0, %v1547
    %v1549 = vpop.f32.mrf.mxu0
    %v1550 = vadd.f32 0.0, %v1549
    %v1551 = vpop.f32.mrf.mxu0
    %v1552 = vadd.f32 0.0, %v1551
    %1553 = vdwg.mxu0
    %1554 = vmatprep.subr.bf16.mxu0 %v1414
    %1555 = vmatpush1.bf16.msra.mxu0 %v1413
    %1556 = vmatprep.subr.bf16.mxu0 %v1410
    %1557 = vmatpush1.bf16.msra.mxu0 %v1409
    %1558 = vmatprep.subr.bf16.mxu0 %v1406
    %1559 = vmatpush1.bf16.msra.mxu0 %v1405
    %1560 = vmatprep.subr.bf16.mxu0 %v1402
    %1561 = vmatpush1.bf16.msra.mxu0 %v1401
    %1562 = vmatprep.subr.bf16.mxu0 %v1398
    %1563 = vmatpush1.bf16.msra.mxu0 %v1397
    %1564 = vmatprep.subr.bf16.mxu0 %v1394
    %1565 = vmatpush1.bf16.msra.mxu0 %v1393
    %1566 = vmatprep.subr.bf16.mxu0 %v1390
    %1567 = vmatpush1.bf16.msra.mxu0 %v1389
    %1568 = vmatprep.subr.bf16.mxu0 %v1386
    %1569 = vmatpush1.bf16.msra.mxu0 %v1385
    %1570 = vmatprep.subr.bf16.mxu0 %v1446
    %1571 = vmatpush2.bf16.msra.mxu0 %v1445
    %1572 = vmatprep.subr.bf16.mxu0 %v1442
    %1573 = vmatpush2.bf16.msra.mxu0 %v1441
    %1574 = vmatprep.subr.bf16.mxu0 %v1438
    %1575 = vmatpush2.bf16.msra.mxu0 %v1437
    %1576 = vmatprep.subr.bf16.mxu0 %v1434
    %1577 = vmatpush2.bf16.msra.mxu0 %v1433
    %1578 = vmatprep.subr.bf16.mxu0 %v1430
    %1579 = vmatpush2.bf16.msra.mxu0 %v1429
    %1580 = vmatprep.subr.bf16.mxu0 %v1426
    %1581 = vmatpush2.bf16.msra.mxu0 %v1425
    %1582 = vmatprep.subr.bf16.mxu0 %v1422
    %1583 = vmatpush2.bf16.msra.mxu0 %v1421
    %1584 = vmatprep.subr.bf16.mxu0 %v1418
    %1585 = vmatpush2.bf16.msra.mxu0 %v1417
    %1586 = vmatprep.mubr.bf16.mxu0 %v1190
    %1587 = vmatmul.mubr.bf16.gmra.mxu0 %v1189
    %v1588 = vpop.f32.mrf.mxu0
    %v1589 = vadd.f32 0.0, %v1588
    %v1590 = vpop.f32.mrf.mxu0
    %v1591 = vadd.f32 0.0, %v1590
    %v1592 = vpop.f32.mrf.mxu0
    %v1593 = vadd.f32 0.0, %v1592
    %v1594 = vpop.f32.mrf.mxu0
    %v1595 = vadd.f32 0.0, %v1594
    %1596 = vdwg.mxu0
    %v1597 = vadd.f32 %v1172, %v1546
    %v1598 = vadd.f32 %v1173, %v1548
    %v1599 = vadd.f32 %v1174, %v1589
    %v1600 = vadd.f32 %v1175, %v1591
    %v1601 = vadd.f32 %v1179, %v1550
    %v1602 = vadd.f32 %v1180, %v1552
    %v1603 = vadd.f32 %v1181, %v1593
    %v1604 = vadd.f32 %v1182, %v1595
    %v1605 = vxor.u32 %v1597, 2147483648
    %v1606 = vxor.u32 %v1601, 2147483648
    %v1607 = vmul.f32 %v1605, 1.442695
    %v1608 = vpow.pop %v1607
    %v1609 = vmul.f32 %v1606, 1.442695
    %v1610 = vpow.pop %v1609
    %v1611 = vadd.f32 %v1608, 1.0
    %v1612 = vadd.f32 %v1610, 1.0
    %v1613 = vrcp.pop %v1611
    %v1614 = vmul.f32 1.0, %v1613
    %v1615 = vrcp.pop %v1612
    %v1616 = vmul.f32 1.0, %v1615
    %v1617 = vxor.u32 %v1598, 2147483648
    %v1618 = vxor.u32 %v1602, 2147483648
    %v1619 = vmul.f32 %v1617, 1.442695
    %v1620 = vpow.pop %v1619
    %v1621 = vmul.f32 %v1618, 1.442695
    %v1622 = vpow.pop %v1621
    %v1623 = vadd.f32 %v1620, 1.0
    %v1624 = vadd.f32 %v1622, 1.0
    %v1625 = vrcp.pop %v1623
    %v1626 = vmul.f32 1.0, %v1625
    %v1627 = vrcp.pop %v1624
    %v1628 = vmul.f32 1.0, %v1627
    %v1629 = vtanh.pop %v1599
    %v1630 = vtanh.pop %v1603
    %v1631 = vxor.u32 %v1600, 2147483648
    %v1632 = vxor.u32 %v1604, 2147483648
    %v1633 = vmul.f32 %v1631, 1.442695
    %v1634 = vpow.pop %v1633
    %v1635 = vmul.f32 %v1632, 1.442695
    %v1636 = vpow.pop %v1635
    %v1637 = vadd.f32 %v1634, 1.0
    %v1638 = vadd.f32 %v1636, 1.0
    %v1639 = vrcp.pop %v1637
    %v1640 = vmul.f32 1.0, %v1639
    %v1641 = vrcp.pop %v1638
    %v1642 = vmul.f32 1.0, %v1641
    %v1643 = vmul.f32 %v1626, 0.0
    %v1644 = vmul.f32 %v1628, 0.0
    %v1645 = vmul.f32 %v1614, %v1629
    %v1646 = vmul.f32 %v1616, %v1630
    %v1647 = vadd.f32 %v1643, %v1645
    %v1648 = vadd.f32 %v1644, %v1646
    %v1649 = vtanh.pop %v1647
    %v1650 = vtanh.pop %v1648
    %v1651 = vmul.f32 %v1640, %v1649
    %v1652 = vmul.f32 %v1642, %v1650
    %v1653 = vadd.f32 %v1651, 0.0
    %v1654 = vadd.f32 %v1652, 0.0
    %v1655 = vmul.f32 %v1651, %v1651
    %v1656 = vmul.f32 %v1652, %v1652
    %v1657 = vadd.f32 %v1655, 0.0
    %v1658 = vadd.f32 %v1656, 0.0
    %s1659 = smul.u32 1, 4
    %s1660 = smul.addr %s1659, 8
    %s1661 = scalar_lea.vmem [#allocation2], %s1660
    %v1662 = vld [vmem:[%s1661] sm:$0xff]
    %v1663 = vld [vmem:[%s1661 + $0x8] sm:$0xff]
    %v1664 = vld [vmem:[%s1661 + $0x10] sm:$0xff]
    %v1665 = vld [vmem:[%s1661 + $0x18] sm:$0xff]
    %s1666 = smul.u32 14, 4
    %s1667 = smul.addr %s1666, 8
    %s1668 = scalar_lea.vmem [#allocation3], %s1667
    %v1669 = vld [vmem:[%s1668] sm:$0xff]
    %v1670 = vld [vmem:[%s1668 + $0x8] sm:$0xff]
    %v1671 = vld [vmem:[%s1668 + $0x10] sm:$0xff]
    %v1672 = vld [vmem:[%s1668 + $0x18] sm:$0xff]
    %v1673 = vmul.f32 %v1651, %v1167
    %v1674 = vmul.f32 %v1652, %v1168
    %v1675 = vmul.f32 %v1651, %v1185
    %v1676 = vmul.f32 %v1652, %v1186
    %v1677 = vpack.c.bf16 %v1674, %v1673
    %v1678 = vpack.c.bf16 %v1676, %v1675
    %1679 = vmatprep.subr.bf16.mxu0 %v1412
    %1680 = vmatpush1.bf16.msra.mxu0 %v1411
    %1681 = vmatprep.subr.bf16.mxu0 %v1408
    %1682 = vmatpush1.bf16.msra.mxu0 %v1407
    %1683 = vmatprep.subr.bf16.mxu0 %v1404
    %1684 = vmatpush1.bf16.msra.mxu0 %v1403
    %1685 = vmatprep.subr.bf16.mxu0 %v1400
    %1686 = vmatpush1.bf16.msra.mxu0 %v1399
    %1687 = vmatprep.subr.bf16.mxu0 %v1396
    %1688 = vmatpush1.bf16.msra.mxu0 %v1395
    %1689 = vmatprep.subr.bf16.mxu0 %v1392
    %1690 = vmatpush1.bf16.msra.mxu0 %v1391
    %1691 = vmatprep.subr.bf16.mxu0 %v1388
    %1692 = vmatpush1.bf16.msra.mxu0 %v1387
    %1693 = vmatprep.subr.bf16.mxu0 %v1384
    %1694 = vmatpush1.bf16.msra.mxu0 %v1383
    %1695 = vmatprep.subr.bf16.mxu0 %v1444
    %1696 = vmatpush2.bf16.msra.mxu0 %v1443
    %1697 = vmatprep.subr.bf16.mxu0 %v1440
    %1698 = vmatpush2.bf16.msra.mxu0 %v1439
    %1699 = vmatprep.subr.bf16.mxu0 %v1436
    %1700 = vmatpush2.bf16.msra.mxu0 %v1435
    %1701 = vmatprep.subr.bf16.mxu0 %v1432
    %1702 = vmatpush2.bf16.msra.mxu0 %v1431
    %1703 = vmatprep.subr.bf16.mxu0 %v1428
    %1704 = vmatpush2.bf16.msra.mxu0 %v1427
    %1705 = vmatprep.subr.bf16.mxu0 %v1424
    %1706 = vmatpush2.bf16.msra.mxu0 %v1423
    %1707 = vmatprep.subr.bf16.mxu0 %v1420
    %1708 = vmatpush2.bf16.msra.mxu0 %v1419
    %1709 = vmatprep.subr.bf16.mxu0 %v1416
    %1710 = vmatpush2.bf16.msra.mxu0 %v1415
    %1711 = vmatprep.mubr.bf16.mxu0 %v1678
    %1712 = vmatmul.mubr.bf16.gmra.mxu0 %v1677
    %v1713 = vpop.f32.mrf.mxu0
    %v1714 = vadd.f32 0.0, %v1713
    %v1715 = vpop.f32.mrf.mxu0
    %v1716 = vadd.f32 0.0, %v1715
    %v1717 = vpop.f32.mrf.mxu0
    %v1718 = vadd.f32 0.0, %v1717
    %v1719 = vpop.f32.mrf.mxu0
    %v1720 = vadd.f32 0.0, %v1719
    %1721 = vdwg.mxu0
    %1722 = vmatprep.subr.bf16.mxu0 %v1414
    %1723 = vmatpush1.bf16.msra.mxu0 %v1413
    %1724 = vmatprep.subr.bf16.mxu0 %v1410
    %1725 = vmatpush1.bf16.msra.mxu0 %v1409
    %1726 = vmatprep.subr.bf16.mxu0 %v1406
    %1727 = vmatpush1.bf16.msra.mxu0 %v1405
    %1728 = vmatprep.subr.bf16.mxu0 %v1402
    %1729 = vmatpush1.bf16.msra.mxu0 %v1401
    %1730 = vmatprep.subr.bf16.mxu0 %v1398
    %1731 = vmatpush1.bf16.msra.mxu0 %v1397
    %1732 = vmatprep.subr.bf16.mxu0 %v1394
    %1733 = vmatpush1.bf16.msra.mxu0 %v1393
    %1734 = vmatprep.subr.bf16.mxu0 %v1390
    %1735 = vmatpush1.bf16.msra.mxu0 %v1389
    %1736 = vmatprep.subr.bf16.mxu0 %v1386
    %1737 = vmatpush1.bf16.msra.mxu0 %v1385
    %1738 = vmatprep.subr.bf16.mxu0 %v1446
    %1739 = vmatpush2.bf16.msra.mxu0 %v1445
    %1740 = vmatprep.subr.bf16.mxu0 %v1442
    %1741 = vmatpush2.bf16.msra.mxu0 %v1441
    %1742 = vmatprep.subr.bf16.mxu0 %v1438
    %1743 = vmatpush2.bf16.msra.mxu0 %v1437
    %1744 = vmatprep.subr.bf16.mxu0 %v1434
    %1745 = vmatpush2.bf16.msra.mxu0 %v1433
    %1746 = vmatprep.subr.bf16.mxu0 %v1430
    %1747 = vmatpush2.bf16.msra.mxu0 %v1429
    %1748 = vmatprep.subr.bf16.mxu0 %v1426
    %1749 = vmatpush2.bf16.msra.mxu0 %v1425
    %1750 = vmatprep.subr.bf16.mxu0 %v1422
    %1751 = vmatpush2.bf16.msra.mxu0 %v1421
    %1752 = vmatprep.subr.bf16.mxu0 %v1418
    %1753 = vmatpush2.bf16.msra.mxu0 %v1417
    %1754 = vmatprep.mubr.bf16.mxu0 %v1678
    %1755 = vmatmul.mubr.bf16.gmra.mxu0 %v1677
    %v1756 = vpop.f32.mrf.mxu0
    %v1757 = vadd.f32 0.0, %v1756
    %v1758 = vpop.f32.mrf.mxu0
    %v1759 = vadd.f32 0.0, %v1758
    %v1760 = vpop.f32.mrf.mxu0
    %v1761 = vadd.f32 0.0, %v1760
    %v1762 = vpop.f32.mrf.mxu0
    %v1763 = vadd.f32 0.0, %v1762
    %1764 = vdwg.mxu0
    %v1765 = vadd.f32 %v1662, %v1714
    %v1766 = vadd.f32 %v1663, %v1716
    %v1767 = vadd.f32 %v1664, %v1757
    %v1768 = vadd.f32 %v1665, %v1759
    %v1769 = vadd.f32 %v1669, %v1718
    %v1770 = vadd.f32 %v1670, %v1720
    %v1771 = vadd.f32 %v1671, %v1761
    %v1772 = vadd.f32 %v1672, %v1763
    %v1773 = vxor.u32 %v1765, 2147483648
    %v1774 = vxor.u32 %v1769, 2147483648
    %v1775 = vmul.f32 %v1773, 1.442695
    %v1776 = vpow.pop %v1775
    %v1777 = vmul.f32 %v1774, 1.442695
    %v1778 = vpow.pop %v1777
    %v1779 = vadd.f32 %v1776, 1.0
    %v1780 = vadd.f32 %v1778, 1.0
    %v1781 = vrcp.pop %v1779
    %v1782 = vmul.f32 1.0, %v1781
    %v1783 = vrcp.pop %v1780
    %v1784 = vmul.f32 1.0, %v1783
    %v1785 = vxor.u32 %v1766, 2147483648
    %v1786 = vxor.u32 %v1770, 2147483648
    %v1787 = vmul.f32 %v1785, 1.442695
    %v1788 = vpow.pop %v1787
    %v1789 = vmul.f32 %v1786, 1.442695
    %v1790 = vpow.pop %v1789
    %v1791 = vadd.f32 %v1788, 1.0
    %v1792 = vadd.f32 %v1790, 1.0
    %v1793 = vrcp.pop %v1791
    %v1794 = vmul.f32 1.0, %v1793
    %v1795 = vrcp.pop %v1792
    %v1796 = vmul.f32 1.0, %v1795
    %v1797 = vtanh.pop %v1767
    %v1798 = vtanh.pop %v1771
    %v1799 = vxor.u32 %v1768, 2147483648
    %v1800 = vxor.u32 %v1772, 2147483648
    %v1801 = vmul.f32 %v1799, 1.442695
    %v1802 = vpow.pop %v1801
    %v1803 = vmul.f32 %v1800, 1.442695
    %v1804 = vpow.pop %v1803
    %v1805 = vadd.f32 %v1802, 1.0
    %v1806 = vadd.f32 %v1804, 1.0
    %v1807 = vrcp.pop %v1805
    %v1808 = vmul.f32 1.0, %v1807
    %v1809 = vrcp.pop %v1806
    %v1810 = vmul.f32 1.0, %v1809
    %v1811 = vmul.f32 %v1794, %v1647
    %v1812 = vmul.f32 %v1796, %v1648
    %v1813 = vmul.f32 %v1782, %v1797
    %v1814 = vmul.f32 %v1784, %v1798
    %v1815 = vadd.f32 %v1811, %v1813
    %v1816 = vadd.f32 %v1812, %v1814
    %v1817 = vtanh.pop %v1815
    %v1818 = vtanh.pop %v1816
    %v1819 = vmul.f32 %v1808, %v1817
    %v1820 = vmul.f32 %v1810, %v1818
    %v1821 = vadd.f32 %v1653, %v1819
    %v1822 = vadd.f32 %v1654, %v1820
    %v1823 = vmul.f32 %v1819, %v1819
    %v1824 = vmul.f32 %v1820, %v1820
    %v1825 = vadd.f32 %v1657, %v1823
    %v1826 = vadd.f32 %v1658, %v1824
    %v1827 = vmax.f32 %v1651, %v1819
    %v1828 = vmax.f32 %v1652, %v1820
    %v1829 = vmin.f32 %v1651, %v1819
    %v1830 = vmin.f32 %v1652, %v1820
    %s1831 = smul.u32 2, 4
    %s1832 = smul.addr %s1831, 8
    %s1833 = scalar_lea.vmem [#allocation2], %s1832
    %v1834 = vld [vmem:[%s1833] sm:$0xff]
    %v1835 = vld [vmem:[%s1833 + $0x8] sm:$0xff]
    %v1836 = vld [vmem:[%s1833 + $0x10] sm:$0xff]
    %v1837 = vld [vmem:[%s1833 + $0x18] sm:$0xff]
    %s1838 = smul.u32 13, 4
    %s1839 = smul.addr %s1838, 8
    %s1840 = scalar_lea.vmem [#allocation3], %s1839
    %v1841 = vld [vmem:[%s1840] sm:$0xff]
    %v1842 = vld [vmem:[%s1840 + $0x8] sm:$0xff]
    %v1843 = vld [vmem:[%s1840 + $0x10] sm:$0xff]
    %v1844 = vld [vmem:[%s1840 + $0x18] sm:$0xff]
    %v1845 = vmul.f32 %v1819, %v1167
    %v1846 = vmul.f32 %v1820, %v1168
    %v1847 = vmul.f32 %v1819, %v1185
    %v1848 = vmul.f32 %v1820, %v1186
    %v1849 = vpack.c.bf16 %v1846, %v1845
    %v1850 = vpack.c.bf16 %v1848, %v1847
    %1851 = vmatprep.subr.bf16.mxu0 %v1412
    %1852 = vmatpush1.bf16.msra.mxu0 %v1411
    %1853 = vmatprep.subr.bf16.mxu0 %v1408
    %1854 = vmatpush1.bf16.msra.mxu0 %v1407
    %1855 = vmatprep.subr.bf16.mxu0 %v1404
    %1856 = vmatpush1.bf16.msra.mxu0 %v1403
    %1857 = vmatprep.subr.bf16.mxu0 %v1400
    %1858 = vmatpush1.bf16.msra.mxu0 %v1399
    %1859 = vmatprep.subr.bf16.mxu0 %v1396
    %1860 = vmatpush1.bf16.msra.mxu0 %v1395
    %1861 = vmatprep.subr.bf16.mxu0 %v1392
    %1862 = vmatpush1.bf16.msra.mxu0 %v1391
    %1863 = vmatprep.subr.bf16.mxu0 %v1388
    %1864 = vmatpush1.bf16.msra.mxu0 %v1387
    %1865 = vmatprep.subr.bf16.mxu0 %v1384
    %1866 = vmatpush1.bf16.msra.mxu0 %v1383
    %1867 = vmatprep.subr.bf16.mxu0 %v1444
    %1868 = vmatpush2.bf16.msra.mxu0 %v1443
    %1869 = vmatprep.subr.bf16.mxu0 %v1440
    %1870 = vmatpush2.bf16.msra.mxu0 %v1439
    %1871 = vmatprep.subr.bf16.mxu0 %v1436
    %1872 = vmatpush2.bf16.msra.mxu0 %v1435
    %1873 = vmatprep.subr.bf16.mxu0 %v1432
    %1874 = vmatpush2.bf16.msra.mxu0 %v1431
    %1875 = vmatprep.subr.bf16.mxu0 %v1428
    %1876 = vmatpush2.bf16.msra.mxu0 %v1427
    %1877 = vmatprep.subr.bf16.mxu0 %v1424
    %1878 = vmatpush2.bf16.msra.mxu0 %v1423
    %1879 = vmatprep.subr.bf16.mxu0 %v1420
    %1880 = vmatpush2.bf16.msra.mxu0 %v1419
    %1881 = vmatprep.subr.bf16.mxu0 %v1416
    %1882 = vmatpush2.bf16.msra.mxu0 %v1415
    %1883 = vmatprep.mubr.bf16.mxu0 %v1850
    %1884 = vmatmul.mubr.bf16.gmra.mxu0 %v1849
    %v1885 = vpop.f32.mrf.mxu0
    %v1886 = vadd.f32 0.0, %v1885
    %v1887 = vpop.f32.mrf.mxu0
    %v1888 = vadd.f32 0.0, %v1887
    %v1889 = vpop.f32.mrf.mxu0
    %v1890 = vadd.f32 0.0, %v1889
    %v1891 = vpop.f32.mrf.mxu0
    %v1892 = vadd.f32 0.0, %v1891
    %1893 = vdwg.mxu0
    %1894 = vmatprep.subr.bf16.mxu0 %v1414
    %1895 = vmatpush1.bf16.msra.mxu0 %v1413
    %1896 = vmatprep.subr.bf16.mxu0 %v1410
    %1897 = vmatpush1.bf16.msra.mxu0 %v1409
    %1898 = vmatprep.subr.bf16.mxu0 %v1406
    %1899 = vmatpush1.bf16.msra.mxu0 %v1405
    %1900 = vmatprep.subr.bf16.mxu0 %v1402
    %1901 = vmatpush1.bf16.msra.mxu0 %v1401
    %1902 = vmatprep.subr.bf16.mxu0 %v1398
    %1903 = vmatpush1.bf16.msra.mxu0 %v1397
    %1904 = vmatprep.subr.bf16.mxu0 %v1394
    %1905 = vmatpush1.bf16.msra.mxu0 %v1393
    %1906 = vmatprep.subr.bf16.mxu0 %v1390
    %1907 = vmatpush1.bf16.msra.mxu0 %v1389
    %1908 = vmatprep.subr.bf16.mxu0 %v1386
    %1909 = vmatpush1.bf16.msra.mxu0 %v1385
    %1910 = vmatprep.subr.bf16.mxu0 %v1446
    %1911 = vmatpush2.bf16.msra.mxu0 %v1445
    %1912 = vmatprep.subr.bf16.mxu0 %v1442
    %1913 = vmatpush2.bf16.msra.mxu0 %v1441
    %1914 = vmatprep.subr.bf16.mxu0 %v1438
    %1915 = vmatpush2.bf16.msra.mxu0 %v1437
    %1916 = vmatprep.subr.bf16.mxu0 %v1434
    %1917 = vmatpush2.bf16.msra.mxu0 %v1433
    %1918 = vmatprep.subr.bf16.mxu0 %v1430
    %1919 = vmatpush2.bf16.msra.mxu0 %v1429
    %1920 = vmatprep.subr.bf16.mxu0 %v1426
    %1921 = vmatpush2.bf16.msra.mxu0 %v1425
    %1922 = vmatprep.subr.bf16.mxu0 %v1422
    %1923 = vmatpush2.bf16.msra.mxu0 %v1421
    %1924 = vmatprep.subr.bf16.mxu0 %v1418
    %1925 = vmatpush2.bf16.msra.mxu0 %v1417
    %1926 = vmatprep.mubr.bf16.mxu0 %v1850
    %1927 = vmatmul.mubr.bf16.gmra.mxu0 %v1849
    %v1928 = vpop.f32.mrf.mxu0
    %v1929 = vadd.f32 0.0, %v1928
    %v1930 = vpop.f32.mrf.mxu0
    %v1931 = vadd.f32 0.0, %v1930
    %v1932 = vpop.f32.mrf.mxu0
    %v1933 = vadd.f32 0.0, %v1932
    %v1934 = vpop.f32.mrf.mxu0
    %v1935 = vadd.f32 0.0, %v1934
    %1936 = vdwg.mxu0
    %v1937 = vadd.f32 %v1834, %v1886
    %v1938 = vadd.f32 %v1835, %v1888
    %v1939 = vadd.f32 %v1836, %v1929
    %v1940 = vadd.f32 %v1837, %v1931
    %v1941 = vadd.f32 %v1841, %v1890
    %v1942 = vadd.f32 %v1842, %v1892
    %v1943 = vadd.f32 %v1843, %v1933
    %v1944 = vadd.f32 %v1844, %v1935
    %v1945 = vxor.u32 %v1937, 2147483648
    %v1946 = vxor.u32 %v1941, 2147483648
    %v1947 = vmul.f32 %v1945, 1.442695
    %v1948 = vpow.pop %v1947
    %v1949 = vmul.f32 %v1946, 1.442695
    %v1950 = vpow.pop %v1949
    %v1951 = vadd.f32 %v1948, 1.0
    %v1952 = vadd.f32 %v1950, 1.0
    %v1953 = vrcp.pop %v1951
    %v1954 = vmul.f32 1.0, %v1953
    %v1955 = vrcp.pop %v1952
    %v1956 = vmul.f32 1.0, %v1955
    %v1957 = vxor.u32 %v1938, 2147483648
    %v1958 = vxor.u32 %v1942, 2147483648
    %v1959 = vmul.f32 %v1957, 1.442695
    %v1960 = vpow.pop %v1959
    %v1961 = vmul.f32 %v1958, 1.442695
    %v1962 = vpow.pop %v1961
    %v1963 = vadd.f32 %v1960, 1.0
    %v1964 = vadd.f32 %v1962, 1.0
    %v1965 = vrcp.pop %v1963
    %v1966 = vmul.f32 1.0, %v1965
    %v1967 = vrcp.pop %v1964
    %v1968 = vmul.f32 1.0, %v1967
    %v1969 = vtanh.pop %v1939
    %v1970 = vtanh.pop %v1943
    %v1971 = vxor.u32 %v1940, 2147483648
    %v1972 = vxor.u32 %v1944, 2147483648
    %v1973 = vmul.f32 %v1971, 1.442695
    %v1974 = vpow.pop %v1973
    %v1975 = vmul.f32 %v1972, 1.442695
    %v1976 = vpow.pop %v1975
    %v1977 = vadd.f32 %v1974, 1.0
    %v1978 = vadd.f32 %v1976, 1.0
    %v1979 = vrcp.pop %v1977
    %v1980 = vmul.f32 1.0, %v1979
    %v1981 = vrcp.pop %v1978
    %v1982 = vmul.f32 1.0, %v1981
    %v1983 = vmul.f32 %v1966, %v1815
    %v1984 = vmul.f32 %v1968, %v1816
    %v1985 = vmul.f32 %v1954, %v1969
    %v1986 = vmul.f32 %v1956, %v1970
    %v1987 = vadd.f32 %v1983, %v1985
    %v1988 = vadd.f32 %v1984, %v1986
    %v1989 = vtanh.pop %v1987
    %v1990 = vtanh.pop %v1988
    %v1991 = vmul.f32 %v1980, %v1989
    %v1992 = vmul.f32 %v1982, %v1990
    %v1993 = vadd.f32 %v1821, %v1991
    %v1994 = vadd.f32 %v1822, %v1992
    %v1995 = vmul.f32 %v1991, %v1991
    %v1996 = vmul.f32 %v1992, %v1992
    %v1997 = vadd.f32 %v1825, %v1995
    %v1998 = vadd.f32 %v1826, %v1996
    %v1999 = vmax.f32 %v1827, %v1991
    %v2000 = vmax.f32 %v1828, %v1992
    %v2001 = vmin.f32 %v1829, %v1991
    %v2002 = vmin.f32 %v1830, %v1992
    %s2003 = smul.u32 3, 4
    %s2004 = smul.addr %s2003, 8
    %s2005 = scalar_lea.vmem [#allocation2], %s2004
    %v2006 = vld [vmem:[%s2005] sm:$0xff]
    %v2007 = vld [vmem:[%s2005 + $0x8] sm:$0xff]
    %v2008 = vld [vmem:[%s2005 + $0x10] sm:$0xff]
    %v2009 = vld [vmem:[%s2005 + $0x18] sm:$0xff]
    %s2010 = smul.u32 12, 4
    %s2011 = smul.addr %s2010, 8
    %s2012 = scalar_lea.vmem [#allocation3], %s2011
    %v2013 = vld [vmem:[%s2012] sm:$0xff]
    %v2014 = vld [vmem:[%s2012 + $0x8] sm:$0xff]
    %v2015 = vld [vmem:[%s2012 + $0x10] sm:$0xff]
    %v2016 = vld [vmem:[%s2012 + $0x18] sm:$0xff]
    %v2017 = vmul.f32 %v1991, %v1167
    %v2018 = vmul.f32 %v1992, %v1168
    %v2019 = vmul.f32 %v1991, %v1185
    %v2020 = vmul.f32 %v1992, %v1186
    %v2021 = vpack.c.bf16 %v2018, %v2017
    %v2022 = vpack.c.bf16 %v2020, %v2019
    %2023 = vmatprep.subr.bf16.mxu0 %v1412
    %2024 = vmatpush1.bf16.msra.mxu0 %v1411
    %2025 = vmatprep.subr.bf16.mxu0 %v1408
    %2026 = vmatpush1.bf16.msra.mxu0 %v1407
    %2027 = vmatprep.subr.bf16.mxu0 %v1404
    %2028 = vmatpush1.bf16.msra.mxu0 %v1403
    %2029 = vmatprep.subr.bf16.mxu0 %v1400
    %2030 = vmatpush1.bf16.msra.mxu0 %v1399
    %2031 = vmatprep.subr.bf16.mxu0 %v1396
    %2032 = vmatpush1.bf16.msra.mxu0 %v1395
    %2033 = vmatprep.subr.bf16.mxu0 %v1392
    %2034 = vmatpush1.bf16.msra.mxu0 %v1391
    %2035 = vmatprep.subr.bf16.mxu0 %v1388
    %2036 = vmatpush1.bf16.msra.mxu0 %v1387
    %2037 = vmatprep.subr.bf16.mxu0 %v1384
    %2038 = vmatpush1.bf16.msra.mxu0 %v1383
    %2039 = vmatprep.subr.bf16.mxu0 %v1444
    %2040 = vmatpush2.bf16.msra.mxu0 %v1443
    %2041 = vmatprep.subr.bf16.mxu0 %v1440
    %2042 = vmatpush2.bf16.msra.mxu0 %v1439
    %2043 = vmatprep.subr.bf16.mxu0 %v1436
    %2044 = vmatpush2.bf16.msra.mxu0 %v1435
    %2045 = vmatprep.subr.bf16.mxu0 %v1432
    %2046 = vmatpush2.bf16.msra.mxu0 %v1431
    %2047 = vmatprep.subr.bf16.mxu0 %v1428
    %2048 = vmatpush2.bf16.msra.mxu0 %v1427
    %2049 = vmatprep.subr.bf16.mxu0 %v1424
    %2050 = vmatpush2.bf16.msra.mxu0 %v1423
    %2051 = vmatprep.subr.bf16.mxu0 %v1420
    %2052 = vmatpush2.bf16.msra.mxu0 %v1419
    %2053 = vmatprep.subr.bf16.mxu0 %v1416
    %2054 = vmatpush2.bf16.msra.mxu0 %v1415
    %2055 = vmatprep.mubr.bf16.mxu0 %v2022
    %2056 = vmatmul.mubr.bf16.gmra.mxu0 %v2021
    %v2057 = vpop.f32.mrf.mxu0
    %v2058 = vadd.f32 0.0, %v2057
    %v2059 = vpop.f32.mrf.mxu0
    %v2060 = vadd.f32 0.0, %v2059
    %v2061 = vpop.f32.mrf.mxu0
    %v2062 = vadd.f32 0.0, %v2061
    %v2063 = vpop.f32.mrf.mxu0
    %v2064 = vadd.f32 0.0, %v2063
    %2065 = vdwg.mxu0
    %2066 = vmatprep.subr.bf16.mxu0 %v1414
    %2067 = vmatpush1.bf16.msra.mxu0 %v1413
    %2068 = vmatprep.subr.bf16.mxu0 %v1410
    %2069 = vmatpush1.bf16.msra.mxu0 %v1409
    %2070 = vmatprep.subr.bf16.mxu0 %v1406
    %2071 = vmatpush1.bf16.msra.mxu0 %v1405
    %2072 = vmatprep.subr.bf16.mxu0 %v1402
    %2073 = vmatpush1.bf16.msra.mxu0 %v1401
    %2074 = vmatprep.subr.bf16.mxu0 %v1398
    %2075 = vmatpush1.bf16.msra.mxu0 %v1397
    %2076 = vmatprep.subr.bf16.mxu0 %v1394
    %2077 = vmatpush1.bf16.msra.mxu0 %v1393
    %2078 = vmatprep.subr.bf16.mxu0 %v1390
    %2079 = vmatpush1.bf16.msra.mxu0 %v1389
    %2080 = vmatprep.subr.bf16.mxu0 %v1386
    %2081 = vmatpush1.bf16.msra.mxu0 %v1385
    %2082 = vmatprep.subr.bf16.mxu0 %v1446
    %2083 = vmatpush2.bf16.msra.mxu0 %v1445
    %2084 = vmatprep.subr.bf16.mxu0 %v1442
    %2085 = vmatpush2.bf16.msra.mxu0 %v1441
    %2086 = vmatprep.subr.bf16.mxu0 %v1438
    %2087 = vmatpush2.bf16.msra.mxu0 %v1437
    %2088 = vmatprep.subr.bf16.mxu0 %v1434
    %2089 = vmatpush2.bf16.msra.mxu0 %v1433
    %2090 = vmatprep.subr.bf16.mxu0 %v1430
    %2091 = vmatpush2.bf16.msra.mxu0 %v1429
    %2092 = vmatprep.subr.bf16.mxu0 %v1426
    %2093 = vmatpush2.bf16.msra.mxu0 %v1425
    %2094 = vmatprep.subr.bf16.mxu0 %v1422
    %2095 = vmatpush2.bf16.msra.mxu0 %v1421
    %2096 = vmatprep.subr.bf16.mxu0 %v1418
    %2097 = vmatpush2.bf16.msra.mxu0 %v1417
    %2098 = vmatprep.mubr.bf16.mxu0 %v2022
    %2099 = vmatmul.mubr.bf16.gmra.mxu0 %v2021
    %v2100 = vpop.f32.mrf.mxu0
    %v2101 = vadd.f32 0.0, %v2100
    %v2102 = vpop.f32.mrf.mxu0
    %v2103 = vadd.f32 0.0, %v2102
    %v2104 = vpop.f32.mrf.mxu0
    %v2105 = vadd.f32 0.0, %v2104
    %v2106 = vpop.f32.mrf.mxu0
    %v2107 = vadd.f32 0.0, %v2106
    %2108 = vdwg.mxu0
    %v2109 = vadd.f32 %v2006, %v2058
    %v2110 = vadd.f32 %v2007, %v2060
    %v2111 = vadd.f32 %v2008, %v2101
    %v2112 = vadd.f32 %v2009, %v2103
    %v2113 = vadd.f32 %v2013, %v2062
    %v2114 = vadd.f32 %v2014, %v2064
    %v2115 = vadd.f32 %v2015, %v2105
    %v2116 = vadd.f32 %v2016, %v2107
    %v2117 = vxor.u32 %v2109, 2147483648
    %v2118 = vxor.u32 %v2113, 2147483648
    %v2119 = vmul.f32 %v2117, 1.442695
    %v2120 = vpow.pop %v2119
    %v2121 = vmul.f32 %v2118, 1.442695
    %v2122 = vpow.pop %v2121
    %v2123 = vadd.f32 %v2120, 1.0
    %v2124 = vadd.f32 %v2122, 1.0
    %v2125 = vrcp.pop %v2123
    %v2126 = vmul.f32 1.0, %v2125
    %v2127 = vrcp.pop %v2124
    %v2128 = vmul.f32 1.0, %v2127
    %v2129 = vxor.u32 %v2110, 2147483648
    %v2130 = vxor.u32 %v2114, 2147483648
    %v2131 = vmul.f32 %v2129, 1.442695
    %v2132 = vpow.pop %v2131
    %v2133 = vmul.f32 %v2130, 1.442695
    %v2134 = vpow.pop %v2133
    %v2135 = vadd.f32 %v2132, 1.0
    %v2136 = vadd.f32 %v2134, 1.0
    %v2137 = vrcp.pop %v2135
    %v2138 = vmul.f32 1.0, %v2137
    %v2139 = vrcp.pop %v2136
    %v2140 = vmul.f32 1.0, %v2139
    %v2141 = vtanh.pop %v2111
    %v2142 = vtanh.pop %v2115
    %v2143 = vxor.u32 %v2112, 2147483648
    %v2144 = vxor.u32 %v2116, 2147483648
    %v2145 = vmul.f32 %v2143, 1.442695
    %v2146 = vpow.pop %v2145
    %v2147 = vmul.f32 %v2144, 1.442695
    %v2148 = vpow.pop %v2147
    %v2149 = vadd.f32 %v2146, 1.0
    %v2150 = vadd.f32 %v2148, 1.0
    %v2151 = vrcp.pop %v2149
    %v2152 = vmul.f32 1.0, %v2151
    %v2153 = vrcp.pop %v2150
    %v2154 = vmul.f32 1.0, %v2153
    %v2155 = vmul.f32 %v2138, %v1987
    %v2156 = vmul.f32 %v2140, %v1988
    %v2157 = vmul.f32 %v2126, %v2141
    %v2158 = vmul.f32 %v2128, %v2142
    %v2159 = vadd.f32 %v2155, %v2157
    %v2160 = vadd.f32 %v2156, %v2158
    %v2161 = vtanh.pop %v2159
    %v2162 = vtanh.pop %v2160
    %v2163 = vmul.f32 %v2152, %v2161
    %v2164 = vmul.f32 %v2154, %v2162
    %v2165 = vadd.f32 %v1993, %v2163
    %v2166 = vadd.f32 %v1994, %v2164
    %v2167 = vmul.f32 %v2163, %v2163
    %v2168 = vmul.f32 %v2164, %v2164
    %v2169 = vadd.f32 %v1997, %v2167
    %v2170 = vadd.f32 %v1998, %v2168
    %v2171 = vmax.f32 %v1999, %v2163
    %v2172 = vmax.f32 %v2000, %v2164
    %v2173 = vmin.f32 %v2001, %v2163
    %v2174 = vmin.f32 %v2002, %v2164
    %s2175 = smul.u32 4, 4
    %s2176 = smul.addr %s2175, 8
    %s2177 = scalar_lea.vmem [#allocation2], %s2176
    %v2178 = vld [vmem:[%s2177] sm:$0xff]
    %v2179 = vld [vmem:[%s2177 + $0x8] sm:$0xff]
    %v2180 = vld [vmem:[%s2177 + $0x10] sm:$0xff]
    %v2181 = vld [vmem:[%s2177 + $0x18] sm:$0xff]
    %s2182 = smul.u32 11, 4
    %s2183 = smul.addr %s2182, 8
    %s2184 = scalar_lea.vmem [#allocation3], %s2183
    %v2185 = vld [vmem:[%s2184] sm:$0xff]
    %v2186 = vld [vmem:[%s2184 + $0x8] sm:$0xff]
    %v2187 = vld [vmem:[%s2184 + $0x10] sm:$0xff]
    %v2188 = vld [vmem:[%s2184 + $0x18] sm:$0xff]
    %v2189 = vmul.f32 %v2163, %v1167
    %v2190 = vmul.f32 %v2164, %v1168
    %v2191 = vmul.f32 %v2163, %v1185
    %v2192 = vmul.f32 %v2164, %v1186
    %v2193 = vpack.c.bf16 %v2190, %v2189
    %v2194 = vpack.c.bf16 %v2192, %v2191
    %2195 = vmatprep.subr.bf16.mxu0 %v1412
    %2196 = vmatpush1.bf16.msra.mxu0 %v1411
    %2197 = vmatprep.subr.bf16.mxu0 %v1408
    %2198 = vmatpush1.bf16.msra.mxu0 %v1407
    %2199 = vmatprep.subr.bf16.mxu0 %v1404
    %2200 = vmatpush1.bf16.msra.mxu0 %v1403
    %2201 = vmatprep.subr.bf16.mxu0 %v1400
    %2202 = vmatpush1.bf16.msra.mxu0 %v1399
    %2203 = vmatprep.subr.bf16.mxu0 %v1396
    %2204 = vmatpush1.bf16.msra.mxu0 %v1395
    %2205 = vmatprep.subr.bf16.mxu0 %v1392
    %2206 = vmatpush1.bf16.msra.mxu0 %v1391
    %2207 = vmatprep.subr.bf16.mxu0 %v1388
    %2208 = vmatpush1.bf16.msra.mxu0 %v1387
    %2209 = vmatprep.subr.bf16.mxu0 %v1384
    %2210 = vmatpush1.bf16.msra.mxu0 %v1383
    %2211 = vmatprep.subr.bf16.mxu0 %v1444
    %2212 = vmatpush2.bf16.msra.mxu0 %v1443
    %2213 = vmatprep.subr.bf16.mxu0 %v1440
    %2214 = vmatpush2.bf16.msra.mxu0 %v1439
    %2215 = vmatprep.subr.bf16.mxu0 %v1436
    %2216 = vmatpush2.bf16.msra.mxu0 %v1435
    %2217 = vmatprep.subr.bf16.mxu0 %v1432
    %2218 = vmatpush2.bf16.msra.mxu0 %v1431
    %2219 = vmatprep.subr.bf16.mxu0 %v1428
    %2220 = vmatpush2.bf16.msra.mxu0 %v1427
    %2221 = vmatprep.subr.bf16.mxu0 %v1424
    %2222 = vmatpush2.bf16.msra.mxu0 %v1423
    %2223 = vmatprep.subr.bf16.mxu0 %v1420
    %2224 = vmatpush2.bf16.msra.mxu0 %v1419
    %2225 = vmatprep.subr.bf16.mxu0 %v1416
    %2226 = vmatpush2.bf16.msra.mxu0 %v1415
    %2227 = vmatprep.mubr.bf16.mxu0 %v2194
    %2228 = vmatmul.mubr.bf16.gmra.mxu0 %v2193
    %v2229 = vpop.f32.mrf.mxu0
    %v2230 = vadd.f32 0.0, %v2229
    %v2231 = vpop.f32.mrf.mxu0
    %v2232 = vadd.f32 0.0, %v2231
    %v2233 = vpop.f32.mrf.mxu0
    %v2234 = vadd.f32 0.0, %v2233
    %v2235 = vpop.f32.mrf.mxu0
    %v2236 = vadd.f32 0.0, %v2235
    %2237 = vdwg.mxu0
    %2238 = vmatprep.subr.bf16.mxu0 %v1414
    %2239 = vmatpush1.bf16.msra.mxu0 %v1413
    %2240 = vmatprep.subr.bf16.mxu0 %v1410
    %2241 = vmatpush1.bf16.msra.mxu0 %v1409
    %2242 = vmatprep.subr.bf16.mxu0 %v1406
    %2243 = vmatpush1.bf16.msra.mxu0 %v1405
    %2244 = vmatprep.subr.bf16.mxu0 %v1402
    %2245 = vmatpush1.bf16.msra.mxu0 %v1401
    %2246 = vmatprep.subr.bf16.mxu0 %v1398
    %2247 = vmatpush1.bf16.msra.mxu0 %v1397
    %2248 = vmatprep.subr.bf16.mxu0 %v1394
    %2249 = vmatpush1.bf16.msra.mxu0 %v1393
    %2250 = vmatprep.subr.bf16.mxu0 %v1390
    %2251 = vmatpush1.bf16.msra.mxu0 %v1389
    %2252 = vmatprep.subr.bf16.mxu0 %v1386
    %2253 = vmatpush1.bf16.msra.mxu0 %v1385
    %2254 = vmatprep.subr.bf16.mxu0 %v1446
    %2255 = vmatpush2.bf16.msra.mxu0 %v1445
    %2256 = vmatprep.subr.bf16.mxu0 %v1442
    %2257 = vmatpush2.bf16.msra.mxu0 %v1441
    %2258 = vmatprep.subr.bf16.mxu0 %v1438
    %2259 = vmatpush2.bf16.msra.mxu0 %v1437
    %2260 = vmatprep.subr.bf16.mxu0 %v1434
    %2261 = vmatpush2.bf16.msra.mxu0 %v1433
    %2262 = vmatprep.subr.bf16.mxu0 %v1430
    %2263 = vmatpush2.bf16.msra.mxu0 %v1429
    %2264 = vmatprep.subr.bf16.mxu0 %v1426
    %2265 = vmatpush2.bf16.msra.mxu0 %v1425
    %2266 = vmatprep.subr.bf16.mxu0 %v1422
    %2267 = vmatpush2.bf16.msra.mxu0 %v1421
    %2268 = vmatprep.subr.bf16.mxu0 %v1418
    %2269 = vmatpush2.bf16.msra.mxu0 %v1417
    %2270 = vmatprep.mubr.bf16.mxu0 %v2194
    %2271 = vmatmul.mubr.bf16.gmra.mxu0 %v2193
    %v2272 = vpop.f32.mrf.mxu0
    %v2273 = vadd.f32 0.0, %v2272
    %v2274 = vpop.f32.mrf.mxu0
    %v2275 = vadd.f32 0.0, %v2274
    %v2276 = vpop.f32.mrf.mxu0
    %v2277 = vadd.f32 0.0, %v2276
    %v2278 = vpop.f32.mrf.mxu0
    %v2279 = vadd.f32 0.0, %v2278
    %2280 = vdwg.mxu0
    %v2281 = vadd.f32 %v2178, %v2230
    %v2282 = vadd.f32 %v2179, %v2232
    %v2283 = vadd.f32 %v2180, %v2273
    %v2284 = vadd.f32 %v2181, %v2275
    %v2285 = vadd.f32 %v2185, %v2234
    %v2286 = vadd.f32 %v2186, %v2236
    %v2287 = vadd.f32 %v2187, %v2277
    %v2288 = vadd.f32 %v2188, %v2279
    %v2289 = vxor.u32 %v2281, 2147483648
    %v2290 = vxor.u32 %v2285, 2147483648
    %v2291 = vmul.f32 %v2289, 1.442695
    %v2292 = vpow.pop %v2291
    %v2293 = vmul.f32 %v2290, 1.442695
    %v2294 = vpow.pop %v2293
    %v2295 = vadd.f32 %v2292, 1.0
    %v2296 = vadd.f32 %v2294, 1.0
    %v2297 = vrcp.pop %v2295
    %v2298 = vmul.f32 1.0, %v2297
    %v2299 = vrcp.pop %v2296
    %v2300 = vmul.f32 1.0, %v2299
    %v2301 = vxor.u32 %v2282, 2147483648
    %v2302 = vxor.u32 %v2286, 2147483648
    %v2303 = vmul.f32 %v2301, 1.442695
    %v2304 = vpow.pop %v2303
    %v2305 = vmul.f32 %v2302, 1.442695
    %v2306 = vpow.pop %v2305
    %v2307 = vadd.f32 %v2304, 1.0
    %v2308 = vadd.f32 %v2306, 1.0
    %v2309 = vrcp.pop %v2307
    %v2310 = vmul.f32 1.0, %v2309
    %v2311 = vrcp.pop %v2308
    %v2312 = vmul.f32 1.0, %v2311
    %v2313 = vtanh.pop %v2283
    %v2314 = vtanh.pop %v2287
    %v2315 = vxor.u32 %v2284, 2147483648
    %v2316 = vxor.u32 %v2288, 2147483648
    %v2317 = vmul.f32 %v2315, 1.442695
    %v2318 = vpow.pop %v2317
    %v2319 = vmul.f32 %v2316, 1.442695
    %v2320 = vpow.pop %v2319
    %v2321 = vadd.f32 %v2318, 1.0
    %v2322 = vadd.f32 %v2320, 1.0
    %v2323 = vrcp.pop %v2321
    %v2324 = vmul.f32 1.0, %v2323
    %v2325 = vrcp.pop %v2322
    %v2326 = vmul.f32 1.0, %v2325
    %v2327 = vmul.f32 %v2310, %v2159
    %v2328 = vmul.f32 %v2312, %v2160
    %v2329 = vmul.f32 %v2298, %v2313
    %v2330 = vmul.f32 %v2300, %v2314
    %v2331 = vadd.f32 %v2327, %v2329
    %v2332 = vadd.f32 %v2328, %v2330
    %v2333 = vtanh.pop %v2331
    %v2334 = vtanh.pop %v2332
    %v2335 = vmul.f32 %v2324, %v2333
    %v2336 = vmul.f32 %v2326, %v2334
    %v2337 = vadd.f32 %v2165, %v2335
    %v2338 = vadd.f32 %v2166, %v2336
    %v2339 = vmul.f32 %v2335, %v2335
    %v2340 = vmul.f32 %v2336, %v2336
    %v2341 = vadd.f32 %v2169, %v2339
    %v2342 = vadd.f32 %v2170, %v2340
    %v2343 = vmax.f32 %v2171, %v2335
    %v2344 = vmax.f32 %v2172, %v2336
    %v2345 = vmin.f32 %v2173, %v2335
    %v2346 = vmin.f32 %v2174, %v2336
    %s2347 = smul.u32 5, 4
    %s2348 = smul.addr %s2347, 8
    %s2349 = scalar_lea.vmem [#allocation2], %s2348
    %v2350 = vld [vmem:[%s2349] sm:$0xff]
    %v2351 = vld [vmem:[%s2349 + $0x8] sm:$0xff]
    %v2352 = vld [vmem:[%s2349 + $0x10] sm:$0xff]
    %v2353 = vld [vmem:[%s2349 + $0x18] sm:$0xff]
    %s2354 = smul.u32 10, 4
    %s2355 = smul.addr %s2354, 8
    %s2356 = scalar_lea.vmem [#allocation3], %s2355
    %v2357 = vld [vmem:[%s2356] sm:$0xff]
    %v2358 = vld [vmem:[%s2356 + $0x8] sm:$0xff]
    %v2359 = vld [vmem:[%s2356 + $0x10] sm:$0xff]
    %v2360 = vld [vmem:[%s2356 + $0x18] sm:$0xff]
    %v2361 = vmul.f32 %v2335, %v1167
    %v2362 = vmul.f32 %v2336, %v1168
    %v2363 = vmul.f32 %v2335, %v1185
    %v2364 = vmul.f32 %v2336, %v1186
    %v2365 = vpack.c.bf16 %v2362, %v2361
    %v2366 = vpack.c.bf16 %v2364, %v2363
    %2367 = vmatprep.subr.bf16.mxu0 %v1412
    %2368 = vmatpush1.bf16.msra.mxu0 %v1411
    %2369 = vmatprep.subr.bf16.mxu0 %v1408
    %2370 = vmatpush1.bf16.msra.mxu0 %v1407
    %2371 = vmatprep.subr.bf16.mxu0 %v1404
    %2372 = vmatpush1.bf16.msra.mxu0 %v1403
    %2373 = vmatprep.subr.bf16.mxu0 %v1400
    %2374 = vmatpush1.bf16.msra.mxu0 %v1399
    %2375 = vmatprep.subr.bf16.mxu0 %v1396
    %2376 = vmatpush1.bf16.msra.mxu0 %v1395
    %2377 = vmatprep.subr.bf16.mxu0 %v1392
    %2378 = vmatpush1.bf16.msra.mxu0 %v1391
    %2379 = vmatprep.subr.bf16.mxu0 %v1388
    %2380 = vmatpush1.bf16.msra.mxu0 %v1387
    %2381 = vmatprep.subr.bf16.mxu0 %v1384
    %2382 = vmatpush1.bf16.msra.mxu0 %v1383
    %2383 = vmatprep.subr.bf16.mxu0 %v1444
    %2384 = vmatpush2.bf16.msra.mxu0 %v1443
    %2385 = vmatprep.subr.bf16.mxu0 %v1440
    %2386 = vmatpush2.bf16.msra.mxu0 %v1439
    %2387 = vmatprep.subr.bf16.mxu0 %v1436
    %2388 = vmatpush2.bf16.msra.mxu0 %v1435
    %2389 = vmatprep.subr.bf16.mxu0 %v1432
    %2390 = vmatpush2.bf16.msra.mxu0 %v1431
    %2391 = vmatprep.subr.bf16.mxu0 %v1428
    %2392 = vmatpush2.bf16.msra.mxu0 %v1427
    %2393 = vmatprep.subr.bf16.mxu0 %v1424
    %2394 = vmatpush2.bf16.msra.mxu0 %v1423
    %2395 = vmatprep.subr.bf16.mxu0 %v1420
    %2396 = vmatpush2.bf16.msra.mxu0 %v1419
    %2397 = vmatprep.subr.bf16.mxu0 %v1416
    %2398 = vmatpush2.bf16.msra.mxu0 %v1415
    %2399 = vmatprep.mubr.bf16.mxu0 %v2366
    %2400 = vmatmul.mubr.bf16.gmra.mxu0 %v2365
    %v2401 = vpop.f32.mrf.mxu0
    %v2402 = vadd.f32 0.0, %v2401
    %v2403 = vpop.f32.mrf.mxu0
    %v2404 = vadd.f32 0.0, %v2403
    %v2405 = vpop.f32.mrf.mxu0
    %v2406 = vadd.f32 0.0, %v2405
    %v2407 = vpop.f32.mrf.mxu0
    %v2408 = vadd.f32 0.0, %v2407
    %2409 = vdwg.mxu0
    %2410 = vmatprep.subr.bf16.mxu0 %v1414
    %2411 = vmatpush1.bf16.msra.mxu0 %v1413
    %2412 = vmatprep.subr.bf16.mxu0 %v1410
    %2413 = vmatpush1.bf16.msra.mxu0 %v1409
    %2414 = vmatprep.subr.bf16.mxu0 %v1406
    %2415 = vmatpush1.bf16.msra.mxu0 %v1405
    %2416 = vmatprep.subr.bf16.mxu0 %v1402
    %2417 = vmatpush1.bf16.msra.mxu0 %v1401
    %2418 = vmatprep.subr.bf16.mxu0 %v1398
    %2419 = vmatpush1.bf16.msra.mxu0 %v1397
    %2420 = vmatprep.subr.bf16.mxu0 %v1394
    %2421 = vmatpush1.bf16.msra.mxu0 %v1393
    %2422 = vmatprep.subr.bf16.mxu0 %v1390
    %2423 = vmatpush1.bf16.msra.mxu0 %v1389
    %2424 = vmatprep.subr.bf16.mxu0 %v1386
    %2425 = vmatpush1.bf16.msra.mxu0 %v1385
    %2426 = vmatprep.subr.bf16.mxu0 %v1446
    %2427 = vmatpush2.bf16.msra.mxu0 %v1445
    %2428 = vmatprep.subr.bf16.mxu0 %v1442
    %2429 = vmatpush2.bf16.msra.mxu0 %v1441
    %2430 = vmatprep.subr.bf16.mxu0 %v1438
    %2431 = vmatpush2.bf16.msra.mxu0 %v1437
    %2432 = vmatprep.subr.bf16.mxu0 %v1434
    %2433 = vmatpush2.bf16.msra.mxu0 %v1433
    %2434 = vmatprep.subr.bf16.mxu0 %v1430
    %2435 = vmatpush2.bf16.msra.mxu0 %v1429
    %2436 = vmatprep.subr.bf16.mxu0 %v1426
    %2437 = vmatpush2.bf16.msra.mxu0 %v1425
    %2438 = vmatprep.subr.bf16.mxu0 %v1422
    %2439 = vmatpush2.bf16.msra.mxu0 %v1421
    %2440 = vmatprep.subr.bf16.mxu0 %v1418
    %2441 = vmatpush2.bf16.msra.mxu0 %v1417
    %2442 = vmatprep.mubr.bf16.mxu0 %v2366
    %2443 = vmatmul.mubr.bf16.gmra.mxu0 %v2365
    %v2444 = vpop.f32.mrf.mxu0
    %v2445 = vadd.f32 0.0, %v2444
    %v2446 = vpop.f32.mrf.mxu0
    %v2447 = vadd.f32 0.0, %v2446
    %v2448 = vpop.f32.mrf.mxu0
    %v2449 = vadd.f32 0.0, %v2448
    %v2450 = vpop.f32.mrf.mxu0
    %v2451 = vadd.f32 0.0, %v2450
    %2452 = vdwg.mxu0
    %v2453 = vadd.f32 %v2350, %v2402
    %v2454 = vadd.f32 %v2351, %v2404
    %v2455 = vadd.f32 %v2352, %v2445
    %v2456 = vadd.f32 %v2353, %v2447
    %v2457 = vadd.f32 %v2357, %v2406
    %v2458 = vadd.f32 %v2358, %v2408
    %v2459 = vadd.f32 %v2359, %v2449
    %v2460 = vadd.f32 %v2360, %v2451
    %v2461 = vxor.u32 %v2453, 2147483648
    %v2462 = vxor.u32 %v2457, 2147483648
    %v2463 = vmul.f32 %v2461, 1.442695
    %v2464 = vpow.pop %v2463
    %v2465 = vmul.f32 %v2462, 1.442695
    %v2466 = vpow.pop %v2465
    %v2467 = vadd.f32 %v2464, 1.0
    %v2468 = vadd.f32 %v2466, 1.0
    %v2469 = vrcp.pop %v2467
    %v2470 = vmul.f32 1.0, %v2469
    %v2471 = vrcp.pop %v2468
    %v2472 = vmul.f32 1.0, %v2471
    %v2473 = vxor.u32 %v2454, 2147483648
    %v2474 = vxor.u32 %v2458, 2147483648
    %v2475 = vmul.f32 %v2473, 1.442695
    %v2476 = vpow.pop %v2475
    %v2477 = vmul.f32 %v2474, 1.442695
    %v2478 = vpow.pop %v2477
    %v2479 = vadd.f32 %v2476, 1.0
    %v2480 = vadd.f32 %v2478, 1.0
    %v2481 = vrcp.pop %v2479
    %v2482 = vmul.f32 1.0, %v2481
    %v2483 = vrcp.pop %v2480
    %v2484 = vmul.f32 1.0, %v2483
    %v2485 = vtanh.pop %v2455
    %v2486 = vtanh.pop %v2459
    %v2487 = vxor.u32 %v2456, 2147483648
    %v2488 = vxor.u32 %v2460, 2147483648
    %v2489 = vmul.f32 %v2487, 1.442695
    %v2490 = vpow.pop %v2489
    %v2491 = vmul.f32 %v2488, 1.442695
    %v2492 = vpow.pop %v2491
    %v2493 = vadd.f32 %v2490, 1.0
    %v2494 = vadd.f32 %v2492, 1.0
    %v2495 = vrcp.pop %v2493
    %v2496 = vmul.f32 1.0, %v2495
    %v2497 = vrcp.pop %v2494
    %v2498 = vmul.f32 1.0, %v2497
    %v2499 = vmul.f32 %v2482, %v2331
    %v2500 = vmul.f32 %v2484, %v2332
    %v2501 = vmul.f32 %v2470, %v2485
    %v2502 = vmul.f32 %v2472, %v2486
    %v2503 = vadd.f32 %v2499, %v2501
    %v2504 = vadd.f32 %v2500, %v2502
    %v2505 = vtanh.pop %v2503
    %v2506 = vtanh.pop %v2504
    %v2507 = vmul.f32 %v2496, %v2505
    %v2508 = vmul.f32 %v2498, %v2506
    %v2509 = vadd.f32 %v2337, %v2507
    %v2510 = vadd.f32 %v2338, %v2508
    %v2511 = vmul.f32 %v2507, %v2507
    %v2512 = vmul.f32 %v2508, %v2508
    %v2513 = vadd.f32 %v2341, %v2511
    %v2514 = vadd.f32 %v2342, %v2512
    %v2515 = vmax.f32 %v2343, %v2507
    %v2516 = vmax.f32 %v2344, %v2508
    %v2517 = vmin.f32 %v2345, %v2507
    %v2518 = vmin.f32 %v2346, %v2508
    %s2519 = smul.u32 6, 4
    %s2520 = smul.addr %s2519, 8
    %s2521 = scalar_lea.vmem [#allocation2], %s2520
    %v2522 = vld [vmem:[%s2521] sm:$0xff]
    %v2523 = vld [vmem:[%s2521 + $0x8] sm:$0xff]
    %v2524 = vld [vmem:[%s2521 + $0x10] sm:$0xff]
    %v2525 = vld [vmem:[%s2521 + $0x18] sm:$0xff]
    %s2526 = smul.u32 9, 4
    %s2527 = smul.addr %s2526, 8
    %s2528 = scalar_lea.vmem [#allocation3], %s2527
    %v2529 = vld [vmem:[%s2528] sm:$0xff]
    %v2530 = vld [vmem:[%s2528 + $0x8] sm:$0xff]
    %v2531 = vld [vmem:[%s2528 + $0x10] sm:$0xff]
    %v2532 = vld [vmem:[%s2528 + $0x18] sm:$0xff]
    %v2533 = vmul.f32 %v2507, %v1167
    %v2534 = vmul.f32 %v2508, %v1168
    %v2535 = vmul.f32 %v2507, %v1185
    %v2536 = vmul.f32 %v2508, %v1186
    %v2537 = vpack.c.bf16 %v2534, %v2533
    %v2538 = vpack.c.bf16 %v2536, %v2535
    %2539 = vmatprep.subr.bf16.mxu0 %v1412
    %2540 = vmatpush1.bf16.msra.mxu0 %v1411
    %2541 = vmatprep.subr.bf16.mxu0 %v1408
    %2542 = vmatpush1.bf16.msra.mxu0 %v1407
    %2543 = vmatprep.subr.bf16.mxu0 %v1404
    %2544 = vmatpush1.bf16.msra.mxu0 %v1403
    %2545 = vmatprep.subr.bf16.mxu0 %v1400
    %2546 = vmatpush1.bf16.msra.mxu0 %v1399
    %2547 = vmatprep.subr.bf16.mxu0 %v1396
    %2548 = vmatpush1.bf16.msra.mxu0 %v1395
    %2549 = vmatprep.subr.bf16.mxu0 %v1392
    %2550 = vmatpush1.bf16.msra.mxu0 %v1391
    %2551 = vmatprep.subr.bf16.mxu0 %v1388
    %2552 = vmatpush1.bf16.msra.mxu0 %v1387
    %2553 = vmatprep.subr.bf16.mxu0 %v1384
    %2554 = vmatpush1.bf16.msra.mxu0 %v1383
    %2555 = vmatprep.subr.bf16.mxu0 %v1444
    %2556 = vmatpush2.bf16.msra.mxu0 %v1443
    %2557 = vmatprep.subr.bf16.mxu0 %v1440
    %2558 = vmatpush2.bf16.msra.mxu0 %v1439
    %2559 = vmatprep.subr.bf16.mxu0 %v1436
    %2560 = vmatpush2.bf16.msra.mxu0 %v1435
    %2561 = vmatprep.subr.bf16.mxu0 %v1432
    %2562 = vmatpush2.bf16.msra.mxu0 %v1431
    %2563 = vmatprep.subr.bf16.mxu0 %v1428
    %2564 = vmatpush2.bf16.msra.mxu0 %v1427
    %2565 = vmatprep.subr.bf16.mxu0 %v1424
    %2566 = vmatpush2.bf16.msra.mxu0 %v1423
    %2567 = vmatprep.subr.bf16.mxu0 %v1420
    %2568 = vmatpush2.bf16.msra.mxu0 %v1419
    %2569 = vmatprep.subr.bf16.mxu0 %v1416
    %2570 = vmatpush2.bf16.msra.mxu0 %v1415
    %2571 = vmatprep.mubr.bf16.mxu0 %v2538
    %2572 = vmatmul.mubr.bf16.gmra.mxu0 %v2537
    %v2573 = vpop.f32.mrf.mxu0
    %v2574 = vadd.f32 0.0, %v2573
    %v2575 = vpop.f32.mrf.mxu0
    %v2576 = vadd.f32 0.0, %v2575
    %v2577 = vpop.f32.mrf.mxu0
    %v2578 = vadd.f32 0.0, %v2577
    %v2579 = vpop.f32.mrf.mxu0
    %v2580 = vadd.f32 0.0, %v2579
    %2581 = vdwg.mxu0
    %2582 = vmatprep.subr.bf16.mxu0 %v1414
    %2583 = vmatpush1.bf16.msra.mxu0 %v1413
    %2584 = vmatprep.subr.bf16.mxu0 %v1410
    %2585 = vmatpush1.bf16.msra.mxu0 %v1409
    %2586 = vmatprep.subr.bf16.mxu0 %v1406
    %2587 = vmatpush1.bf16.msra.mxu0 %v1405
    %2588 = vmatprep.subr.bf16.mxu0 %v1402
    %2589 = vmatpush1.bf16.msra.mxu0 %v1401
    %2590 = vmatprep.subr.bf16.mxu0 %v1398
    %2591 = vmatpush1.bf16.msra.mxu0 %v1397
    %2592 = vmatprep.subr.bf16.mxu0 %v1394
    %2593 = vmatpush1.bf16.msra.mxu0 %v1393
    %2594 = vmatprep.subr.bf16.mxu0 %v1390
    %2595 = vmatpush1.bf16.msra.mxu0 %v1389
    %2596 = vmatprep.subr.bf16.mxu0 %v1386
    %2597 = vmatpush1.bf16.msra.mxu0 %v1385
    %2598 = vmatprep.subr.bf16.mxu0 %v1446
    %2599 = vmatpush2.bf16.msra.mxu0 %v1445
    %2600 = vmatprep.subr.bf16.mxu0 %v1442
    %2601 = vmatpush2.bf16.msra.mxu0 %v1441
    %2602 = vmatprep.subr.bf16.mxu0 %v1438
    %2603 = vmatpush2.bf16.msra.mxu0 %v1437
    %2604 = vmatprep.subr.bf16.mxu0 %v1434
    %2605 = vmatpush2.bf16.msra.mxu0 %v1433
    %2606 = vmatprep.subr.bf16.mxu0 %v1430
    %2607 = vmatpush2.bf16.msra.mxu0 %v1429
    %2608 = vmatprep.subr.bf16.mxu0 %v1426
    %2609 = vmatpush2.bf16.msra.mxu0 %v1425
    %2610 = vmatprep.subr.bf16.mxu0 %v1422
    %2611 = vmatpush2.bf16.msra.mxu0 %v1421
    %2612 = vmatprep.subr.bf16.mxu0 %v1418
    %2613 = vmatpush2.bf16.msra.mxu0 %v1417
    %2614 = vmatprep.mubr.bf16.mxu0 %v2538
    %2615 = vmatmul.mubr.bf16.gmra.mxu0 %v2537
    %v2616 = vpop.f32.mrf.mxu0
    %v2617 = vadd.f32 0.0, %v2616
    %v2618 = vpop.f32.mrf.mxu0
    %v2619 = vadd.f32 0.0, %v2618
    %v2620 = vpop.f32.mrf.mxu0
    %v2621 = vadd.f32 0.0, %v2620
    %v2622 = vpop.f32.mrf.mxu0
    %v2623 = vadd.f32 0.0, %v2622
    %2624 = vdwg.mxu0
    %v2625 = vadd.f32 %v2522, %v2574
    %v2626 = vadd.f32 %v2523, %v2576
    %v2627 = vadd.f32 %v2524, %v2617
    %v2628 = vadd.f32 %v2525, %v2619
    %v2629 = vadd.f32 %v2529, %v2578
    %v2630 = vadd.f32 %v2530, %v2580
    %v2631 = vadd.f32 %v2531, %v2621
    %v2632 = vadd.f32 %v2532, %v2623
    %v2633 = vxor.u32 %v2625, 2147483648
    %v2634 = vxor.u32 %v2629, 2147483648
    %v2635 = vmul.f32 %v2633, 1.442695
    %v2636 = vpow.pop %v2635
    %v2637 = vmul.f32 %v2634, 1.442695
    %v2638 = vpow.pop %v2637
    %v2639 = vadd.f32 %v2636, 1.0
    %v2640 = vadd.f32 %v2638, 1.0
    %v2641 = vrcp.pop %v2639
    %v2642 = vmul.f32 1.0, %v2641
    %v2643 = vrcp.pop %v2640
    %v2644 = vmul.f32 1.0, %v2643
    %v2645 = vxor.u32 %v2626, 2147483648
    %v2646 = vxor.u32 %v2630, 2147483648
    %v2647 = vmul.f32 %v2645, 1.442695
    %v2648 = vpow.pop %v2647
    %v2649 = vmul.f32 %v2646, 1.442695
    %v2650 = vpow.pop %v2649
    %v2651 = vadd.f32 %v2648, 1.0
    %v2652 = vadd.f32 %v2650, 1.0
    %v2653 = vrcp.pop %v2651
    %v2654 = vmul.f32 1.0, %v2653
    %v2655 = vrcp.pop %v2652
    %v2656 = vmul.f32 1.0, %v2655
    %v2657 = vtanh.pop %v2627
    %v2658 = vtanh.pop %v2631
    %v2659 = vxor.u32 %v2628, 2147483648
    %v2660 = vxor.u32 %v2632, 2147483648
    %v2661 = vmul.f32 %v2659, 1.442695
    %v2662 = vpow.pop %v2661
    %v2663 = vmul.f32 %v2660, 1.442695
    %v2664 = vpow.pop %v2663
    %v2665 = vadd.f32 %v2662, 1.0
    %v2666 = vadd.f32 %v2664, 1.0
    %v2667 = vrcp.pop %v2665
    %v2668 = vmul.f32 1.0, %v2667
    %v2669 = vrcp.pop %v2666
    %v2670 = vmul.f32 1.0, %v2669
    %v2671 = vmul.f32 %v2654, %v2503
    %v2672 = vmul.f32 %v2656, %v2504
    %v2673 = vmul.f32 %v2642, %v2657
    %v2674 = vmul.f32 %v2644, %v2658
    %v2675 = vadd.f32 %v2671, %v2673
    %v2676 = vadd.f32 %v2672, %v2674
    %v2677 = vtanh.pop %v2675
    %v2678 = vtanh.pop %v2676
    %v2679 = vmul.f32 %v2668, %v2677
    %v2680 = vmul.f32 %v2670, %v2678
    %v2681 = vadd.f32 %v2509, %v2679
    %v2682 = vadd.f32 %v2510, %v2680
    %v2683 = vmul.f32 %v2679, %v2679
    %v2684 = vmul.f32 %v2680, %v2680
    %v2685 = vadd.f32 %v2513, %v2683
    %v2686 = vadd.f32 %v2514, %v2684
    %v2687 = vmax.f32 %v2515, %v2679
    %v2688 = vmax.f32 %v2516, %v2680
    %v2689 = vmin.f32 %v2517, %v2679
    %v2690 = vmin.f32 %v2518, %v2680
    %s2691 = smul.u32 7, 4
    %s2692 = smul.addr %s2691, 8
    %s2693 = scalar_lea.vmem [#allocation2], %s2692
    %v2694 = vld [vmem:[%s2693] sm:$0xff]
    %v2695 = vld [vmem:[%s2693 + $0x8] sm:$0xff]
    %v2696 = vld [vmem:[%s2693 + $0x10] sm:$0xff]
    %v2697 = vld [vmem:[%s2693 + $0x18] sm:$0xff]
    %s2698 = smul.u32 8, 4
    %s2699 = smul.addr %s2698, 8
    %s2700 = scalar_lea.vmem [#allocation3], %s2699
    %v2701 = vld [vmem:[%s2700] sm:$0xff]
    %v2702 = vld [vmem:[%s2700 + $0x8] sm:$0xff]
    %v2703 = vld [vmem:[%s2700 + $0x10] sm:$0xff]
    %v2704 = vld [vmem:[%s2700 + $0x18] sm:$0xff]
    %v2705 = vmul.f32 %v2679, %v1167
    %v2706 = vmul.f32 %v2680, %v1168
    %v2707 = vmul.f32 %v2679, %v1185
    %v2708 = vmul.f32 %v2680, %v1186
    %v2709 = vpack.c.bf16 %v2706, %v2705
    %v2710 = vpack.c.bf16 %v2708, %v2707
    %2711 = vmatprep.subr.bf16.mxu0 %v1412
    %2712 = vmatpush1.bf16.msra.mxu0 %v1411
    %2713 = vmatprep.subr.bf16.mxu0 %v1408
    %2714 = vmatpush1.bf16.msra.mxu0 %v1407
    %2715 = vmatprep.subr.bf16.mxu0 %v1404
    %2716 = vmatpush1.bf16.msra.mxu0 %v1403
    %2717 = vmatprep.subr.bf16.mxu0 %v1400
    %2718 = vmatpush1.bf16.msra.mxu0 %v1399
    %2719 = vmatprep.subr.bf16.mxu0 %v1396
    %2720 = vmatpush1.bf16.msra.mxu0 %v1395
    %2721 = vmatprep.subr.bf16.mxu0 %v1392
    %2722 = vmatpush1.bf16.msra.mxu0 %v1391
    %2723 = vmatprep.subr.bf16.mxu0 %v1388
    %2724 = vmatpush1.bf16.msra.mxu0 %v1387
    %2725 = vmatprep.subr.bf16.mxu0 %v1384
    %2726 = vmatpush1.bf16.msra.mxu0 %v1383
    %2727 = vmatprep.subr.bf16.mxu0 %v1444
    %2728 = vmatpush2.bf16.msra.mxu0 %v1443
    %2729 = vmatprep.subr.bf16.mxu0 %v1440
    %2730 = vmatpush2.bf16.msra.mxu0 %v1439
    %2731 = vmatprep.subr.bf16.mxu0 %v1436
    %2732 = vmatpush2.bf16.msra.mxu0 %v1435
    %2733 = vmatprep.subr.bf16.mxu0 %v1432
    %2734 = vmatpush2.bf16.msra.mxu0 %v1431
    %2735 = vmatprep.subr.bf16.mxu0 %v1428
    %2736 = vmatpush2.bf16.msra.mxu0 %v1427
    %2737 = vmatprep.subr.bf16.mxu0 %v1424
    %2738 = vmatpush2.bf16.msra.mxu0 %v1423
    %2739 = vmatprep.subr.bf16.mxu0 %v1420
    %2740 = vmatpush2.bf16.msra.mxu0 %v1419
    %2741 = vmatprep.subr.bf16.mxu0 %v1416
    %2742 = vmatpush2.bf16.msra.mxu0 %v1415
    %2743 = vmatprep.mubr.bf16.mxu0 %v2710
    %2744 = vmatmul.mubr.bf16.gmra.mxu0 %v2709
    %v2745 = vpop.f32.mrf.mxu0
    %v2746 = vadd.f32 0.0, %v2745
    %v2747 = vpop.f32.mrf.mxu0
    %v2748 = vadd.f32 0.0, %v2747
    %v2749 = vpop.f32.mrf.mxu0
    %v2750 = vadd.f32 0.0, %v2749
    %v2751 = vpop.f32.mrf.mxu0
    %v2752 = vadd.f32 0.0, %v2751
    %2753 = vdwg.mxu0
    %2754 = vmatprep.subr.bf16.mxu0 %v1414
    %2755 = vmatpush1.bf16.msra.mxu0 %v1413
    %2756 = vmatprep.subr.bf16.mxu0 %v1410
    %2757 = vmatpush1.bf16.msra.mxu0 %v1409
    %2758 = vmatprep.subr.bf16.mxu0 %v1406
    %2759 = vmatpush1.bf16.msra.mxu0 %v1405
    %2760 = vmatprep.subr.bf16.mxu0 %v1402
    %2761 = vmatpush1.bf16.msra.mxu0 %v1401
    %2762 = vmatprep.subr.bf16.mxu0 %v1398
    %2763 = vmatpush1.bf16.msra.mxu0 %v1397
    %2764 = vmatprep.subr.bf16.mxu0 %v1394
    %2765 = vmatpush1.bf16.msra.mxu0 %v1393
    %2766 = vmatprep.subr.bf16.mxu0 %v1390
    %2767 = vmatpush1.bf16.msra.mxu0 %v1389
    %2768 = vmatprep.subr.bf16.mxu0 %v1386
    %2769 = vmatpush1.bf16.msra.mxu0 %v1385
    %2770 = vmatprep.subr.bf16.mxu0 %v1446
    %2771 = vmatpush2.bf16.msra.mxu0 %v1445
    %2772 = vmatprep.subr.bf16.mxu0 %v1442
    %2773 = vmatpush2.bf16.msra.mxu0 %v1441
    %2774 = vmatprep.subr.bf16.mxu0 %v1438
    %2775 = vmatpush2.bf16.msra.mxu0 %v1437
    %2776 = vmatprep.subr.bf16.mxu0 %v1434
    %2777 = vmatpush2.bf16.msra.mxu0 %v1433
    %2778 = vmatprep.subr.bf16.mxu0 %v1430
    %2779 = vmatpush2.bf16.msra.mxu0 %v1429
    %2780 = vmatprep.subr.bf16.mxu0 %v1426
    %2781 = vmatpush2.bf16.msra.mxu0 %v1425
    %2782 = vmatprep.subr.bf16.mxu0 %v1422
    %2783 = vmatpush2.bf16.msra.mxu0 %v1421
    %2784 = vmatprep.subr.bf16.mxu0 %v1418
    %2785 = vmatpush2.bf16.msra.mxu0 %v1417
    %2786 = vmatprep.mubr.bf16.mxu0 %v2710
    %2787 = vmatmul.mubr.bf16.gmra.mxu0 %v2709
    %v2788 = vpop.f32.mrf.mxu0
    %v2789 = vadd.f32 0.0, %v2788
    %v2790 = vpop.f32.mrf.mxu0
    %v2791 = vadd.f32 0.0, %v2790
    %v2792 = vpop.f32.mrf.mxu0
    %v2793 = vadd.f32 0.0, %v2792
    %v2794 = vpop.f32.mrf.mxu0
    %v2795 = vadd.f32 0.0, %v2794
    %2796 = vdwg.mxu0
    %v2797 = vadd.f32 %v2694, %v2746
    %v2798 = vadd.f32 %v2695, %v2748
    %v2799 = vadd.f32 %v2696, %v2789
    %v2800 = vadd.f32 %v2697, %v2791
    %v2801 = vadd.f32 %v2701, %v2750
    %v2802 = vadd.f32 %v2702, %v2752
    %v2803 = vadd.f32 %v2703, %v2793
    %v2804 = vadd.f32 %v2704, %v2795
    %v2805 = vxor.u32 %v2797, 2147483648
    %v2806 = vxor.u32 %v2801, 2147483648
    %v2807 = vmul.f32 %v2805, 1.442695
    %v2808 = vpow.pop %v2807
    %v2809 = vmul.f32 %v2806, 1.442695
    %v2810 = vpow.pop %v2809
    %v2811 = vadd.f32 %v2808, 1.0
    %v2812 = vadd.f32 %v2810, 1.0
    %v2813 = vrcp.pop %v2811
    %v2814 = vmul.f32 1.0, %v2813
    %v2815 = vrcp.pop %v2812
    %v2816 = vmul.f32 1.0, %v2815
    %v2817 = vxor.u32 %v2798, 2147483648
    %v2818 = vxor.u32 %v2802, 2147483648
    %v2819 = vmul.f32 %v2817, 1.442695
    %v2820 = vpow.pop %v2819
    %v2821 = vmul.f32 %v2818, 1.442695
    %v2822 = vpow.pop %v2821
    %v2823 = vadd.f32 %v2820, 1.0
    %v2824 = vadd.f32 %v2822, 1.0
    %v2825 = vrcp.pop %v2823
    %v2826 = vmul.f32 1.0, %v2825
    %v2827 = vrcp.pop %v2824
    %v2828 = vmul.f32 1.0, %v2827
    %v2829 = vtanh.pop %v2799
    %v2830 = vtanh.pop %v2803
    %v2831 = vxor.u32 %v2800, 2147483648
    %v2832 = vxor.u32 %v2804, 2147483648
    %v2833 = vmul.f32 %v2831, 1.442695
    %v2834 = vpow.pop %v2833
    %v2835 = vmul.f32 %v2832, 1.442695
    %v2836 = vpow.pop %v2835
    %v2837 = vadd.f32 %v2834, 1.0
    %v2838 = vadd.f32 %v2836, 1.0
    %v2839 = vrcp.pop %v2837
    %v2840 = vmul.f32 1.0, %v2839
    %v2841 = vrcp.pop %v2838
    %v2842 = vmul.f32 1.0, %v2841
    %v2843 = vmul.f32 %v2826, %v2675
    %v2844 = vmul.f32 %v2828, %v2676
    %v2845 = vmul.f32 %v2814, %v2829
    %v2846 = vmul.f32 %v2816, %v2830
    %v2847 = vadd.f32 %v2843, %v2845
    %v2848 = vadd.f32 %v2844, %v2846
    %v2849 = vtanh.pop %v2847
    %v2850 = vtanh.pop %v2848
    %v2851 = vmul.f32 %v2840, %v2849
    %v2852 = vmul.f32 %v2842, %v2850
    %v2853 = vadd.f32 %v2681, %v2851
    %v2854 = vadd.f32 %v2682, %v2852
    %v2855 = vmul.f32 %v2851, %v2851
    %v2856 = vmul.f32 %v2852, %v2852
    %v2857 = vadd.f32 %v2685, %v2855
    %v2858 = vadd.f32 %v2686, %v2856
    %v2859 = vmax.f32 %v2687, %v2851
    %v2860 = vmax.f32 %v2688, %v2852
    %v2861 = vmin.f32 %v2689, %v2851
    %v2862 = vmin.f32 %v2690, %v2852
    %s2863 = smul.addr %s2698, 8
    %s2864 = scalar_lea.vmem [#allocation2], %s2863
    %v2865 = vld [vmem:[%s2864] sm:$0xff]
    %v2866 = vld [vmem:[%s2864 + $0x8] sm:$0xff]
    %v2867 = vld [vmem:[%s2864 + $0x10] sm:$0xff]
    %v2868 = vld [vmem:[%s2864 + $0x18] sm:$0xff]
    %s2869 = smul.addr %s2691, 8
    %s2870 = scalar_lea.vmem [#allocation3], %s2869
    %v2871 = vld [vmem:[%s2870] sm:$0xff]
    %v2872 = vld [vmem:[%s2870 + $0x8] sm:$0xff]
    %v2873 = vld [vmem:[%s2870 + $0x10] sm:$0xff]
    %v2874 = vld [vmem:[%s2870 + $0x18] sm:$0xff]
    %v2875 = vmul.f32 %v2851, %v1167
    %v2876 = vmul.f32 %v2852, %v1168
    %v2877 = vmul.f32 %v2851, %v1185
    %v2878 = vmul.f32 %v2852, %v1186
    %v2879 = vpack.c.bf16 %v2876, %v2875
    %v2880 = vpack.c.bf16 %v2878, %v2877
    %2881 = vmatprep.subr.bf16.mxu0 %v1412
    %2882 = vmatpush1.bf16.msra.mxu0 %v1411
    %2883 = vmatprep.subr.bf16.mxu0 %v1408
    %2884 = vmatpush1.bf16.msra.mxu0 %v1407
    %2885 = vmatprep.subr.bf16.mxu0 %v1404
    %2886 = vmatpush1.bf16.msra.mxu0 %v1403
    %2887 = vmatprep.subr.bf16.mxu0 %v1400
    %2888 = vmatpush1.bf16.msra.mxu0 %v1399
    %2889 = vmatprep.subr.bf16.mxu0 %v1396
    %2890 = vmatpush1.bf16.msra.mxu0 %v1395
    %2891 = vmatprep.subr.bf16.mxu0 %v1392
    %2892 = vmatpush1.bf16.msra.mxu0 %v1391
    %2893 = vmatprep.subr.bf16.mxu0 %v1388
    %2894 = vmatpush1.bf16.msra.mxu0 %v1387
    %2895 = vmatprep.subr.bf16.mxu0 %v1384
    %2896 = vmatpush1.bf16.msra.mxu0 %v1383
    %2897 = vmatprep.subr.bf16.mxu0 %v1444
    %2898 = vmatpush2.bf16.msra.mxu0 %v1443
    %2899 = vmatprep.subr.bf16.mxu0 %v1440
    %2900 = vmatpush2.bf16.msra.mxu0 %v1439
    %2901 = vmatprep.subr.bf16.mxu0 %v1436
    %2902 = vmatpush2.bf16.msra.mxu0 %v1435
    %2903 = vmatprep.subr.bf16.mxu0 %v1432
    %2904 = vmatpush2.bf16.msra.mxu0 %v1431
    %2905 = vmatprep.subr.bf16.mxu0 %v1428
    %2906 = vmatpush2.bf16.msra.mxu0 %v1427
    %2907 = vmatprep.subr.bf16.mxu0 %v1424
    %2908 = vmatpush2.bf16.msra.mxu0 %v1423
    %2909 = vmatprep.subr.bf16.mxu0 %v1420
    %2910 = vmatpush2.bf16.msra.mxu0 %v1419
    %2911 = vmatprep.subr.bf16.mxu0 %v1416
    %2912 = vmatpush2.bf16.msra.mxu0 %v1415
    %2913 = vmatprep.mubr.bf16.mxu0 %v2880
    %2914 = vmatmul.mubr.bf16.gmra.mxu0 %v2879
    %v2915 = vpop.f32.mrf.mxu0
    %v2916 = vadd.f32 0.0, %v2915
    %v2917 = vpop.f32.mrf.mxu0
    %v2918 = vadd.f32 0.0, %v2917
    %v2919 = vpop.f32.mrf.mxu0
    %v2920 = vadd.f32 0.0, %v2919
    %v2921 = vpop.f32.mrf.mxu0
    %v2922 = vadd.f32 0.0, %v2921
    %2923 = vdwg.mxu0
    %2924 = vmatprep.subr.bf16.mxu0 %v1414
    %2925 = vmatpush1.bf16.msra.mxu0 %v1413
    %2926 = vmatprep.subr.bf16.mxu0 %v1410
    %2927 = vmatpush1.bf16.msra.mxu0 %v1409
    %2928 = vmatprep.subr.bf16.mxu0 %v1406
    %2929 = vmatpush1.bf16.msra.mxu0 %v1405
    %2930 = vmatprep.subr.bf16.mxu0 %v1402
    %2931 = vmatpush1.bf16.msra.mxu0 %v1401
    %2932 = vmatprep.subr.bf16.mxu0 %v1398
    %2933 = vmatpush1.bf16.msra.mxu0 %v1397
    %2934 = vmatprep.subr.bf16.mxu0 %v1394
    %2935 = vmatpush1.bf16.msra.mxu0 %v1393
    %2936 = vmatprep.subr.bf16.mxu0 %v1390
    %2937 = vmatpush1.bf16.msra.mxu0 %v1389
    %2938 = vmatprep.subr.bf16.mxu0 %v1386
    %2939 = vmatpush1.bf16.msra.mxu0 %v1385
    %2940 = vmatprep.subr.bf16.mxu0 %v1446
    %2941 = vmatpush2.bf16.msra.mxu0 %v1445
    %2942 = vmatprep.subr.bf16.mxu0 %v1442
    %2943 = vmatpush2.bf16.msra.mxu0 %v1441
    %2944 = vmatprep.subr.bf16.mxu0 %v1438
    %2945 = vmatpush2.bf16.msra.mxu0 %v1437
    %2946 = vmatprep.subr.bf16.mxu0 %v1434
    %2947 = vmatpush2.bf16.msra.mxu0 %v1433
    %2948 = vmatprep.subr.bf16.mxu0 %v1430
    %2949 = vmatpush2.bf16.msra.mxu0 %v1429
    %2950 = vmatprep.subr.bf16.mxu0 %v1426
    %2951 = vmatpush2.bf16.msra.mxu0 %v1425
    %2952 = vmatprep.subr.bf16.mxu0 %v1422
    %2953 = vmatpush2.bf16.msra.mxu0 %v1421
    %2954 = vmatprep.subr.bf16.mxu0 %v1418
    %2955 = vmatpush2.bf16.msra.mxu0 %v1417
    %2956 = vmatprep.mubr.bf16.mxu0 %v2880
    %2957 = vmatmul.mubr.bf16.gmra.mxu0 %v2879
    %v2958 = vpop.f32.mrf.mxu0
    %v2959 = vadd.f32 0.0, %v2958
    %v2960 = vpop.f32.mrf.mxu0
    %v2961 = vadd.f32 0.0, %v2960
    %v2962 = vpop.f32.mrf.mxu0
    %v2963 = vadd.f32 0.0, %v2962
    %v2964 = vpop.f32.mrf.mxu0
    %v2965 = vadd.f32 0.0, %v2964
    %2966 = vdwg.mxu0
    %v2967 = vadd.f32 %v2865, %v2916
    %v2968 = vadd.f32 %v2866, %v2918
    %v2969 = vadd.f32 %v2867, %v2959
    %v2970 = vadd.f32 %v2868, %v2961
    %v2971 = vadd.f32 %v2871, %v2920
    %v2972 = vadd.f32 %v2872, %v2922
    %v2973 = vadd.f32 %v2873, %v2963
    %v2974 = vadd.f32 %v2874, %v2965
    %v2975 = vxor.u32 %v2967, 2147483648
    %v2976 = vxor.u32 %v2971, 2147483648
    %v2977 = vmul.f32 %v2975, 1.442695
    %v2978 = vpow.pop %v2977
    %v2979 = vmul.f32 %v2976, 1.442695
    %v2980 = vpow.pop %v2979
    %v2981 = vadd.f32 %v2978, 1.0
    %v2982 = vadd.f32 %v2980, 1.0
    %v2983 = vrcp.pop %v2981
    %v2984 = vmul.f32 1.0, %v2983
    %v2985 = vrcp.pop %v2982
    %v2986 = vmul.f32 1.0, %v2985
    %v2987 = vxor.u32 %v2968, 2147483648
    %v2988 = vxor.u32 %v2972, 2147483648
    %v2989 = vmul.f32 %v2987, 1.442695
    %v2990 = vpow.pop %v2989
    %v2991 = vmul.f32 %v2988, 1.442695
    %v2992 = vpow.pop %v2991
    %v2993 = vadd.f32 %v2990, 1.0
    %v2994 = vadd.f32 %v2992, 1.0
    %v2995 = vrcp.pop %v2993
    %v2996 = vmul.f32 1.0, %v2995
    %v2997 = vrcp.pop %v2994
    %v2998 = vmul.f32 1.0, %v2997
    %v2999 = vtanh.pop %v2969
    %v3000 = vtanh.pop %v2973
    %v3001 = vxor.u32 %v2970, 2147483648
    %v3002 = vxor.u32 %v2974, 2147483648
    %v3003 = vmul.f32 %v3001, 1.442695
    %v3004 = vpow.pop %v3003
    %v3005 = vmul.f32 %v3002, 1.442695
    %v3006 = vpow.pop %v3005
    %v3007 = vadd.f32 %v3004, 1.0
    %v3008 = vadd.f32 %v3006, 1.0
    %v3009 = vrcp.pop %v3007
    %v3010 = vmul.f32 1.0, %v3009
    %v3011 = vrcp.pop %v3008
    %v3012 = vmul.f32 1.0, %v3011
    %v3013 = vmul.f32 %v2996, %v2847
    %v3014 = vmul.f32 %v2998, %v2848
    %v3015 = vmul.f32 %v2984, %v2999
    %v3016 = vmul.f32 %v2986, %v3000
    %v3017 = vadd.f32 %v3013, %v3015
    %v3018 = vadd.f32 %v3014, %v3016
    %v3019 = vtanh.pop %v3017
    %v3020 = vtanh.pop %v3018
    %v3021 = vmul.f32 %v3010, %v3019
    %v3022 = vmul.f32 %v3012, %v3020
    %v3023 = vadd.f32 %v2853, %v3021
    %v3024 = vadd.f32 %v2854, %v3022
    %v3025 = vmul.f32 %v3021, %v3021
    %v3026 = vmul.f32 %v3022, %v3022
    %v3027 = vadd.f32 %v2857, %v3025
    %v3028 = vadd.f32 %v2858, %v3026
    %v3029 = vmax.f32 %v2859, %v3021
    %v3030 = vmax.f32 %v2860, %v3022
    %v3031 = vmin.f32 %v2861, %v3021
    %v3032 = vmin.f32 %v2862, %v3022
    %s3033 = smul.addr %s2526, 8
    %s3034 = scalar_lea.vmem [#allocation2], %s3033
    %v3035 = vld [vmem:[%s3034] sm:$0xff]
    %v3036 = vld [vmem:[%s3034 + $0x8] sm:$0xff]
    %v3037 = vld [vmem:[%s3034 + $0x10] sm:$0xff]
    %v3038 = vld [vmem:[%s3034 + $0x18] sm:$0xff]
    %s3039 = smul.addr %s2519, 8
    %s3040 = scalar_lea.vmem [#allocation3], %s3039
    %v3041 = vld [vmem:[%s3040] sm:$0xff]
    %v3042 = vld [vmem:[%s3040 + $0x8] sm:$0xff]
    %v3043 = vld [vmem:[%s3040 + $0x10] sm:$0xff]
    %v3044 = vld [vmem:[%s3040 + $0x18] sm:$0xff]
    %v3045 = vmul.f32 %v3021, %v1167
    %v3046 = vmul.f32 %v3022, %v1168
    %v3047 = vmul.f32 %v3021, %v1185
    %v3048 = vmul.f32 %v3022, %v1186
    %v3049 = vpack.c.bf16 %v3046, %v3045
    %v3050 = vpack.c.bf16 %v3048, %v3047
    %3051 = vmatprep.subr.bf16.mxu0 %v1412
    %3052 = vmatpush1.bf16.msra.mxu0 %v1411
    %3053 = vmatprep.subr.bf16.mxu0 %v1408
    %3054 = vmatpush1.bf16.msra.mxu0 %v1407
    %3055 = vmatprep.subr.bf16.mxu0 %v1404
    %3056 = vmatpush1.bf16.msra.mxu0 %v1403
    %3057 = vmatprep.subr.bf16.mxu0 %v1400
    %3058 = vmatpush1.bf16.msra.mxu0 %v1399
    %3059 = vmatprep.subr.bf16.mxu0 %v1396
    %3060 = vmatpush1.bf16.msra.mxu0 %v1395
    %3061 = vmatprep.subr.bf16.mxu0 %v1392
    %3062 = vmatpush1.bf16.msra.mxu0 %v1391
    %3063 = vmatprep.subr.bf16.mxu0 %v1388
    %3064 = vmatpush1.bf16.msra.mxu0 %v1387
    %3065 = vmatprep.subr.bf16.mxu0 %v1384
    %3066 = vmatpush1.bf16.msra.mxu0 %v1383
    %3067 = vmatprep.subr.bf16.mxu0 %v1444
    %3068 = vmatpush2.bf16.msra.mxu0 %v1443
    %3069 = vmatprep.subr.bf16.mxu0 %v1440
    %3070 = vmatpush2.bf16.msra.mxu0 %v1439
    %3071 = vmatprep.subr.bf16.mxu0 %v1436
    %3072 = vmatpush2.bf16.msra.mxu0 %v1435
    %3073 = vmatprep.subr.bf16.mxu0 %v1432
    %3074 = vmatpush2.bf16.msra.mxu0 %v1431
    %3075 = vmatprep.subr.bf16.mxu0 %v1428
    %3076 = vmatpush2.bf16.msra.mxu0 %v1427
    %3077 = vmatprep.subr.bf16.mxu0 %v1424
    %3078 = vmatpush2.bf16.msra.mxu0 %v1423
    %3079 = vmatprep.subr.bf16.mxu0 %v1420
    %3080 = vmatpush2.bf16.msra.mxu0 %v1419
    %3081 = vmatprep.subr.bf16.mxu0 %v1416
    %3082 = vmatpush2.bf16.msra.mxu0 %v1415
    %3083 = vmatprep.mubr.bf16.mxu0 %v3050
    %3084 = vmatmul.mubr.bf16.gmra.mxu0 %v3049
    %v3085 = vpop.f32.mrf.mxu0
    %v3086 = vadd.f32 0.0, %v3085
    %v3087 = vpop.f32.mrf.mxu0
    %v3088 = vadd.f32 0.0, %v3087
    %v3089 = vpop.f32.mrf.mxu0
    %v3090 = vadd.f32 0.0, %v3089
    %v3091 = vpop.f32.mrf.mxu0
    %v3092 = vadd.f32 0.0, %v3091
    %3093 = vdwg.mxu0
    %3094 = vmatprep.subr.bf16.mxu0 %v1414
    %3095 = vmatpush1.bf16.msra.mxu0 %v1413
    %3096 = vmatprep.subr.bf16.mxu0 %v1410
    %3097 = vmatpush1.bf16.msra.mxu0 %v1409
    %3098 = vmatprep.subr.bf16.mxu0 %v1406
    %3099 = vmatpush1.bf16.msra.mxu0 %v1405
    %3100 = vmatprep.subr.bf16.mxu0 %v1402
    %3101 = vmatpush1.bf16.msra.mxu0 %v1401
    %3102 = vmatprep.subr.bf16.mxu0 %v1398
    %3103 = vmatpush1.bf16.msra.mxu0 %v1397
    %3104 = vmatprep.subr.bf16.mxu0 %v1394
    %3105 = vmatpush1.bf16.msra.mxu0 %v1393
    %3106 = vmatprep.subr.bf16.mxu0 %v1390
    %3107 = vmatpush1.bf16.msra.mxu0 %v1389
    %3108 = vmatprep.subr.bf16.mxu0 %v1386
    %3109 = vmatpush1.bf16.msra.mxu0 %v1385
    %3110 = vmatprep.subr.bf16.mxu0 %v1446
    %3111 = vmatpush2.bf16.msra.mxu0 %v1445
    %3112 = vmatprep.subr.bf16.mxu0 %v1442
    %3113 = vmatpush2.bf16.msra.mxu0 %v1441
    %3114 = vmatprep.subr.bf16.mxu0 %v1438
    %3115 = vmatpush2.bf16.msra.mxu0 %v1437
    %3116 = vmatprep.subr.bf16.mxu0 %v1434
    %3117 = vmatpush2.bf16.msra.mxu0 %v1433
    %3118 = vmatprep.subr.bf16.mxu0 %v1430
    %3119 = vmatpush2.bf16.msra.mxu0 %v1429
    %3120 = vmatprep.subr.bf16.mxu0 %v1426
    %3121 = vmatpush2.bf16.msra.mxu0 %v1425
    %3122 = vmatprep.subr.bf16.mxu0 %v1422
    %3123 = vmatpush2.bf16.msra.mxu0 %v1421
    %3124 = vmatprep.subr.bf16.mxu0 %v1418
    %3125 = vmatpush2.bf16.msra.mxu0 %v1417
    %3126 = vmatprep.mubr.bf16.mxu0 %v3050
    %3127 = vmatmul.mubr.bf16.gmra.mxu0 %v3049
    %v3128 = vpop.f32.mrf.mxu0
    %v3129 = vadd.f32 0.0, %v3128
    %v3130 = vpop.f32.mrf.mxu0
    %v3131 = vadd.f32 0.0, %v3130
    %v3132 = vpop.f32.mrf.mxu0
    %v3133 = vadd.f32 0.0, %v3132
    %v3134 = vpop.f32.mrf.mxu0
    %v3135 = vadd.f32 0.0, %v3134
    %3136 = vdwg.mxu0
    %v3137 = vadd.f32 %v3035, %v3086
    %v3138 = vadd.f32 %v3036, %v3088
    %v3139 = vadd.f32 %v3037, %v3129
    %v3140 = vadd.f32 %v3038, %v3131
    %v3141 = vadd.f32 %v3041, %v3090
    %v3142 = vadd.f32 %v3042, %v3092
    %v3143 = vadd.f32 %v3043, %v3133
    %v3144 = vadd.f32 %v3044, %v3135
    %v3145 = vxor.u32 %v3137, 2147483648
    %v3146 = vxor.u32 %v3141, 2147483648
    %v3147 = vmul.f32 %v3145, 1.442695
    %v3148 = vpow.pop %v3147
    %v3149 = vmul.f32 %v3146, 1.442695
    %v3150 = vpow.pop %v3149
    %v3151 = vadd.f32 %v3148, 1.0
    %v3152 = vadd.f32 %v3150, 1.0
    %v3153 = vrcp.pop %v3151
    %v3154 = vmul.f32 1.0, %v3153
    %v3155 = vrcp.pop %v3152
    %v3156 = vmul.f32 1.0, %v3155
    %v3157 = vxor.u32 %v3138, 2147483648
    %v3158 = vxor.u32 %v3142, 2147483648
    %v3159 = vmul.f32 %v3157, 1.442695
    %v3160 = vpow.pop %v3159
    %v3161 = vmul.f32 %v3158, 1.442695
    %v3162 = vpow.pop %v3161
    %v3163 = vadd.f32 %v3160, 1.0
    %v3164 = vadd.f32 %v3162, 1.0
    %v3165 = vrcp.pop %v3163
    %v3166 = vmul.f32 1.0, %v3165
    %v3167 = vrcp.pop %v3164
    %v3168 = vmul.f32 1.0, %v3167
    %v3169 = vtanh.pop %v3139
    %v3170 = vtanh.pop %v3143
    %v3171 = vxor.u32 %v3140, 2147483648
    %v3172 = vxor.u32 %v3144, 2147483648
    %v3173 = vmul.f32 %v3171, 1.442695
    %v3174 = vpow.pop %v3173
    %v3175 = vmul.f32 %v3172, 1.442695
    %v3176 = vpow.pop %v3175
    %v3177 = vadd.f32 %v3174, 1.0
    %v3178 = vadd.f32 %v3176, 1.0
    %v3179 = vrcp.pop %v3177
    %v3180 = vmul.f32 1.0, %v3179
    %v3181 = vrcp.pop %v3178
    %v3182 = vmul.f32 1.0, %v3181
    %v3183 = vmul.f32 %v3166, %v3017
    %v3184 = vmul.f32 %v3168, %v3018
    %v3185 = vmul.f32 %v3154, %v3169
    %v3186 = vmul.f32 %v3156, %v3170
    %v3187 = vadd.f32 %v3183, %v3185
    %v3188 = vadd.f32 %v3184, %v3186
    %v3189 = vtanh.pop %v3187
    %v3190 = vtanh.pop %v3188
    %v3191 = vmul.f32 %v3180, %v3189
    %v3192 = vmul.f32 %v3182, %v3190
    %v3193 = vadd.f32 %v3023, %v3191
    %v3194 = vadd.f32 %v3024, %v3192
    %v3195 = vmul.f32 %v3191, %v3191
    %v3196 = vmul.f32 %v3192, %v3192
    %v3197 = vadd.f32 %v3027, %v3195
    %v3198 = vadd.f32 %v3028, %v3196
    %v3199 = vmax.f32 %v3029, %v3191
    %v3200 = vmax.f32 %v3030, %v3192
    %v3201 = vmin.f32 %v3031, %v3191
    %v3202 = vmin.f32 %v3032, %v3192
    %s3203 = smul.addr %s2354, 8
    %s3204 = scalar_lea.vmem [#allocation2], %s3203
    %v3205 = vld [vmem:[%s3204] sm:$0xff]
    %v3206 = vld [vmem:[%s3204 + $0x8] sm:$0xff]
    %v3207 = vld [vmem:[%s3204 + $0x10] sm:$0xff]
    %v3208 = vld [vmem:[%s3204 + $0x18] sm:$0xff]
    %s3209 = smul.addr %s2347, 8
    %s3210 = scalar_lea.vmem [#allocation3], %s3209
    %v3211 = vld [vmem:[%s3210] sm:$0xff]
    %v3212 = vld [vmem:[%s3210 + $0x8] sm:$0xff]
    %v3213 = vld [vmem:[%s3210 + $0x10] sm:$0xff]
    %v3214 = vld [vmem:[%s3210 + $0x18] sm:$0xff]
    %v3215 = vmul.f32 %v3191, %v1167
    %v3216 = vmul.f32 %v3192, %v1168
    %v3217 = vmul.f32 %v3191, %v1185
    %v3218 = vmul.f32 %v3192, %v1186
    %v3219 = vpack.c.bf16 %v3216, %v3215
    %v3220 = vpack.c.bf16 %v3218, %v3217
    %3221 = vmatprep.subr.bf16.mxu0 %v1412
    %3222 = vmatpush1.bf16.msra.mxu0 %v1411
    %3223 = vmatprep.subr.bf16.mxu0 %v1408
    %3224 = vmatpush1.bf16.msra.mxu0 %v1407
    %3225 = vmatprep.subr.bf16.mxu0 %v1404
    %3226 = vmatpush1.bf16.msra.mxu0 %v1403
    %3227 = vmatprep.subr.bf16.mxu0 %v1400
    %3228 = vmatpush1.bf16.msra.mxu0 %v1399
    %3229 = vmatprep.subr.bf16.mxu0 %v1396
    %3230 = vmatpush1.bf16.msra.mxu0 %v1395
    %3231 = vmatprep.subr.bf16.mxu0 %v1392
    %3232 = vmatpush1.bf16.msra.mxu0 %v1391
    %3233 = vmatprep.subr.bf16.mxu0 %v1388
    %3234 = vmatpush1.bf16.msra.mxu0 %v1387
    %3235 = vmatprep.subr.bf16.mxu0 %v1384
    %3236 = vmatpush1.bf16.msra.mxu0 %v1383
    %3237 = vmatprep.subr.bf16.mxu0 %v1444
    %3238 = vmatpush2.bf16.msra.mxu0 %v1443
    %3239 = vmatprep.subr.bf16.mxu0 %v1440
    %3240 = vmatpush2.bf16.msra.mxu0 %v1439
    %3241 = vmatprep.subr.bf16.mxu0 %v1436
    %3242 = vmatpush2.bf16.msra.mxu0 %v1435
    %3243 = vmatprep.subr.bf16.mxu0 %v1432
    %3244 = vmatpush2.bf16.msra.mxu0 %v1431
    %3245 = vmatprep.subr.bf16.mxu0 %v1428
    %3246 = vmatpush2.bf16.msra.mxu0 %v1427
    %3247 = vmatprep.subr.bf16.mxu0 %v1424
    %3248 = vmatpush2.bf16.msra.mxu0 %v1423
    %3249 = vmatprep.subr.bf16.mxu0 %v1420
    %3250 = vmatpush2.bf16.msra.mxu0 %v1419
    %3251 = vmatprep.subr.bf16.mxu0 %v1416
    %3252 = vmatpush2.bf16.msra.mxu0 %v1415
    %3253 = vmatprep.mubr.bf16.mxu0 %v3220
    %3254 = vmatmul.mubr.bf16.gmra.mxu0 %v3219
    %v3255 = vpop.f32.mrf.mxu0
    %v3256 = vadd.f32 0.0, %v3255
    %v3257 = vpop.f32.mrf.mxu0
    %v3258 = vadd.f32 0.0, %v3257
    %v3259 = vpop.f32.mrf.mxu0
    %v3260 = vadd.f32 0.0, %v3259
    %v3261 = vpop.f32.mrf.mxu0
    %v3262 = vadd.f32 0.0, %v3261
    %3263 = vdwg.mxu0
    %3264 = vmatprep.subr.bf16.mxu0 %v1414
    %3265 = vmatpush1.bf16.msra.mxu0 %v1413
    %3266 = vmatprep.subr.bf16.mxu0 %v1410
    %3267 = vmatpush1.bf16.msra.mxu0 %v1409
    %3268 = vmatprep.subr.bf16.mxu0 %v1406
    %3269 = vmatpush1.bf16.msra.mxu0 %v1405
    %3270 = vmatprep.subr.bf16.mxu0 %v1402
    %3271 = vmatpush1.bf16.msra.mxu0 %v1401
    %3272 = vmatprep.subr.bf16.mxu0 %v1398
    %3273 = vmatpush1.bf16.msra.mxu0 %v1397
    %3274 = vmatprep.subr.bf16.mxu0 %v1394
    %3275 = vmatpush1.bf16.msra.mxu0 %v1393
    %3276 = vmatprep.subr.bf16.mxu0 %v1390
    %3277 = vmatpush1.bf16.msra.mxu0 %v1389
    %3278 = vmatprep.subr.bf16.mxu0 %v1386
    %3279 = vmatpush1.bf16.msra.mxu0 %v1385
    %3280 = vmatprep.subr.bf16.mxu0 %v1446
    %3281 = vmatpush2.bf16.msra.mxu0 %v1445
    %3282 = vmatprep.subr.bf16.mxu0 %v1442
    %3283 = vmatpush2.bf16.msra.mxu0 %v1441
    %3284 = vmatprep.subr.bf16.mxu0 %v1438
    %3285 = vmatpush2.bf16.msra.mxu0 %v1437
    %3286 = vmatprep.subr.bf16.mxu0 %v1434
    %3287 = vmatpush2.bf16.msra.mxu0 %v1433
    %3288 = vmatprep.subr.bf16.mxu0 %v1430
    %3289 = vmatpush2.bf16.msra.mxu0 %v1429
    %3290 = vmatprep.subr.bf16.mxu0 %v1426
    %3291 = vmatpush2.bf16.msra.mxu0 %v1425
    %3292 = vmatprep.subr.bf16.mxu0 %v1422
    %3293 = vmatpush2.bf16.msra.mxu0 %v1421
    %3294 = vmatprep.subr.bf16.mxu0 %v1418
    %3295 = vmatpush2.bf16.msra.mxu0 %v1417
    %3296 = vmatprep.mubr.bf16.mxu0 %v3220
    %3297 = vmatmul.mubr.bf16.gmra.mxu0 %v3219
    %v3298 = vpop.f32.mrf.mxu0
    %v3299 = vadd.f32 0.0, %v3298
    %v3300 = vpop.f32.mrf.mxu0
    %v3301 = vadd.f32 0.0, %v3300
    %v3302 = vpop.f32.mrf.mxu0
    %v3303 = vadd.f32 0.0, %v3302
    %v3304 = vpop.f32.mrf.mxu0
    %v3305 = vadd.f32 0.0, %v3304
    %3306 = vdwg.mxu0
    %v3307 = vadd.f32 %v3205, %v3256
    %v3308 = vadd.f32 %v3206, %v3258
    %v3309 = vadd.f32 %v3207, %v3299
    %v3310 = vadd.f32 %v3208, %v3301
    %v3311 = vadd.f32 %v3211, %v3260
    %v3312 = vadd.f32 %v3212, %v3262
    %v3313 = vadd.f32 %v3213, %v3303
    %v3314 = vadd.f32 %v3214, %v3305
    %v3315 = vxor.u32 %v3307, 2147483648
    %v3316 = vxor.u32 %v3311, 2147483648
    %v3317 = vmul.f32 %v3315, 1.442695
    %v3318 = vpow.pop %v3317
    %v3319 = vmul.f32 %v3316, 1.442695
    %v3320 = vpow.pop %v3319
    %v3321 = vadd.f32 %v3318, 1.0
    %v3322 = vadd.f32 %v3320, 1.0
    %v3323 = vrcp.pop %v3321
    %v3324 = vmul.f32 1.0, %v3323
    %v3325 = vrcp.pop %v3322
    %v3326 = vmul.f32 1.0, %v3325
    %v3327 = vxor.u32 %v3308, 2147483648
    %v3328 = vxor.u32 %v3312, 2147483648
    %v3329 = vmul.f32 %v3327, 1.442695
    %v3330 = vpow.pop %v3329
    %v3331 = vmul.f32 %v3328, 1.442695
    %v3332 = vpow.pop %v3331
    %v3333 = vadd.f32 %v3330, 1.0
    %v3334 = vadd.f32 %v3332, 1.0
    %v3335 = vrcp.pop %v3333
    %v3336 = vmul.f32 1.0, %v3335
    %v3337 = vrcp.pop %v3334
    %v3338 = vmul.f32 1.0, %v3337
    %v3339 = vtanh.pop %v3309
    %v3340 = vtanh.pop %v3313
    %v3341 = vxor.u32 %v3310, 2147483648
    %v3342 = vxor.u32 %v3314, 2147483648
    %v3343 = vmul.f32 %v3341, 1.442695
    %v3344 = vpow.pop %v3343
    %v3345 = vmul.f32 %v3342, 1.442695
    %v3346 = vpow.pop %v3345
    %v3347 = vadd.f32 %v3344, 1.0
    %v3348 = vadd.f32 %v3346, 1.0
    %v3349 = vrcp.pop %v3347
    %v3350 = vmul.f32 1.0, %v3349
    %v3351 = vrcp.pop %v3348
    %v3352 = vmul.f32 1.0, %v3351
    %v3353 = vmul.f32 %v3336, %v3187
    %v3354 = vmul.f32 %v3338, %v3188
    %v3355 = vmul.f32 %v3324, %v3339
    %v3356 = vmul.f32 %v3326, %v3340
    %v3357 = vadd.f32 %v3353, %v3355
    %v3358 = vadd.f32 %v3354, %v3356
    %v3359 = vtanh.pop %v3357
    %v3360 = vtanh.pop %v3358
    %v3361 = vmul.f32 %v3350, %v3359
    %v3362 = vmul.f32 %v3352, %v3360
    %v3363 = vadd.f32 %v3193, %v3361
    %v3364 = vadd.f32 %v3194, %v3362
    %v3365 = vmul.f32 %v3361, %v3361
    %v3366 = vmul.f32 %v3362, %v3362
    %v3367 = vadd.f32 %v3197, %v3365
    %v3368 = vadd.f32 %v3198, %v3366
    %v3369 = vmax.f32 %v3199, %v3361
    %v3370 = vmax.f32 %v3200, %v3362
    %v3371 = vmin.f32 %v3201, %v3361
    %v3372 = vmin.f32 %v3202, %v3362
    %s3373 = smul.addr %s2182, 8
    %s3374 = scalar_lea.vmem [#allocation2], %s3373
    %v3375 = vld [vmem:[%s3374] sm:$0xff]
    %v3376 = vld [vmem:[%s3374 + $0x8] sm:$0xff]
    %v3377 = vld [vmem:[%s3374 + $0x10] sm:$0xff]
    %v3378 = vld [vmem:[%s3374 + $0x18] sm:$0xff]
    %s3379 = smul.addr %s2175, 8
    %s3380 = scalar_lea.vmem [#allocation3], %s3379
    %v3381 = vld [vmem:[%s3380] sm:$0xff]
    %v3382 = vld [vmem:[%s3380 + $0x8] sm:$0xff]
    %v3383 = vld [vmem:[%s3380 + $0x10] sm:$0xff]
    %v3384 = vld [vmem:[%s3380 + $0x18] sm:$0xff]
    %v3385 = vmul.f32 %v3361, %v1167
    %v3386 = vmul.f32 %v3362, %v1168
    %v3387 = vmul.f32 %v3361, %v1185
    %v3388 = vmul.f32 %v3362, %v1186
    %v3389 = vpack.c.bf16 %v3386, %v3385
    %v3390 = vpack.c.bf16 %v3388, %v3387
    %3391 = vmatprep.subr.bf16.mxu0 %v1412
    %3392 = vmatpush1.bf16.msra.mxu0 %v1411
    %3393 = vmatprep.subr.bf16.mxu0 %v1408
    %3394 = vmatpush1.bf16.msra.mxu0 %v1407
    %3395 = vmatprep.subr.bf16.mxu0 %v1404
    %3396 = vmatpush1.bf16.msra.mxu0 %v1403
    %3397 = vmatprep.subr.bf16.mxu0 %v1400
    %3398 = vmatpush1.bf16.msra.mxu0 %v1399
    %3399 = vmatprep.subr.bf16.mxu0 %v1396
    %3400 = vmatpush1.bf16.msra.mxu0 %v1395
    %3401 = vmatprep.subr.bf16.mxu0 %v1392
    %3402 = vmatpush1.bf16.msra.mxu0 %v1391
    %3403 = vmatprep.subr.bf16.mxu0 %v1388
    %3404 = vmatpush1.bf16.msra.mxu0 %v1387
    %3405 = vmatprep.subr.bf16.mxu0 %v1384
    %3406 = vmatpush1.bf16.msra.mxu0 %v1383
    %3407 = vmatprep.subr.bf16.mxu0 %v1444
    %3408 = vmatpush2.bf16.msra.mxu0 %v1443
    %3409 = vmatprep.subr.bf16.mxu0 %v1440
    %3410 = vmatpush2.bf16.msra.mxu0 %v1439
    %3411 = vmatprep.subr.bf16.mxu0 %v1436
    %3412 = vmatpush2.bf16.msra.mxu0 %v1435
    %3413 = vmatprep.subr.bf16.mxu0 %v1432
    %3414 = vmatpush2.bf16.msra.mxu0 %v1431
    %3415 = vmatprep.subr.bf16.mxu0 %v1428
    %3416 = vmatpush2.bf16.msra.mxu0 %v1427
    %3417 = vmatprep.subr.bf16.mxu0 %v1424
    %3418 = vmatpush2.bf16.msra.mxu0 %v1423
    %3419 = vmatprep.subr.bf16.mxu0 %v1420
    %3420 = vmatpush2.bf16.msra.mxu0 %v1419
    %3421 = vmatprep.subr.bf16.mxu0 %v1416
    %3422 = vmatpush2.bf16.msra.mxu0 %v1415
    %3423 = vmatprep.mubr.bf16.mxu0 %v3390
    %3424 = vmatmul.mubr.bf16.gmra.mxu0 %v3389
    %v3425 = vpop.f32.mrf.mxu0
    %v3426 = vadd.f32 0.0, %v3425
    %v3427 = vpop.f32.mrf.mxu0
    %v3428 = vadd.f32 0.0, %v3427
    %v3429 = vpop.f32.mrf.mxu0
    %v3430 = vadd.f32 0.0, %v3429
    %v3431 = vpop.f32.mrf.mxu0
    %v3432 = vadd.f32 0.0, %v3431
    %3433 = vdwg.mxu0
    %3434 = vmatprep.subr.bf16.mxu0 %v1414
    %3435 = vmatpush1.bf16.msra.mxu0 %v1413
    %3436 = vmatprep.subr.bf16.mxu0 %v1410
    %3437 = vmatpush1.bf16.msra.mxu0 %v1409
    %3438 = vmatprep.subr.bf16.mxu0 %v1406
    %3439 = vmatpush1.bf16.msra.mxu0 %v1405
    %3440 = vmatprep.subr.bf16.mxu0 %v1402
    %3441 = vmatpush1.bf16.msra.mxu0 %v1401
    %3442 = vmatprep.subr.bf16.mxu0 %v1398
    %3443 = vmatpush1.bf16.msra.mxu0 %v1397
    %3444 = vmatprep.subr.bf16.mxu0 %v1394
    %3445 = vmatpush1.bf16.msra.mxu0 %v1393
    %3446 = vmatprep.subr.bf16.mxu0 %v1390
    %3447 = vmatpush1.bf16.msra.mxu0 %v1389
    %3448 = vmatprep.subr.bf16.mxu0 %v1386
    %3449 = vmatpush1.bf16.msra.mxu0 %v1385
    %3450 = vmatprep.subr.bf16.mxu0 %v1446
    %3451 = vmatpush2.bf16.msra.mxu0 %v1445
    %3452 = vmatprep.subr.bf16.mxu0 %v1442
    %3453 = vmatpush2.bf16.msra.mxu0 %v1441
    %3454 = vmatprep.subr.bf16.mxu0 %v1438
    %3455 = vmatpush2.bf16.msra.mxu0 %v1437
    %3456 = vmatprep.subr.bf16.mxu0 %v1434
    %3457 = vmatpush2.bf16.msra.mxu0 %v1433
    %3458 = vmatprep.subr.bf16.mxu0 %v1430
    %3459 = vmatpush2.bf16.msra.mxu0 %v1429
    %3460 = vmatprep.subr.bf16.mxu0 %v1426
    %3461 = vmatpush2.bf16.msra.mxu0 %v1425
    %3462 = vmatprep.subr.bf16.mxu0 %v1422
    %3463 = vmatpush2.bf16.msra.mxu0 %v1421
    %3464 = vmatprep.subr.bf16.mxu0 %v1418
    %3465 = vmatpush2.bf16.msra.mxu0 %v1417
    %3466 = vmatprep.mubr.bf16.mxu0 %v3390
    %3467 = vmatmul.mubr.bf16.gmra.mxu0 %v3389
    %v3468 = vpop.f32.mrf.mxu0
    %v3469 = vadd.f32 0.0, %v3468
    %v3470 = vpop.f32.mrf.mxu0
    %v3471 = vadd.f32 0.0, %v3470
    %v3472 = vpop.f32.mrf.mxu0
    %v3473 = vadd.f32 0.0, %v3472
    %v3474 = vpop.f32.mrf.mxu0
    %v3475 = vadd.f32 0.0, %v3474
    %3476 = vdwg.mxu0
    %v3477 = vadd.f32 %v3375, %v3426
    %v3478 = vadd.f32 %v3376, %v3428
    %v3479 = vadd.f32 %v3377, %v3469
    %v3480 = vadd.f32 %v3378, %v3471
    %v3481 = vadd.f32 %v3381, %v3430
    %v3482 = vadd.f32 %v3382, %v3432
    %v3483 = vadd.f32 %v3383, %v3473
    %v3484 = vadd.f32 %v3384, %v3475
    %v3485 = vxor.u32 %v3477, 2147483648
    %v3486 = vxor.u32 %v3481, 2147483648
    %v3487 = vmul.f32 %v3485, 1.442695
    %v3488 = vpow.pop %v3487
    %v3489 = vmul.f32 %v3486, 1.442695
    %v3490 = vpow.pop %v3489
    %v3491 = vadd.f32 %v3488, 1.0
    %v3492 = vadd.f32 %v3490, 1.0
    %v3493 = vrcp.pop %v3491
    %v3494 = vmul.f32 1.0, %v3493
    %v3495 = vrcp.pop %v3492
    %v3496 = vmul.f32 1.0, %v3495
    %v3497 = vxor.u32 %v3478, 2147483648
    %v3498 = vxor.u32 %v3482, 2147483648
    %v3499 = vmul.f32 %v3497, 1.442695
    %v3500 = vpow.pop %v3499
    %v3501 = vmul.f32 %v3498, 1.442695
    %v3502 = vpow.pop %v3501
    %v3503 = vadd.f32 %v3500, 1.0
    %v3504 = vadd.f32 %v3502, 1.0
    %v3505 = vrcp.pop %v3503
    %v3506 = vmul.f32 1.0, %v3505
    %v3507 = vrcp.pop %v3504
    %v3508 = vmul.f32 1.0, %v3507
    %v3509 = vtanh.pop %v3479
    %v3510 = vtanh.pop %v3483
    %v3511 = vxor.u32 %v3480, 2147483648
    %v3512 = vxor.u32 %v3484, 2147483648
    %v3513 = vmul.f32 %v3511, 1.442695
    %v3514 = vpow.pop %v3513
    %v3515 = vmul.f32 %v3512, 1.442695
    %v3516 = vpow.pop %v3515
    %v3517 = vadd.f32 %v3514, 1.0
    %v3518 = vadd.f32 %v3516, 1.0
    %v3519 = vrcp.pop %v3517
    %v3520 = vmul.f32 1.0, %v3519
    %v3521 = vrcp.pop %v3518
    %v3522 = vmul.f32 1.0, %v3521
    %v3523 = vmul.f32 %v3506, %v3357
    %v3524 = vmul.f32 %v3508, %v3358
    %v3525 = vmul.f32 %v3494, %v3509
    %v3526 = vmul.f32 %v3496, %v3510
    %v3527 = vadd.f32 %v3523, %v3525
    %v3528 = vadd.f32 %v3524, %v3526
    %v3529 = vtanh.pop %v3527
    %v3530 = vtanh.pop %v3528
    %v3531 = vmul.f32 %v3520, %v3529
    %v3532 = vmul.f32 %v3522, %v3530
    %v3533 = vadd.f32 %v3363, %v3531
    %v3534 = vadd.f32 %v3364, %v3532
    %v3535 = vmul.f32 %v3531, %v3531
    %v3536 = vmul.f32 %v3532, %v3532
    %v3537 = vadd.f32 %v3367, %v3535
    %v3538 = vadd.f32 %v3368, %v3536
    %v3539 = vmax.f32 %v3369, %v3531
    %v3540 = vmax.f32 %v3370, %v3532
    %v3541 = vmin.f32 %v3371, %v3531
    %v3542 = vmin.f32 %v3372, %v3532
    %s3543 = smul.addr %s2010, 8
    %s3544 = scalar_lea.vmem [#allocation2], %s3543
    %v3545 = vld [vmem:[%s3544] sm:$0xff]
    %v3546 = vld [vmem:[%s3544 + $0x8] sm:$0xff]
    %v3547 = vld [vmem:[%s3544 + $0x10] sm:$0xff]
    %v3548 = vld [vmem:[%s3544 + $0x18] sm:$0xff]
    %s3549 = smul.addr %s2003, 8
    %s3550 = scalar_lea.vmem [#allocation3], %s3549
    %v3551 = vld [vmem:[%s3550] sm:$0xff]
    %v3552 = vld [vmem:[%s3550 + $0x8] sm:$0xff]
    %v3553 = vld [vmem:[%s3550 + $0x10] sm:$0xff]
    %v3554 = vld [vmem:[%s3550 + $0x18] sm:$0xff]
    %v3555 = vmul.f32 %v3531, %v1167
    %v3556 = vmul.f32 %v3532, %v1168
    %v3557 = vmul.f32 %v3531, %v1185
    %v3558 = vmul.f32 %v3532, %v1186
    %v3559 = vpack.c.bf16 %v3556, %v3555
    %v3560 = vpack.c.bf16 %v3558, %v3557
    %3561 = vmatprep.subr.bf16.mxu0 %v1412
    %3562 = vmatpush1.bf16.msra.mxu0 %v1411
    %3563 = vmatprep.subr.bf16.mxu0 %v1408
    %3564 = vmatpush1.bf16.msra.mxu0 %v1407
    %3565 = vmatprep.subr.bf16.mxu0 %v1404
    %3566 = vmatpush1.bf16.msra.mxu0 %v1403
    %3567 = vmatprep.subr.bf16.mxu0 %v1400
    %3568 = vmatpush1.bf16.msra.mxu0 %v1399
    %3569 = vmatprep.subr.bf16.mxu0 %v1396
    %3570 = vmatpush1.bf16.msra.mxu0 %v1395
    %3571 = vmatprep.subr.bf16.mxu0 %v1392
    %3572 = vmatpush1.bf16.msra.mxu0 %v1391
    %3573 = vmatprep.subr.bf16.mxu0 %v1388
    %3574 = vmatpush1.bf16.msra.mxu0 %v1387
    %3575 = vmatprep.subr.bf16.mxu0 %v1384
    %3576 = vmatpush1.bf16.msra.mxu0 %v1383
    %3577 = vmatprep.subr.bf16.mxu0 %v1444
    %3578 = vmatpush2.bf16.msra.mxu0 %v1443
    %3579 = vmatprep.subr.bf16.mxu0 %v1440
    %3580 = vmatpush2.bf16.msra.mxu0 %v1439
    %3581 = vmatprep.subr.bf16.mxu0 %v1436
    %3582 = vmatpush2.bf16.msra.mxu0 %v1435
    %3583 = vmatprep.subr.bf16.mxu0 %v1432
    %3584 = vmatpush2.bf16.msra.mxu0 %v1431
    %3585 = vmatprep.subr.bf16.mxu0 %v1428
    %3586 = vmatpush2.bf16.msra.mxu0 %v1427
    %3587 = vmatprep.subr.bf16.mxu0 %v1424
    %3588 = vmatpush2.bf16.msra.mxu0 %v1423
    %3589 = vmatprep.subr.bf16.mxu0 %v1420
    %3590 = vmatpush2.bf16.msra.mxu0 %v1419
    %3591 = vmatprep.subr.bf16.mxu0 %v1416
    %3592 = vmatpush2.bf16.msra.mxu0 %v1415
    %3593 = vmatprep.mubr.bf16.mxu0 %v3560
    %3594 = vmatmul.mubr.bf16.gmra.mxu0 %v3559
    %v3595 = vpop.f32.mrf.mxu0
    %v3596 = vadd.f32 0.0, %v3595
    %v3597 = vpop.f32.mrf.mxu0
    %v3598 = vadd.f32 0.0, %v3597
    %v3599 = vpop.f32.mrf.mxu0
    %v3600 = vadd.f32 0.0, %v3599
    %v3601 = vpop.f32.mrf.mxu0
    %v3602 = vadd.f32 0.0, %v3601
    %3603 = vdwg.mxu0
    %3604 = vmatprep.subr.bf16.mxu0 %v1414
    %3605 = vmatpush1.bf16.msra.mxu0 %v1413
    %3606 = vmatprep.subr.bf16.mxu0 %v1410
    %3607 = vmatpush1.bf16.msra.mxu0 %v1409
    %3608 = vmatprep.subr.bf16.mxu0 %v1406
    %3609 = vmatpush1.bf16.msra.mxu0 %v1405
    %3610 = vmatprep.subr.bf16.mxu0 %v1402
    %3611 = vmatpush1.bf16.msra.mxu0 %v1401
    %3612 = vmatprep.subr.bf16.mxu0 %v1398
    %3613 = vmatpush1.bf16.msra.mxu0 %v1397
    %3614 = vmatprep.subr.bf16.mxu0 %v1394
    %3615 = vmatpush1.bf16.msra.mxu0 %v1393
    %3616 = vmatprep.subr.bf16.mxu0 %v1390
    %3617 = vmatpush1.bf16.msra.mxu0 %v1389
    %3618 = vmatprep.subr.bf16.mxu0 %v1386
    %3619 = vmatpush1.bf16.msra.mxu0 %v1385
    %3620 = vmatprep.subr.bf16.mxu0 %v1446
    %3621 = vmatpush2.bf16.msra.mxu0 %v1445
    %3622 = vmatprep.subr.bf16.mxu0 %v1442
    %3623 = vmatpush2.bf16.msra.mxu0 %v1441
    %3624 = vmatprep.subr.bf16.mxu0 %v1438
    %3625 = vmatpush2.bf16.msra.mxu0 %v1437
    %3626 = vmatprep.subr.bf16.mxu0 %v1434
    %3627 = vmatpush2.bf16.msra.mxu0 %v1433
    %3628 = vmatprep.subr.bf16.mxu0 %v1430
    %3629 = vmatpush2.bf16.msra.mxu0 %v1429
    %3630 = vmatprep.subr.bf16.mxu0 %v1426
    %3631 = vmatpush2.bf16.msra.mxu0 %v1425
    %3632 = vmatprep.subr.bf16.mxu0 %v1422
    %3633 = vmatpush2.bf16.msra.mxu0 %v1421
    %3634 = vmatprep.subr.bf16.mxu0 %v1418
    %3635 = vmatpush2.bf16.msra.mxu0 %v1417
    %3636 = vmatprep.mubr.bf16.mxu0 %v3560
    %3637 = vmatmul.mubr.bf16.gmra.mxu0 %v3559
    %v3638 = vpop.f32.mrf.mxu0
    %v3639 = vadd.f32 0.0, %v3638
    %v3640 = vpop.f32.mrf.mxu0
    %v3641 = vadd.f32 0.0, %v3640
    %v3642 = vpop.f32.mrf.mxu0
    %v3643 = vadd.f32 0.0, %v3642
    %v3644 = vpop.f32.mrf.mxu0
    %v3645 = vadd.f32 0.0, %v3644
    %3646 = vdwg.mxu0
    %v3647 = vadd.f32 %v3545, %v3596
    %v3648 = vadd.f32 %v3546, %v3598
    %v3649 = vadd.f32 %v3547, %v3639
    %v3650 = vadd.f32 %v3548, %v3641
    %v3651 = vadd.f32 %v3551, %v3600
    %v3652 = vadd.f32 %v3552, %v3602
    %v3653 = vadd.f32 %v3553, %v3643
    %v3654 = vadd.f32 %v3554, %v3645
    %v3655 = vxor.u32 %v3647, 2147483648
    %v3656 = vxor.u32 %v3651, 2147483648
    %v3657 = vmul.f32 %v3655, 1.442695
    %v3658 = vpow.pop %v3657
    %v3659 = vmul.f32 %v3656, 1.442695
    %v3660 = vpow.pop %v3659
    %v3661 = vadd.f32 %v3658, 1.0
    %v3662 = vadd.f32 %v3660, 1.0
    %v3663 = vrcp.pop %v3661
    %v3664 = vmul.f32 1.0, %v3663
    %v3665 = vrcp.pop %v3662
    %v3666 = vmul.f32 1.0, %v3665
    %v3667 = vxor.u32 %v3648, 2147483648
    %v3668 = vxor.u32 %v3652, 2147483648
    %v3669 = vmul.f32 %v3667, 1.442695
    %v3670 = vpow.pop %v3669
    %v3671 = vmul.f32 %v3668, 1.442695
    %v3672 = vpow.pop %v3671
    %v3673 = vadd.f32 %v3670, 1.0
    %v3674 = vadd.f32 %v3672, 1.0
    %v3675 = vrcp.pop %v3673
    %v3676 = vmul.f32 1.0, %v3675
    %v3677 = vrcp.pop %v3674
    %v3678 = vmul.f32 1.0, %v3677
    %v3679 = vtanh.pop %v3649
    %v3680 = vtanh.pop %v3653
    %v3681 = vxor.u32 %v3650, 2147483648
    %v3682 = vxor.u32 %v3654, 2147483648
    %v3683 = vmul.f32 %v3681, 1.442695
    %v3684 = vpow.pop %v3683
    %v3685 = vmul.f32 %v3682, 1.442695
    %v3686 = vpow.pop %v3685
    %v3687 = vadd.f32 %v3684, 1.0
    %v3688 = vadd.f32 %v3686, 1.0
    %v3689 = vrcp.pop %v3687
    %v3690 = vmul.f32 1.0, %v3689
    %v3691 = vrcp.pop %v3688
    %v3692 = vmul.f32 1.0, %v3691
    %v3693 = vmul.f32 %v3676, %v3527
    %v3694 = vmul.f32 %v3678, %v3528
    %v3695 = vmul.f32 %v3664, %v3679
    %v3696 = vmul.f32 %v3666, %v3680
    %v3697 = vadd.f32 %v3693, %v3695
    %v3698 = vadd.f32 %v3694, %v3696
    %v3699 = vtanh.pop %v3697
    %v3700 = vtanh.pop %v3698
    %v3701 = vmul.f32 %v3690, %v3699
    %v3702 = vmul.f32 %v3692, %v3700
    %v3703 = vadd.f32 %v3533, %v3701
    %v3704 = vadd.f32 %v3534, %v3702
    %v3705 = vmul.f32 %v3701, %v3701
    %v3706 = vmul.f32 %v3702, %v3702
    %v3707 = vadd.f32 %v3537, %v3705
    %v3708 = vadd.f32 %v3538, %v3706
    %v3709 = vmax.f32 %v3539, %v3701
    %v3710 = vmax.f32 %v3540, %v3702
    %v3711 = vmin.f32 %v3541, %v3701
    %v3712 = vmin.f32 %v3542, %v3702
    %s3713 = smul.addr %s1838, 8
    %s3714 = scalar_lea.vmem [#allocation2], %s3713
    %v3715 = vld [vmem:[%s3714] sm:$0xff]
    %v3716 = vld [vmem:[%s3714 + $0x8] sm:$0xff]
    %v3717 = vld [vmem:[%s3714 + $0x10] sm:$0xff]
    %v3718 = vld [vmem:[%s3714 + $0x18] sm:$0xff]
    %s3719 = smul.addr %s1831, 8
    %s3720 = scalar_lea.vmem [#allocation3], %s3719
    %v3721 = vld [vmem:[%s3720] sm:$0xff]
    %v3722 = vld [vmem:[%s3720 + $0x8] sm:$0xff]
    %v3723 = vld [vmem:[%s3720 + $0x10] sm:$0xff]
    %v3724 = vld [vmem:[%s3720 + $0x18] sm:$0xff]
    %v3725 = vmul.f32 %v3701, %v1167
    %v3726 = vmul.f32 %v3702, %v1168
    %v3727 = vmul.f32 %v3701, %v1185
    %v3728 = vmul.f32 %v3702, %v1186
    %v3729 = vpack.c.bf16 %v3726, %v3725
    %v3730 = vpack.c.bf16 %v3728, %v3727
    %3731 = vmatprep.subr.bf16.mxu0 %v1412
    %3732 = vmatpush1.bf16.msra.mxu0 %v1411
    %3733 = vmatprep.subr.bf16.mxu0 %v1408
    %3734 = vmatpush1.bf16.msra.mxu0 %v1407
    %3735 = vmatprep.subr.bf16.mxu0 %v1404
    %3736 = vmatpush1.bf16.msra.mxu0 %v1403
    %3737 = vmatprep.subr.bf16.mxu0 %v1400
    %3738 = vmatpush1.bf16.msra.mxu0 %v1399
    %3739 = vmatprep.subr.bf16.mxu0 %v1396
    %3740 = vmatpush1.bf16.msra.mxu0 %v1395
    %3741 = vmatprep.subr.bf16.mxu0 %v1392
    %3742 = vmatpush1.bf16.msra.mxu0 %v1391
    %3743 = vmatprep.subr.bf16.mxu0 %v1388
    %3744 = vmatpush1.bf16.msra.mxu0 %v1387
    %3745 = vmatprep.subr.bf16.mxu0 %v1384
    %3746 = vmatpush1.bf16.msra.mxu0 %v1383
    %3747 = vmatprep.subr.bf16.mxu0 %v1444
    %3748 = vmatpush2.bf16.msra.mxu0 %v1443
    %3749 = vmatprep.subr.bf16.mxu0 %v1440
    %3750 = vmatpush2.bf16.msra.mxu0 %v1439
    %3751 = vmatprep.subr.bf16.mxu0 %v1436
    %3752 = vmatpush2.bf16.msra.mxu0 %v1435
    %3753 = vmatprep.subr.bf16.mxu0 %v1432
    %3754 = vmatpush2.bf16.msra.mxu0 %v1431
    %3755 = vmatprep.subr.bf16.mxu0 %v1428
    %3756 = vmatpush2.bf16.msra.mxu0 %v1427
    %3757 = vmatprep.subr.bf16.mxu0 %v1424
    %3758 = vmatpush2.bf16.msra.mxu0 %v1423
    %3759 = vmatprep.subr.bf16.mxu0 %v1420
    %3760 = vmatpush2.bf16.msra.mxu0 %v1419
    %3761 = vmatprep.subr.bf16.mxu0 %v1416
    %3762 = vmatpush2.bf16.msra.mxu0 %v1415
    %3763 = vmatprep.mubr.bf16.mxu0 %v3730
    %3764 = vmatmul.mubr.bf16.gmra.mxu0 %v3729
    %v3765 = vpop.f32.mrf.mxu0
    %v3766 = vadd.f32 0.0, %v3765
    %v3767 = vpop.f32.mrf.mxu0
    %v3768 = vadd.f32 0.0, %v3767
    %v3769 = vpop.f32.mrf.mxu0
    %v3770 = vadd.f32 0.0, %v3769
    %v3771 = vpop.f32.mrf.mxu0
    %v3772 = vadd.f32 0.0, %v3771
    %3773 = vdwg.mxu0
    %3774 = vmatprep.subr.bf16.mxu0 %v1414
    %3775 = vmatpush1.bf16.msra.mxu0 %v1413
    %3776 = vmatprep.subr.bf16.mxu0 %v1410
    %3777 = vmatpush1.bf16.msra.mxu0 %v1409
    %3778 = vmatprep.subr.bf16.mxu0 %v1406
    %3779 = vmatpush1.bf16.msra.mxu0 %v1405
    %3780 = vmatprep.subr.bf16.mxu0 %v1402
    %3781 = vmatpush1.bf16.msra.mxu0 %v1401
    %3782 = vmatprep.subr.bf16.mxu0 %v1398
    %3783 = vmatpush1.bf16.msra.mxu0 %v1397
    %3784 = vmatprep.subr.bf16.mxu0 %v1394
    %3785 = vmatpush1.bf16.msra.mxu0 %v1393
    %3786 = vmatprep.subr.bf16.mxu0 %v1390
    %3787 = vmatpush1.bf16.msra.mxu0 %v1389
    %3788 = vmatprep.subr.bf16.mxu0 %v1386
    %3789 = vmatpush1.bf16.msra.mxu0 %v1385
    %3790 = vmatprep.subr.bf16.mxu0 %v1446
    %3791 = vmatpush2.bf16.msra.mxu0 %v1445
    %3792 = vmatprep.subr.bf16.mxu0 %v1442
    %3793 = vmatpush2.bf16.msra.mxu0 %v1441
    %3794 = vmatprep.subr.bf16.mxu0 %v1438
    %3795 = vmatpush2.bf16.msra.mxu0 %v1437
    %3796 = vmatprep.subr.bf16.mxu0 %v1434
    %3797 = vmatpush2.bf16.msra.mxu0 %v1433
    %3798 = vmatprep.subr.bf16.mxu0 %v1430
    %3799 = vmatpush2.bf16.msra.mxu0 %v1429
    %3800 = vmatprep.subr.bf16.mxu0 %v1426
    %3801 = vmatpush2.bf16.msra.mxu0 %v1425
    %3802 = vmatprep.subr.bf16.mxu0 %v1422
    %3803 = vmatpush2.bf16.msra.mxu0 %v1421
    %3804 = vmatprep.subr.bf16.mxu0 %v1418
    %3805 = vmatpush2.bf16.msra.mxu0 %v1417
    %3806 = vmatprep.mubr.bf16.mxu0 %v3730
    %3807 = vmatmul.mubr.bf16.gmra.mxu0 %v3729
    %v3808 = vpop.f32.mrf.mxu0
    %v3809 = vadd.f32 0.0, %v3808
    %v3810 = vpop.f32.mrf.mxu0
    %v3811 = vadd.f32 0.0, %v3810
    %v3812 = vpop.f32.mrf.mxu0
    %v3813 = vadd.f32 0.0, %v3812
    %v3814 = vpop.f32.mrf.mxu0
    %v3815 = vadd.f32 0.0, %v3814
    %3816 = vdwg.mxu0
    %v3817 = vadd.f32 %v3715, %v3766
    %v3818 = vadd.f32 %v3716, %v3768
    %v3819 = vadd.f32 %v3717, %v3809
    %v3820 = vadd.f32 %v3718, %v3811
    %v3821 = vadd.f32 %v3721, %v3770
    %v3822 = vadd.f32 %v3722, %v3772
    %v3823 = vadd.f32 %v3723, %v3813
    %v3824 = vadd.f32 %v3724, %v3815
    %v3825 = vxor.u32 %v3817, 2147483648
    %v3826 = vxor.u32 %v3821, 2147483648
    %v3827 = vmul.f32 %v3825, 1.442695
    %v3828 = vpow.pop %v3827
    %v3829 = vmul.f32 %v3826, 1.442695
    %v3830 = vpow.pop %v3829
    %v3831 = vadd.f32 %v3828, 1.0
    %v3832 = vadd.f32 %v3830, 1.0
    %v3833 = vrcp.pop %v3831
    %v3834 = vmul.f32 1.0, %v3833
    %v3835 = vrcp.pop %v3832
    %v3836 = vmul.f32 1.0, %v3835
    %v3837 = vxor.u32 %v3818, 2147483648
    %v3838 = vxor.u32 %v3822, 2147483648
    %v3839 = vmul.f32 %v3837, 1.442695
    %v3840 = vpow.pop %v3839
    %v3841 = vmul.f32 %v3838, 1.442695
    %v3842 = vpow.pop %v3841
    %v3843 = vadd.f32 %v3840, 1.0
    %v3844 = vadd.f32 %v3842, 1.0
    %v3845 = vrcp.pop %v3843
    %v3846 = vmul.f32 1.0, %v3845
    %v3847 = vrcp.pop %v3844
    %v3848 = vmul.f32 1.0, %v3847
    %v3849 = vtanh.pop %v3819
    %v3850 = vtanh.pop %v3823
    %v3851 = vxor.u32 %v3820, 2147483648
    %v3852 = vxor.u32 %v3824, 2147483648
    %v3853 = vmul.f32 %v3851, 1.442695
    %v3854 = vpow.pop %v3853
    %v3855 = vmul.f32 %v3852, 1.442695
    %v3856 = vpow.pop %v3855
    %v3857 = vadd.f32 %v3854, 1.0
    %v3858 = vadd.f32 %v3856, 1.0
    %v3859 = vrcp.pop %v3857
    %v3860 = vmul.f32 1.0, %v3859
    %v3861 = vrcp.pop %v3858
    %v3862 = vmul.f32 1.0, %v3861
    %v3863 = vmul.f32 %v3846, %v3697
    %v3864 = vmul.f32 %v3848, %v3698
    %v3865 = vmul.f32 %v3834, %v3849
    %v3866 = vmul.f32 %v3836, %v3850
    %v3867 = vadd.f32 %v3863, %v3865
    %v3868 = vadd.f32 %v3864, %v3866
    %v3869 = vtanh.pop %v3867
    %v3870 = vtanh.pop %v3868
    %v3871 = vmul.f32 %v3860, %v3869
    %v3872 = vmul.f32 %v3862, %v3870
    %v3873 = vadd.f32 %v3703, %v3871
    %v3874 = vadd.f32 %v3704, %v3872
    %v3875 = vmul.f32 %v3871, %v3871
    %v3876 = vmul.f32 %v3872, %v3872
    %v3877 = vadd.f32 %v3707, %v3875
    %v3878 = vadd.f32 %v3708, %v3876
    %v3879 = vmax.f32 %v3709, %v3871
    %v3880 = vmax.f32 %v3710, %v3872
    %v3881 = vmin.f32 %v3711, %v3871
    %v3882 = vmin.f32 %v3712, %v3872
    %s3883 = smul.addr %s1666, 8
    %s3884 = scalar_lea.vmem [#allocation2], %s3883
    %v3885 = vld [vmem:[%s3884] sm:$0xff]
    %v3886 = vld [vmem:[%s3884 + $0x8] sm:$0xff]
    %v3887 = vld [vmem:[%s3884 + $0x10] sm:$0xff]
    %v3888 = vld [vmem:[%s3884 + $0x18] sm:$0xff]
    %s3889 = smul.addr %s1659, 8
    %s3890 = scalar_lea.vmem [#allocation3], %s3889
    %v3891 = vld [vmem:[%s3890] sm:$0xff]
    %v3892 = vld [vmem:[%s3890 + $0x8] sm:$0xff]
    %v3893 = vld [vmem:[%s3890 + $0x10] sm:$0xff]
    %v3894 = vld [vmem:[%s3890 + $0x18] sm:$0xff]
    %v3895 = vmul.f32 %v3871, %v1167
    %v3896 = vmul.f32 %v3872, %v1168
    %v3897 = vmul.f32 %v3871, %v1185
    %v3898 = vmul.f32 %v3872, %v1186
    %v3899 = vpack.c.bf16 %v3896, %v3895
    %v3900 = vpack.c.bf16 %v3898, %v3897
    %3901 = vmatprep.subr.bf16.mxu0 %v1412
    %3902 = vmatpush1.bf16.msra.mxu0 %v1411
    %3903 = vmatprep.subr.bf16.mxu0 %v1408
    %3904 = vmatpush1.bf16.msra.mxu0 %v1407
    %3905 = vmatprep.subr.bf16.mxu0 %v1404
    %3906 = vmatpush1.bf16.msra.mxu0 %v1403
    %3907 = vmatprep.subr.bf16.mxu0 %v1400
    %3908 = vmatpush1.bf16.msra.mxu0 %v1399
    %3909 = vmatprep.subr.bf16.mxu0 %v1396
    %3910 = vmatpush1.bf16.msra.mxu0 %v1395
    %3911 = vmatprep.subr.bf16.mxu0 %v1392
    %3912 = vmatpush1.bf16.msra.mxu0 %v1391
    %3913 = vmatprep.subr.bf16.mxu0 %v1388
    %3914 = vmatpush1.bf16.msra.mxu0 %v1387
    %3915 = vmatprep.subr.bf16.mxu0 %v1384
    %3916 = vmatpush1.bf16.msra.mxu0 %v1383
    %3917 = vmatprep.subr.bf16.mxu0 %v1444
    %3918 = vmatpush2.bf16.msra.mxu0 %v1443
    %3919 = vmatprep.subr.bf16.mxu0 %v1440
    %3920 = vmatpush2.bf16.msra.mxu0 %v1439
    %3921 = vmatprep.subr.bf16.mxu0 %v1436
    %3922 = vmatpush2.bf16.msra.mxu0 %v1435
    %3923 = vmatprep.subr.bf16.mxu0 %v1432
    %3924 = vmatpush2.bf16.msra.mxu0 %v1431
    %3925 = vmatprep.subr.bf16.mxu0 %v1428
    %3926 = vmatpush2.bf16.msra.mxu0 %v1427
    %3927 = vmatprep.subr.bf16.mxu0 %v1424
    %3928 = vmatpush2.bf16.msra.mxu0 %v1423
    %3929 = vmatprep.subr.bf16.mxu0 %v1420
    %3930 = vmatpush2.bf16.msra.mxu0 %v1419
    %3931 = vmatprep.subr.bf16.mxu0 %v1416
    %3932 = vmatpush2.bf16.msra.mxu0 %v1415
    %3933 = vmatprep.mubr.bf16.mxu0 %v3900
    %3934 = vmatmul.mubr.bf16.gmra.mxu0 %v3899
    %v3935 = vpop.f32.mrf.mxu0
    %v3936 = vadd.f32 0.0, %v3935
    %v3937 = vpop.f32.mrf.mxu0
    %v3938 = vadd.f32 0.0, %v3937
    %v3939 = vpop.f32.mrf.mxu0
    %v3940 = vadd.f32 0.0, %v3939
    %v3941 = vpop.f32.mrf.mxu0
    %v3942 = vadd.f32 0.0, %v3941
    %3943 = vdwg.mxu0
    %3944 = vmatprep.subr.bf16.mxu0 %v1414
    %3945 = vmatpush1.bf16.msra.mxu0 %v1413
    %3946 = vmatprep.subr.bf16.mxu0 %v1410
    %3947 = vmatpush1.bf16.msra.mxu0 %v1409
    %3948 = vmatprep.subr.bf16.mxu0 %v1406
    %3949 = vmatpush1.bf16.msra.mxu0 %v1405
    %3950 = vmatprep.subr.bf16.mxu0 %v1402
    %3951 = vmatpush1.bf16.msra.mxu0 %v1401
    %3952 = vmatprep.subr.bf16.mxu0 %v1398
    %3953 = vmatpush1.bf16.msra.mxu0 %v1397
    %3954 = vmatprep.subr.bf16.mxu0 %v1394
    %3955 = vmatpush1.bf16.msra.mxu0 %v1393
    %3956 = vmatprep.subr.bf16.mxu0 %v1390
    %3957 = vmatpush1.bf16.msra.mxu0 %v1389
    %3958 = vmatprep.subr.bf16.mxu0 %v1386
    %3959 = vmatpush1.bf16.msra.mxu0 %v1385
    %3960 = vmatprep.subr.bf16.mxu0 %v1446
    %3961 = vmatpush2.bf16.msra.mxu0 %v1445
    %3962 = vmatprep.subr.bf16.mxu0 %v1442
    %3963 = vmatpush2.bf16.msra.mxu0 %v1441
    %3964 = vmatprep.subr.bf16.mxu0 %v1438
    %3965 = vmatpush2.bf16.msra.mxu0 %v1437
    %3966 = vmatprep.subr.bf16.mxu0 %v1434
    %3967 = vmatpush2.bf16.msra.mxu0 %v1433
    %3968 = vmatprep.subr.bf16.mxu0 %v1430
    %3969 = vmatpush2.bf16.msra.mxu0 %v1429
    %3970 = vmatprep.subr.bf16.mxu0 %v1426
    %3971 = vmatpush2.bf16.msra.mxu0 %v1425
    %3972 = vmatprep.subr.bf16.mxu0 %v1422
    %3973 = vmatpush2.bf16.msra.mxu0 %v1421
    %3974 = vmatprep.subr.bf16.mxu0 %v1418
    %3975 = vmatpush2.bf16.msra.mxu0 %v1417
    %3976 = vmatprep.mubr.bf16.mxu0 %v3900
    %3977 = vmatmul.mubr.bf16.gmra.mxu0 %v3899
    %v3978 = vpop.f32.mrf.mxu0
    %v3979 = vadd.f32 0.0, %v3978
    %v3980 = vpop.f32.mrf.mxu0
    %v3981 = vadd.f32 0.0, %v3980
    %v3982 = vpop.f32.mrf.mxu0
    %v3983 = vadd.f32 0.0, %v3982
    %v3984 = vpop.f32.mrf.mxu0
    %v3985 = vadd.f32 0.0, %v3984
    %3986 = vdwg.mxu0
    %v3987 = vadd.f32 %v3885, %v3936
    %v3988 = vadd.f32 %v3886, %v3938
    %v3989 = vadd.f32 %v3887, %v3979
    %v3990 = vadd.f32 %v3888, %v3981
    %v3991 = vadd.f32 %v3891, %v3940
    %v3992 = vadd.f32 %v3892, %v3942
    %v3993 = vadd.f32 %v3893, %v3983
    %v3994 = vadd.f32 %v3894, %v3985
    %v3995 = vxor.u32 %v3987, 2147483648
    %v3996 = vxor.u32 %v3991, 2147483648
    %v3997 = vmul.f32 %v3995, 1.442695
    %v3998 = vpow.pop %v3997
    %v3999 = vmul.f32 %v3996, 1.442695
    %v4000 = vpow.pop %v3999
    %v4001 = vadd.f32 %v3998, 1.0
    %v4002 = vadd.f32 %v4000, 1.0
    %v4003 = vrcp.pop %v4001
    %v4004 = vmul.f32 1.0, %v4003
    %v4005 = vrcp.pop %v4002
    %v4006 = vmul.f32 1.0, %v4005
    %v4007 = vxor.u32 %v3988, 2147483648
    %v4008 = vxor.u32 %v3992, 2147483648
    %v4009 = vmul.f32 %v4007, 1.442695
    %v4010 = vpow.pop %v4009
    %v4011 = vmul.f32 %v4008, 1.442695
    %v4012 = vpow.pop %v4011
    %v4013 = vadd.f32 %v4010, 1.0
    %v4014 = vadd.f32 %v4012, 1.0
    %v4015 = vrcp.pop %v4013
    %v4016 = vmul.f32 1.0, %v4015
    %v4017 = vrcp.pop %v4014
    %v4018 = vmul.f32 1.0, %v4017
    %v4019 = vtanh.pop %v3989
    %v4020 = vtanh.pop %v3993
    %v4021 = vxor.u32 %v3990, 2147483648
    %v4022 = vxor.u32 %v3994, 2147483648
    %v4023 = vmul.f32 %v4021, 1.442695
    %v4024 = vpow.pop %v4023
    %v4025 = vmul.f32 %v4022, 1.442695
    %v4026 = vpow.pop %v4025
    %v4027 = vadd.f32 %v4024, 1.0
    %v4028 = vadd.f32 %v4026, 1.0
    %v4029 = vrcp.pop %v4027
    %v4030 = vmul.f32 1.0, %v4029
    %v4031 = vrcp.pop %v4028
    %v4032 = vmul.f32 1.0, %v4031
    %v4033 = vmul.f32 %v4016, %v3867
    %v4034 = vmul.f32 %v4018, %v3868
    %v4035 = vmul.f32 %v4004, %v4019
    %v4036 = vmul.f32 %v4006, %v4020
    %v4037 = vadd.f32 %v4033, %v4035
    %v4038 = vadd.f32 %v4034, %v4036
    %v4039 = vtanh.pop %v4037
    %v4040 = vtanh.pop %v4038
    %v4041 = vmul.f32 %v4030, %v4039
    %v4042 = vmul.f32 %v4032, %v4040
    %v4043 = vadd.f32 %v3873, %v4041
    %v4044 = vadd.f32 %v3874, %v4042
    %v4045 = vmul.f32 %v4041, %v4041
    %v4046 = vmul.f32 %v4042, %v4042
    %v4047 = vadd.f32 %v3877, %v4045
    %v4048 = vadd.f32 %v3878, %v4046
    %v4049 = vmax.f32 %v3879, %v4041
    %v4050 = vmax.f32 %v3880, %v4042
    %v4051 = vmin.f32 %v3881, %v4041
    %v4052 = vmin.f32 %v3882, %v4042
    %s4053 = smul.addr %s1176, 8
    %s4054 = scalar_lea.vmem [#allocation2], %s4053
    %v4055 = vld [vmem:[%s4054] sm:$0xff]
    %v4056 = vld [vmem:[%s4054 + $0x8] sm:$0xff]
    %v4057 = vld [vmem:[%s4054 + $0x10] sm:$0xff]
    %v4058 = vld [vmem:[%s4054 + $0x18] sm:$0xff]
    %s4059 = smul.addr %s1169, 8
    %s4060 = scalar_lea.vmem [#allocation3], %s4059
    %v4061 = vld [vmem:[%s4060] sm:$0xff]
    %v4062 = vld [vmem:[%s4060 + $0x8] sm:$0xff]
    %v4063 = vld [vmem:[%s4060 + $0x10] sm:$0xff]
    %v4064 = vld [vmem:[%s4060 + $0x18] sm:$0xff]
    %v4065 = vmul.f32 %v4041, %v1167
    %v4066 = vmul.f32 %v4042, %v1168
    %v4067 = vmul.f32 %v4041, %v1185
    %v4068 = vmul.f32 %v4042, %v1186
    %v4069 = vpack.c.bf16 %v4066, %v4065
    %v4070 = vpack.c.bf16 %v4068, %v4067
    %4071 = vmatprep.subr.bf16.mxu0 %v1412
    %4072 = vmatpush1.bf16.msra.mxu0 %v1411
    %4073 = vmatprep.subr.bf16.mxu0 %v1408
    %4074 = vmatpush1.bf16.msra.mxu0 %v1407
    %4075 = vmatprep.subr.bf16.mxu0 %v1404
    %4076 = vmatpush1.bf16.msra.mxu0 %v1403
    %4077 = vmatprep.subr.bf16.mxu0 %v1400
    %4078 = vmatpush1.bf16.msra.mxu0 %v1399
    %4079 = vmatprep.subr.bf16.mxu0 %v1396
    %4080 = vmatpush1.bf16.msra.mxu0 %v1395
    %4081 = vmatprep.subr.bf16.mxu0 %v1392
    %4082 = vmatpush1.bf16.msra.mxu0 %v1391
    %4083 = vmatprep.subr.bf16.mxu0 %v1388
    %4084 = vmatpush1.bf16.msra.mxu0 %v1387
    %4085 = vmatprep.subr.bf16.mxu0 %v1384
    %4086 = vmatpush1.bf16.msra.mxu0 %v1383
    %4087 = vmatprep.subr.bf16.mxu0 %v1444
    %4088 = vmatpush2.bf16.msra.mxu0 %v1443
    %4089 = vmatprep.subr.bf16.mxu0 %v1440
    %4090 = vmatpush2.bf16.msra.mxu0 %v1439
    %4091 = vmatprep.subr.bf16.mxu0 %v1436
    %4092 = vmatpush2.bf16.msra.mxu0 %v1435
    %4093 = vmatprep.subr.bf16.mxu0 %v1432
    %4094 = vmatpush2.bf16.msra.mxu0 %v1431
    %4095 = vmatprep.subr.bf16.mxu0 %v1428
    %4096 = vmatpush2.bf16.msra.mxu0 %v1427
    %4097 = vmatprep.subr.bf16.mxu0 %v1424
    %4098 = vmatpush2.bf16.msra.mxu0 %v1423
    %4099 = vmatprep.subr.bf16.mxu0 %v1420
    %4100 = vmatpush2.bf16.msra.mxu0 %v1419
    %4101 = vmatprep.subr.bf16.mxu0 %v1416
    %4102 = vmatpush2.bf16.msra.mxu0 %v1415
    %4103 = vmatprep.mubr.bf16.mxu0 %v4070
    %4104 = vmatmul.mubr.bf16.gmra.mxu0 %v4069
    %v4105 = vpop.f32.mrf.mxu0
    %v4106 = vadd.f32 0.0, %v4105
    %v4107 = vpop.f32.mrf.mxu0
    %v4108 = vadd.f32 0.0, %v4107
    %v4109 = vpop.f32.mrf.mxu0
    %v4110 = vadd.f32 0.0, %v4109
    %v4111 = vpop.f32.mrf.mxu0
    %v4112 = vadd.f32 0.0, %v4111
    %4113 = vdwg.mxu0
    %4114 = vmatprep.subr.bf16.mxu0 %v1414
    %4115 = vmatpush1.bf16.msra.mxu0 %v1413
    %4116 = vmatprep.subr.bf16.mxu0 %v1410
    %4117 = vmatpush1.bf16.msra.mxu0 %v1409
    %4118 = vmatprep.subr.bf16.mxu0 %v1406
    %4119 = vmatpush1.bf16.msra.mxu0 %v1405
    %4120 = vmatprep.subr.bf16.mxu0 %v1402
    %4121 = vmatpush1.bf16.msra.mxu0 %v1401
    %4122 = vmatprep.subr.bf16.mxu0 %v1398
    %4123 = vmatpush1.bf16.msra.mxu0 %v1397
    %4124 = vmatprep.subr.bf16.mxu0 %v1394
    %4125 = vmatpush1.bf16.msra.mxu0 %v1393
    %4126 = vmatprep.subr.bf16.mxu0 %v1390
    %4127 = vmatpush1.bf16.msra.mxu0 %v1389
    %4128 = vmatprep.subr.bf16.mxu0 %v1386
    %4129 = vmatpush1.bf16.msra.mxu0 %v1385
    %4130 = vmatprep.subr.bf16.mxu0 %v1446
    %4131 = vmatpush2.bf16.msra.mxu0 %v1445
    %4132 = vmatprep.subr.bf16.mxu0 %v1442
    %4133 = vmatpush2.bf16.msra.mxu0 %v1441
    %4134 = vmatprep.subr.bf16.mxu0 %v1438
    %4135 = vmatpush2.bf16.msra.mxu0 %v1437
    %4136 = vmatprep.subr.bf16.mxu0 %v1434
    %4137 = vmatpush2.bf16.msra.mxu0 %v1433
    %4138 = vmatprep.subr.bf16.mxu0 %v1430
    %4139 = vmatpush2.bf16.msra.mxu0 %v1429
    %4140 = vmatprep.subr.bf16.mxu0 %v1426
    %4141 = vmatpush2.bf16.msra.mxu0 %v1425
    %4142 = vmatprep.subr.bf16.mxu0 %v1422
    %4143 = vmatpush2.bf16.msra.mxu0 %v1421
    %4144 = vmatprep.subr.bf16.mxu0 %v1418
    %4145 = vmatpush2.bf16.msra.mxu0 %v1417
    %4146 = vmatprep.mubr.bf16.mxu0 %v4070
    %4147 = vmatmul.mubr.bf16.gmra.mxu0 %v4069
    %v4148 = vpop.f32.mrf.mxu0
    %v4149 = vadd.f32 0.0, %v4148
    %v4150 = vpop.f32.mrf.mxu0
    %v4151 = vadd.f32 0.0, %v4150
    %v4152 = vpop.f32.mrf.mxu0
    %v4153 = vadd.f32 0.0, %v4152
    %v4154 = vpop.f32.mrf.mxu0
    %v4155 = vadd.f32 0.0, %v4154
    %4156 = vdwg.mxu0
    %v4157 = vadd.f32 %v4055, %v4106
    %v4158 = vadd.f32 %v4056, %v4108
    %v4159 = vadd.f32 %v4057, %v4149
    %v4160 = vadd.f32 %v4058, %v4151
    %v4161 = vadd.f32 %v4061, %v4110
    %v4162 = vadd.f32 %v4062, %v4112
    %v4163 = vadd.f32 %v4063, %v4153
    %v4164 = vadd.f32 %v4064, %v4155
    %v4165 = vxor.u32 %v4157, 2147483648
    %v4166 = vxor.u32 %v4161, 2147483648
    %v4167 = vmul.f32 %v4165, 1.442695
    %v4168 = vpow.pop %v4167
    %v4169 = vmul.f32 %v4166, 1.442695
    %v4170 = vpow.pop %v4169
    %v4171 = vadd.f32 %v4168, 1.0
    %v4172 = vadd.f32 %v4170, 1.0
    %v4173 = vrcp.pop %v4171
    %v4174 = vmul.f32 1.0, %v4173
    %v4175 = vrcp.pop %v4172
    %v4176 = vmul.f32 1.0, %v4175
    %v4177 = vxor.u32 %v4158, 2147483648
    %v4178 = vxor.u32 %v4162, 2147483648
    %v4179 = vmul.f32 %v4177, 1.442695
    %v4180 = vpow.pop %v4179
    %v4181 = vmul.f32 %v4178, 1.442695
    %v4182 = vpow.pop %v4181
    %v4183 = vadd.f32 %v4180, 1.0
    %v4184 = vadd.f32 %v4182, 1.0
    %v4185 = vrcp.pop %v4183
    %v4186 = vmul.f32 1.0, %v4185
    %v4187 = vrcp.pop %v4184
    %v4188 = vmul.f32 1.0, %v4187
    %v4189 = vtanh.pop %v4159
    %v4190 = vtanh.pop %v4163
    %v4191 = vxor.u32 %v4160, 2147483648
    %v4192 = vxor.u32 %v4164, 2147483648
    %v4193 = vmul.f32 %v4191, 1.442695
    %v4194 = vpow.pop %v4193
    %v4195 = vmul.f32 %v4192, 1.442695
    %v4196 = vpow.pop %v4195
    %v4197 = vadd.f32 %v4194, 1.0
    %v4198 = vadd.f32 %v4196, 1.0
    %v4199 = vrcp.pop %v4197
    %v4200 = vmul.f32 1.0, %v4199
    %v4201 = vrcp.pop %v4198
    %v4202 = vmul.f32 1.0, %v4201
    %v4203 = vmul.f32 %v4186, %v4037
    %v4204 = vmul.f32 %v4188, %v4038
    %v4205 = vmul.f32 %v4174, %v4189
    %v4206 = vmul.f32 %v4176, %v4190
    %v4207 = vadd.f32 %v4203, %v4205
    %v4208 = vadd.f32 %v4204, %v4206
    %v4209 = vtanh.pop %v4207
    %v4210 = vtanh.pop %v4208
    %v4211 = vmul.f32 %v4200, %v4209
    %v4212 = vmul.f32 %v4202, %v4210
    %v4213 = vadd.f32 %v4043, %v4211
    %v4214 = vadd.f32 %v4044, %v4212
    %v4215 = vmul.f32 %v4211, %v4211
    %v4216 = vmul.f32 %v4212, %v4212
    %v4217 = vadd.f32 %v4047, %v4215
    %v4218 = vadd.f32 %v4048, %v4216
    %v4219 = vmax.f32 %v4049, %v4211
    %v4220 = vmax.f32 %v4050, %v4212
    %v4221 = vmin.f32 %v4051, %v4211
    %v4222 = vmin.f32 %v4052, %v4212
    %v4223 = vld [vmem:[%s5] sm:$0x1]
    %v4224 = vld [vmem:[%s6] sm:$0x1]
    %v4225 = vrot.slane %v4213, 4
    %v4226 = vadd.f32 %v4213, %v4225
    %v4227 = vrot.slane %v4226, 2
    %v4228 = vadd.f32 %v4226, %v4227
    %v4229 = vrot.slane %v4228, 1
    %v4230 = vadd.f32 %v4228, %v4229
    %v4231 = vrcp.pop 128.0
    %v4232 = vmul.f32 %v4230, %v4231
    %v4233 = vrot.slane %v4217, 4
    %v4234 = vadd.f32 %v4217, %v4233
    %v4235 = vrot.slane %v4234, 2
    %v4236 = vadd.f32 %v4234, %v4235
    %v4237 = vrot.slane %v4236, 1
    %v4238 = vadd.f32 %v4236, %v4237
    %v4239 = vmul.f32 %v4238, %v4231
    %v4240 = vmul.f32 %v4232, %v4232
    %v4241 = vsub.f32 %v4239, %v4240
    %v4242 = vmax.f32 %v4241, 0.0
    %v4243 = vadd.f32 %v4242, 1e-05
    %v4244 = vrsqrt.pop %v4243
    %v4245 = vmul.f32 %v4223, %v4244
    %v4246 = vmul.f32 %v4232, %v4245
    %v4247 = vsub.f32 %v4224, %v4246
    %v4249 = vlaneseq
    %v4250 = vshrl.u32 %v4249, 7
    %v4251 = vsub.s32 0, %v4250
    %v4252 = vrot.slane %v4245, %v4251
    %v4254 = vmul.f32 %v4252, %v4219
    %v4256 = vlaneseq
    %v4257 = vshrl.u32 %v4256, 7
    %v4258 = vsub.s32 0, %v4257
    %v4259 = vrot.slane %v4247, %v4258
    %v4261 = vadd.f32 %v4254, %v4259
    %v4262 = vmul.f32 %v4252, %v4221
    %v4263 = vadd.f32 %v4262, %v4259
    %v4264 = vmax.f32 %v4261, %v4263
    %v4265 = vld [vmem:[%s7] sm:$0x1]
    %v4266 = vld [vmem:[%s8] sm:$0x1]
    %v4267 = vrot.slane %v4214, 4
    %v4268 = vadd.f32 %v4214, %v4267
    %v4269 = vrot.slane %v4268, 2
    %v4270 = vadd.f32 %v4268, %v4269
    %v4271 = vrot.slane %v4270, 1
    %v4272 = vadd.f32 %v4270, %v4271
    %v4273 = vmul.f32 %v4272, %v4231
    %v4274 = vrot.slane %v4218, 4
    %v4275 = vadd.f32 %v4218, %v4274
    %v4276 = vrot.slane %v4275, 2
    %v4277 = vadd.f32 %v4275, %v4276
    %v4278 = vrot.slane %v4277, 1
    %v4279 = vadd.f32 %v4277, %v4278
    %v4280 = vmul.f32 %v4279, %v4231
    %v4281 = vmul.f32 %v4273, %v4273
    %v4282 = vsub.f32 %v4280, %v4281
    %v4283 = vmax.f32 %v4282, 0.0
    %v4284 = vadd.f32 %v4283, 1e-05
    %v4285 = vrsqrt.pop %v4284
    %v4286 = vmul.f32 %v4265, %v4285
    %v4287 = vmul.f32 %v4273, %v4286
    %v4288 = vsub.f32 %v4266, %v4287
    %v4290 = vlaneseq
    %v4291 = vshrl.u32 %v4290, 7
    %v4292 = vsub.s32 0, %v4291
    %v4293 = vrot.slane %v4286, %v4292
    %v4295 = vmul.f32 %v4293, %v4220
    %v4297 = vlaneseq
    %v4298 = vshrl.u32 %v4297, 7
    %v4299 = vsub.s32 0, %v4298
    %v4300 = vrot.slane %v4288, %v4299
    %v4302 = vadd.f32 %v4295, %v4300
    %v4303 = vmul.f32 %v4293, %v4222
    %v4304 = vadd.f32 %v4303, %v4300
    %v4305 = vmax.f32 %v4302, %v4304
    %v4306 = vld [vmem:[%s9] sm:$0xff]
    %v4307 = vld [vmem:[%s9 + $0x8] sm:$0xff]
    %v4308 = vld [vmem:[%s9 + $0x10] sm:$0xff]
    %v4309 = vld [vmem:[%s9 + $0x18] sm:$0xff]
    %v4310 = vld [vmem:[%s9 + $0x20] sm:$0xff]
    %v4311 = vld [vmem:[%s9 + $0x28] sm:$0xff]
    %v4312 = vld [vmem:[%s9 + $0x30] sm:$0xff]
    %v4313 = vld [vmem:[%s9 + $0x38] sm:$0xff]
    %v4314 = vld [vmem:[%s9 + $0x40] sm:$0xff]
    %v4315 = vld [vmem:[%s9 + $0x48] sm:$0xff]
    %v4316 = vld [vmem:[%s9 + $0x50] sm:$0xff]
    %v4317 = vld [vmem:[%s9 + $0x58] sm:$0xff]
    %v4318 = vld [vmem:[%s9 + $0x60] sm:$0xff]
    %v4319 = vld [vmem:[%s9 + $0x68] sm:$0xff]
    %v4320 = vld [vmem:[%s9 + $0x70] sm:$0xff]
    %v4321 = vld [vmem:[%s9 + $0x78] sm:$0xff]
    %v4322 = vld [vmem:[%s10] sm:$0xff]
    %v4323 = vld [vmem:[%s10 + $0x8] sm:$0xff]
    %v4324 = vld [vmem:[%s10 + $0x10] sm:$0xff]
    %v4325 = vld [vmem:[%s10 + $0x18] sm:$0xff]
    %v4326 = vld [vmem:[%s10 + $0x20] sm:$0xff]
    %v4327 = vld [vmem:[%s10 + $0x28] sm:$0xff]
    %v4328 = vld [vmem:[%s10 + $0x30] sm:$0xff]
    %v4329 = vld [vmem:[%s10 + $0x38] sm:$0xff]
    %v4330 = vld [vmem:[%s10 + $0x40] sm:$0xff]
    %v4331 = vld [vmem:[%s10 + $0x48] sm:$0xff]
    %v4332 = vld [vmem:[%s10 + $0x50] sm:$0xff]
    %v4333 = vld [vmem:[%s10 + $0x58] sm:$0xff]
    %v4334 = vld [vmem:[%s10 + $0x60] sm:$0xff]
    %v4335 = vld [vmem:[%s10 + $0x68] sm:$0xff]
    %v4336 = vld [vmem:[%s10 + $0x70] sm:$0xff]
    %v4337 = vld [vmem:[%s10 + $0x78] sm:$0xff]
    %4338 = vmatprep.subr.mxu0 0.0
    %4339 = vmatpush1.msra.mxu0 %v4337
    %4340 = vmatprep.subr.mxu0 0.0
    %4341 = vmatpush1.msra.mxu0 %v4336
    %4342 = vmatprep.subr.mxu0 0.0
    %4343 = vmatpush1.msra.mxu0 %v4335
    %4344 = vmatprep.subr.mxu0 0.0
    %4345 = vmatpush1.msra.mxu0 %v4334
    %4346 = vmatprep.subr.mxu0 0.0
    %4347 = vmatpush1.msra.mxu0 %v4333
    %4348 = vmatprep.subr.mxu0 0.0
    %4349 = vmatpush1.msra.mxu0 %v4332
    %4350 = vmatprep.subr.mxu0 0.0
    %4351 = vmatpush1.msra.mxu0 %v4331
    %4352 = vmatprep.subr.mxu0 0.0
    %4353 = vmatpush1.msra.mxu0 %v4330
    %4354 = vmatprep.subr.mxu0 0.0
    %4355 = vmatpush1.msra.mxu0 %v4329
    %4356 = vmatprep.subr.mxu0 0.0
    %4357 = vmatpush1.msra.mxu0 %v4328
    %4358 = vmatprep.subr.mxu0 0.0
    %4359 = vmatpush1.msra.mxu0 %v4327
    %4360 = vmatprep.subr.mxu0 0.0
    %4361 = vmatpush1.msra.mxu0 %v4326
    %4362 = vmatprep.subr.mxu0 0.0
    %4363 = vmatpush1.msra.mxu0 %v4325
    %4364 = vmatprep.subr.mxu0 0.0
    %4365 = vmatpush1.msra.mxu0 %v4324
    %4366 = vmatprep.subr.mxu0 0.0
    %4367 = vmatpush1.msra.mxu0 %v4323
    %4368 = vmatprep.subr.mxu0 0.0
    %4369 = vmatpush1.msra.mxu0 %v4322
    %4370 = vmatprep.subr.mxu0 0.0
    %4371 = vmatpush2.msra.mxu0 0.0
    %4372 = vmatprep.subr.mxu0 0.0
    %4373 = vmatpush2.msra.mxu0 0.0
    %4374 = vmatprep.subr.mxu0 0.0
    %4375 = vmatpush2.msra.mxu0 0.0
    %4376 = vmatprep.subr.mxu0 0.0
    %4377 = vmatpush2.msra.mxu0 0.0
    %4378 = vmatprep.subr.mxu0 0.0
    %4379 = vmatpush2.msra.mxu0 0.0
    %4380 = vmatprep.subr.mxu0 0.0
    %4381 = vmatpush2.msra.mxu0 0.0
    %4382 = vmatprep.subr.mxu0 0.0
    %4383 = vmatpush2.msra.mxu0 0.0
    %4384 = vmatprep.subr.mxu0 0.0
    %4385 = vmatpush2.msra.mxu0 0.0
    %4386 = vmatprep.subr.mxu0 0.0
    %4387 = vmatpush2.msra.mxu0 0.0
    %4388 = vmatprep.subr.mxu0 0.0
    %4389 = vmatpush2.msra.mxu0 0.0
    %4390 = vmatprep.subr.mxu0 0.0
    %4391 = vmatpush2.msra.mxu0 0.0
    %4392 = vmatprep.subr.mxu0 0.0
    %4393 = vmatpush2.msra.mxu0 0.0
    %4394 = vmatprep.subr.mxu0 0.0
    %4395 = vmatpush2.msra.mxu0 0.0
    %4396 = vmatprep.subr.mxu0 0.0
    %4397 = vmatpush2.msra.mxu0 0.0
    %4398 = vmatprep.subr.mxu0 0.0
    %4399 = vmatpush2.msra.mxu0 0.0
    %4400 = vmatprep.subr.mxu0 0.0
    %4401 = vmatpush2.msra.mxu0 0.0
    %4402 = vmatprep.mubr.f32.mxu0 0.0
    %4403 = vmatmul.mubr.f32.gmra.mxu0 %v4305
    %v4404 = vpop.f32.mrf.mxu0
    %v4405 = vadd.f32 0.0, %v4404
    %v4406 = vpop.f32.mrf.mxu0
    %4407 = vdwg.mxu0
    %4408 = vmatprep.subr.mxu0 0.0
    %4409 = vmatpush1.msra.mxu0 %v4321
    %4410 = vmatprep.subr.mxu0 0.0
    %4411 = vmatpush1.msra.mxu0 %v4320
    %4412 = vmatprep.subr.mxu0 0.0
    %4413 = vmatpush1.msra.mxu0 %v4319
    %4414 = vmatprep.subr.mxu0 0.0
    %4415 = vmatpush1.msra.mxu0 %v4318
    %4416 = vmatprep.subr.mxu0 0.0
    %4417 = vmatpush1.msra.mxu0 %v4317
    %4418 = vmatprep.subr.mxu0 0.0
    %4419 = vmatpush1.msra.mxu0 %v4316
    %4420 = vmatprep.subr.mxu0 0.0
    %4421 = vmatpush1.msra.mxu0 %v4315
    %4422 = vmatprep.subr.mxu0 0.0
    %4423 = vmatpush1.msra.mxu0 %v4314
    %4424 = vmatprep.subr.mxu0 0.0
    %4425 = vmatpush1.msra.mxu0 %v4313
    %4426 = vmatprep.subr.mxu0 0.0
    %4427 = vmatpush1.msra.mxu0 %v4312
    %4428 = vmatprep.subr.mxu0 0.0
    %4429 = vmatpush1.msra.mxu0 %v4311
    %4430 = vmatprep.subr.mxu0 0.0
    %4431 = vmatpush1.msra.mxu0 %v4310
    %4432 = vmatprep.subr.mxu0 0.0
    %4433 = vmatpush1.msra.mxu0 %v4309
    %4434 = vmatprep.subr.mxu0 0.0
    %4435 = vmatpush1.msra.mxu0 %v4308
    %4436 = vmatprep.subr.mxu0 0.0
    %4437 = vmatpush1.msra.mxu0 %v4307
    %4438 = vmatprep.subr.mxu0 0.0
    %4439 = vmatpush1.msra.mxu0 %v4306
    %4440 = vmatprep.subr.mxu0 0.0
    %4441 = vmatpush2.msra.mxu0 0.0
    %4442 = vmatprep.subr.mxu0 0.0
    %4443 = vmatpush2.msra.mxu0 0.0
    %4444 = vmatprep.subr.mxu0 0.0
    %4445 = vmatpush2.msra.mxu0 0.0
    %4446 = vmatprep.subr.mxu0 0.0
    %4447 = vmatpush2.msra.mxu0 0.0
    %4448 = vmatprep.subr.mxu0 0.0
    %4449 = vmatpush2.msra.mxu0 0.0
    %4450 = vmatprep.subr.mxu0 0.0
    %4451 = vmatpush2.msra.mxu0 0.0
    %4452 = vmatprep.subr.mxu0 0.0
    %4453 = vmatpush2.msra.mxu0 0.0
    %4454 = vmatprep.subr.mxu0 0.0
    %4455 = vmatpush2.msra.mxu0 0.0
    %4456 = vmatprep.subr.mxu0 0.0
    %4457 = vmatpush2.msra.mxu0 0.0
    %4458 = vmatprep.subr.mxu0 0.0
    %4459 = vmatpush2.msra.mxu0 0.0
    %4460 = vmatprep.subr.mxu0 0.0
    %4461 = vmatpush2.msra.mxu0 0.0
    %4462 = vmatprep.subr.mxu0 0.0
    %4463 = vmatpush2.msra.mxu0 0.0
    %4464 = vmatprep.subr.mxu0 0.0
    %4465 = vmatpush2.msra.mxu0 0.0
    %4466 = vmatprep.subr.mxu0 0.0
    %4467 = vmatpush2.msra.mxu0 0.0
    %4468 = vmatprep.subr.mxu0 0.0
    %4469 = vmatpush2.msra.mxu0 0.0
    %4470 = vmatprep.subr.mxu0 0.0
    %4471 = vmatpush2.msra.mxu0 0.0
    %4472 = vmatprep.mubr.f32.mxu0 0.0
    %4473 = vmatmul.mubr.f32.gmra.mxu0 %v4264
    %v4474 = vpop.f32.mrf.mxu0
    %v4475 = vadd.f32 %v4405, %v4474
    %v4476 = vpop.f32.mrf.mxu0
    %4477 = vdwg.mxu0
    %v4478 = vld [vmem:[%s11] sm:$0x1]
    %v4480 = vlaneseq
    %v4481 = vshrl.u32 %v4480, 7
    %v4482 = vsub.s32 0, %v4481
    %v4483 = vrot.slane %v4478, %v4482
    %v4485 = vadd.f32 %v4475, %v4483
    %v4486 = vmax.f32 %v4485, 0.0
    %vm4487 = vcmask 523264
    %v4488 = vsel %vm4487, %v4486, 0.0
    %v4489 = vrot.slane %v4488, 4
    %v4490 = vadd.f32 %v4488, %v4489
    %v4491 = vrot.slane %v4490, 2
    %v4492 = vadd.f32 %v4490, %v4491
    %v4493 = vrot.slane %v4492, 1
    %v4494 = vadd.f32 %v4492, %v4493
    %v4495 = vrcp.pop 8.0
    %v4496 = vmul.f32 %v4494, %v4495
    %v4497 = vsub.f32 %v4486, %v4496
    %v4498 = vmul.f32 %v4497, %v4497
    %v4499 = vsel %vm4487, %v4498, 0.0
    %v4500 = vrot.slane %v4499, 4
    %v4501 = vadd.f32 %v4499, %v4500
    %v4502 = vrot.slane %v4501, 2
    %v4503 = vadd.f32 %v4501, %v4502
    %v4504 = vrot.slane %v4503, 1
    %v4505 = vadd.f32 %v4503, %v4504
    %v4506 = vmul.f32 %v4505, %v4495
    %v4507 = vadd.f32 %v4506, 1e-05
    %v4508 = vrsqrt.pop %v4507
    %v4509 = vmul.f32 %v4497, %v4508
    %v4510 = vld [vmem:[%s12] sm:$0x1]
    %v4512 = vlaneseq
    %v4513 = vshrl.u32 %v4512, 7
    %v4514 = vsub.s32 0, %v4513
    %v4515 = vrot.slane %v4510, %v4514
    %v4517 = vmul.f32 %v4509, %v4515
    %v4518 = vld [vmem:[%s13] sm:$0x1]
    %v4520 = vlaneseq
    %v4521 = vshrl.u32 %v4520, 7
    %v4522 = vsub.s32 0, %v4521
    %v4523 = vrot.slane %v4518, %v4522
    %v4525 = vadd.f32 %v4517, %v4523
    %v4526 = vld [vmem:[%s14] sm:$0xff]
    %v4527 = vld [vmem:[%s14 + $0x8] sm:$0xff]
    %v4528 = vld [vmem:[%s14 + $0x10] sm:$0xff]
    %v4529 = vld [vmem:[%s14 + $0x18] sm:$0xff]
    %v4530 = vld [vmem:[%s14 + $0x20] sm:$0xff]
    %v4531 = vld [vmem:[%s14 + $0x28] sm:$0xff]
    %v4532 = vld [vmem:[%s14 + $0x30] sm:$0xff]
    %v4533 = vld [vmem:[%s14 + $0x38] sm:$0xff]
    %v4534 = vld [vmem:[#allocation4] sm:$0x1]
    %v4536 = vlaneseq
    %v4537 = vshrl.u32 %v4536, 7
    %v4538 = vsub.s32 0, %v4537
    %v4539 = vrot.slane %v4534, %v4538
    %v4542 = vsel %vm4487, %v4525, 0
    %4544 = vmatprep.subr.mxu0 0.0
    %4545 = vmatpush1.msra.mxu0 0.0
    %4546 = vmatprep.subr.mxu0 0.0
    %4547 = vmatpush1.msra.mxu0 0.0
    %4548 = vmatprep.subr.mxu0 0.0
    %4549 = vmatpush1.msra.mxu0 0.0
    %4550 = vmatprep.subr.mxu0 0.0
    %4551 = vmatpush1.msra.mxu0 0.0
    %4552 = vmatprep.subr.mxu0 0.0
    %4553 = vmatpush1.msra.mxu0 0.0
    %4554 = vmatprep.subr.mxu0 0.0
    %4555 = vmatpush1.msra.mxu0 0.0
    %4556 = vmatprep.subr.mxu0 0.0
    %4557 = vmatpush1.msra.mxu0 0.0
    %4558 = vmatprep.subr.mxu0 0.0
    %4559 = vmatpush1.msra.mxu0 0.0
    %4560 = vmatprep.subr.mxu0 0.0
    %4561 = vmatpush1.msra.mxu0 %v4533
    %4562 = vmatprep.subr.mxu0 0.0
    %4563 = vmatpush1.msra.mxu0 %v4532
    %4564 = vmatprep.subr.mxu0 0.0
    %4565 = vmatpush1.msra.mxu0 %v4531
    %4566 = vmatprep.subr.mxu0 0.0
    %4567 = vmatpush1.msra.mxu0 %v4530
    %4568 = vmatprep.subr.mxu0 0.0
    %4569 = vmatpush1.msra.mxu0 %v4529
    %4570 = vmatprep.subr.mxu0 0.0
    %4571 = vmatpush1.msra.mxu0 %v4528
    %4572 = vmatprep.subr.mxu0 0.0
    %4573 = vmatpush1.msra.mxu0 %v4527
    %4574 = vmatprep.subr.mxu0 0.0
    %4575 = vmatpush1.msra.mxu0 %v4526
    %4576 = vmatprep.subr.mxu0 0.0
    %4577 = vmatpush2.msra.mxu0 0.0
    %4578 = vmatprep.subr.mxu0 0.0
    %4579 = vmatpush2.msra.mxu0 0.0
    %4580 = vmatprep.subr.mxu0 0.0
    %4581 = vmatpush2.msra.mxu0 0.0
    %4582 = vmatprep.subr.mxu0 0.0
    %4583 = vmatpush2.msra.mxu0 0.0
    %4584 = vmatprep.subr.mxu0 0.0
    %4585 = vmatpush2.msra.mxu0 0.0
    %4586 = vmatprep.subr.mxu0 0.0
    %4587 = vmatpush2.msra.mxu0 0.0
    %4588 = vmatprep.subr.mxu0 0.0
    %4589 = vmatpush2.msra.mxu0 0.0
    %4590 = vmatprep.subr.mxu0 0.0
    %4591 = vmatpush2.msra.mxu0 0.0
    %4592 = vmatprep.subr.mxu0 0.0
    %4593 = vmatpush2.msra.mxu0 0.0
    %4594 = vmatprep.subr.mxu0 0.0
    %4595 = vmatpush2.msra.mxu0 0.0
    %4596 = vmatprep.subr.mxu0 0.0
    %4597 = vmatpush2.msra.mxu0 0.0
    %4598 = vmatprep.subr.mxu0 0.0
    %4599 = vmatpush2.msra.mxu0 0.0
    %4600 = vmatprep.subr.mxu0 0.0
    %4601 = vmatpush2.msra.mxu0 0.0
    %4602 = vmatprep.subr.mxu0 0.0
    %4603 = vmatpush2.msra.mxu0 0.0
    %4604 = vmatprep.subr.mxu0 0.0
    %4605 = vmatpush2.msra.mxu0 0.0
    %4606 = vmatprep.subr.mxu0 0.0
    %4607 = vmatpush2.msra.mxu0 0.0
    %4608 = vmatprep.mubr.f32.mxu0 0.0
    %4609 = vmatmul.mubr.f32.gmra.mxu0 %v4542
    %v4610 = vpop.f32.mrf.mxu0
    %v4611 = vadd.f32 %v4539, %v4610
    %v4612 = vpop.f32.mrf.mxu0
    %4613 = vdwg.mxu0
    %vm4614 = vcmask 7168
    %4615 = vst.msk [vmem:[%s16] sm:$0xff] %vm4614, %v4611
    // Predicated region
    $region70: #{tpu_custom_call.1} parent=1 // pred_check
      _
    $region71: #{tpu_custom_call.1} parent=1 // pred_check_branch
      %4617 = sbr.rel (0) target = $region73
    $region72: #{tpu_custom_call.1} parent=1 // pred_region
      _
    $region73: #{tpu_custom_call.1} parent=1 // pred_fallthru
      _
    // Predicated region
    $region74: #{tpu_custom_call.1} parent=1 // pred_check
      _
    $region75: #{tpu_custom_call.1} parent=1 // pred_check_branch
      %4619 = sbr.rel (0) target = $region77
    $region76: #{tpu_custom_call.1} parent=1 // pred_region
      _
    $region77: #{tpu_custom_call.1} parent=1 // pred_fallthru
      _
    %4620 = vsyncpa [#allocation6], 1

</llo_original>
